<compile_context>
chip_gen: v5e
topology: v5e:2x2
jax: 0.10.0
libtpu: 0.0.40
codegen_flags: <defaults>
</compile_context>

<pallas_src>
import functools

import numpy as np
import jax
import jax.numpy as jnp
from jax import lax
from jax.experimental import pallas as pl
from jax.experimental.pallas import tpu as pltpu

_BN_EPS = 1e-5


# ----------------------------- DFT factor tables (cached, host-side) -----------------------------

@functools.lru_cache(maxsize=None)
def _dft_tables(H, W):
    """Ortho-normalized real-DFT factor matrices (numpy float32).

    dwf: (W, 2Wf)   [cw | -sw]                right matmul on real rows -> [Pr | Pi]
    dhf: (2H, 2H)   [[ch, sh], [-sh, ch]]     left matmul on [Pr; Pi]   -> [Fr; Fi]
    dhi: (2H, 2H)   [[ch, -sh], [sh, ch]]     left matmul on [Yr; Yi]   -> [Zr; Zi]
    dwi: (2Wf, W)   [wgt*cos; -wgt*sin]/sqrtW right matmul on [Zr | Zi] -> real output
    """
    Wf = W // 2 + 1
    h = np.arange(H, dtype=np.float64)
    w = np.arange(W, dtype=np.float64)
    kw = np.arange(Wf, dtype=np.float64)
    sqH = np.sqrt(float(H))
    sqW = np.sqrt(float(W))

    ang_h = 2.0 * np.pi * np.outer(h, h) / H           # (H, H), symmetric
    ch = np.cos(ang_h) / sqH
    sh = np.sin(ang_h) / sqH

    ang_w = 2.0 * np.pi * np.outer(w, kw) / W           # (W, Wf)
    cw = np.cos(ang_w) / sqW
    sw = np.sin(ang_w) / sqW

    dwf = np.concatenate([cw, -sw], axis=1)              # (W, 2Wf)
    dhf = np.block([[ch, sh], [-sh, ch]])                 # (2H, 2H)
    dhi = np.block([[ch, -sh], [sh, ch]])                 # (2H, 2H)

    wgt = np.full((Wf, 1), 2.0)
    wgt[0, 0] = 1.0
    if W % 2 == 0:
        wgt[Wf - 1, 0] = 1.0
    ang_iw = 2.0 * np.pi * np.outer(kw, w) / W           # (Wf, W)
    aw = wgt * np.cos(ang_iw) / sqW
    bw = -wgt * np.sin(ang_iw) / sqW
    dwi = np.concatenate([aw, bw], axis=0)                # (2Wf, W)

    return (dwf.astype(np.float32), dhf.astype(np.float32),
            dhi.astype(np.float32), dwi.astype(np.float32))


# ----------------------------- Pallas kernels -----------------------------

def _fwd_conv_kernel(C, Co, H, W, Wf,
                     x_ref, dwf_ref, dhf_ref, wt_ref, y_ref, stats_ref):
    """rfft2(ortho) + 1x1 conv + per-batch BN partial sums for one batch element."""
    f32 = jnp.float32
    bf16 = jnp.bfloat16

    x2 = x_ref[0]                                                     # (C*H, W) bf16

    # W-axis rfft on the real rows: one lane-contracting MXU matmul -> [Pr | Pi].
    p = jnp.dot(x2, dwf_ref[...], preferred_element_type=f32)          # (C*H, 2Wf) f32

    # Corner turn (c,h)x(ri,kw) -> (ri,h)x(c,kw): makes the H-DFT a SINGLE matmul with
    # every channel folded into the lane (N) dimension (no per-channel matmuls, no
    # broadcast of the DFT table).  Re/Im split lives on 8-aligned sublane row blocks.
    pstack = (p.astype(bf16).reshape(C, H, 2, Wf)
              .transpose(2, 1, 0, 3).reshape(2 * H, C * Wf))

    # H-axis forward DFT: [Fr; Fi] = [[ch, sh], [-sh, ch]] @ [Pr; Pi].
    fk = jnp.dot(dhf_ref[...], pstack, preferred_element_type=f32)     # (2H, C*Wf) f32

    # Corner turn (ri,kh)x(c,kw) -> (kh,kw)x(ri,c): spectra rows = spatial frequency,
    # lanes = the 2C conv input channels, so the 1x1 conv is one dense MXU matmul.
    fcat_t = (fk.astype(bf16).reshape(2, H, C, Wf)
              .transpose(1, 3, 0, 2).reshape(H * Wf, 2 * C))

    # 1x1 conv over channels on the MXU (weights bf16 in VMEM, transposed in wrapper).
    yt = jnp.dot(fcat_t, wt_ref[...], preferred_element_type=f32)      # (H*Wf, 2Co) f32

    # Per-batch BN partial statistics, lane-dense over channels: (2, 2Co) = [sum; sum_sq].
    s1 = jnp.sum(yt, axis=0, keepdims=True)                            # (1, 2Co)
    s2 = jnp.sum(yt * yt, axis=0, keepdims=True)                       # (1, 2Co)
    stats_ref[0] = jnp.concatenate([s1, s2], axis=0)                   # (2, 2Co)

    # Spectrum crosses HBM as bf16 with lane-dense flattened trailing dims.
    y_ref[0] = yt.astype(y_ref.dtype)


def _bn_irfft_kernel(Co, H, W, Wf,
                     y_ref, scale_ref, bias_ref, dhi_ref, dwi_ref, o_ref):
    """Folded BN affine + ReLU + irfft2(ortho) for one batch element."""
    f32 = jnp.float32
    bf16 = jnp.bfloat16

    y = y_ref[0].astype(f32)                                           # (H*Wf, 2Co)
    # Folded BN (scale/bias are (1, 2Co) lane vectors, broadcast over rows) + ReLU.
    ya = jnp.maximum(y * scale_ref[...] + bias_ref[...], 0.0)

    # Corner turn (kh,kw)x(ri,o) -> (ri,kh)x(o,kw): inverse H-DFT is ONE matmul with all
    # output channels folded into the lane dimension.
    ystack = (ya.astype(bf16).reshape(H, Wf, 2, Co)
              .transpose(2, 0, 3, 1).reshape(2 * H, Co * Wf))

    # H-axis inverse DFT: [Zr; Zi] = [[ch, -sh], [sh, ch]] @ [Yr; Yi].
    z = jnp.dot(dhi_ref[...], ystack, preferred_element_type=f32)      # (2H, Co*Wf) f32

    # Corner turn (ri,h)x(o,kw) -> (o,h)x(ri,kw): Hermitian-weighted irfft along W is one
    # lane-contracting matmul.
    zcat = (z.astype(bf16).reshape(2, H, Co, Wf)
            .transpose(2, 1, 0, 3).reshape(Co * H, 2 * Wf))

    out = jnp.dot(zcat, dwi_ref[...], preferred_element_type=f32)      # (Co*H, W)
    # Lane-dense store: (Co, H*W); reshaped back to NCHW in JAX (free metadata op).
    o_ref[0] = out.reshape(Co, H * W).astype(o_ref.dtype)


# ----------------------------- wrapper -----------------------------

def fourier_unit_forward(x, conv_w, gamma, beta):
    """FourierUnit forward. x: (B, C, H, W) NCHW. conv_w: (2*Cout, 2*Cin). gamma/beta: (2*Cout,)."""
    in_dtype = x.dtype
    B, C, H, W = x.shape
    O2 = conv_w.shape[0]
    Co = O2 // 2
    Wf = W // 2 + 1
    f32 = jnp.float32
    bf16 = jnp.bfloat16

    dwf_np, dhf_np, dhi_np, dwi_np = _dft_tables(H, W)
    dwf = jnp.asarray(dwf_np, dtype=bf16)
    dhf = jnp.asarray(dhf_np, dtype=bf16)
    dhi = jnp.asarray(dhi_np, dtype=bf16)
    dwi = jnp.asarray(dwi_np, dtype=bf16)

    # Kernel consumes x only at bf16 -> cast before the call (halves kernel-1 input HBM
    # traffic and the VMEM footprint of the double-buffered x block).  Free reshape.
    xb = x.reshape(B, C * H, W).astype(bf16)
    # Conv weight transposed once so the in-kernel conv is (H*Wf, 2C) @ (2C, 2Co).
    wt = conv_w.astype(bf16).T                                         # (2C, 2Co)

    # ---- kernel 1: rfft2 + 1x1 conv + per-batch BN partial sums ----
    fwd_flops = B * (2 * (C * H) * W * (2 * Wf)
                     + 2 * (2 * H) * (2 * H) * (C * Wf)
                     + 2 * (H * Wf) * (2 * C) * O2)
    fwd_bytes = int(xb.size * 2 + B * H * Wf * O2 * 2 + B * 2 * O2 * 4
                    + (dwf.size + dhf.size + wt.size) * 2)

    kernel1 = functools.partial(_fwd_conv_kernel, C, Co, H, W, Wf)
    y, stats = pl.pallas_call(
        kernel1,
        grid=(B,),
        in_specs=[
            pl.BlockSpec((1, C * H, W), lambda b: (b, 0, 0)),
            pl.BlockSpec((W, 2 * Wf), lambda b: (0, 0)),               # resident DFT table
            pl.BlockSpec((2 * H, 2 * H), lambda b: (0, 0)),            # resident DFT table
            pl.BlockSpec((2 * C, O2), lambda b: (0, 0)),               # resident conv weights (VMEM)
        ],
        out_specs=(
            pl.BlockSpec((1, H * Wf, O2), lambda b: (b, 0, 0)),
            pl.BlockSpec((1, 2, O2), lambda b: (b, 0, 0)),
        ),
        out_shape=(
            jax.ShapeDtypeStruct((B, H * Wf, O2), bf16),               # lane-dense bf16 spectrum
            jax.ShapeDtypeStruct((B, 2, O2), f32),                     # lane-dense BN partial sums
        ),
        compiler_params=pltpu.CompilerParams(
            dimension_semantics=("parallel",),
            vmem_limit_bytes=48 * 1024 * 1024,
        ),
        cost_estimate=pl.CostEstimate(flops=fwd_flops, transcendentals=0,
                                      bytes_accessed=fwd_bytes),
    )(xb, dwf, dhf, wt)

    # ---- exact train-mode BatchNorm statistics (global over B, H, Wf), folded affine ----
    n = float(B * H * Wf)
    mean = jnp.sum(stats[:, 0, :], axis=0) / n
    ex2 = jnp.sum(stats[:, 1, :], axis=0) / n
    var = jnp.maximum(ex2 - mean * mean, 0.0)                          # clamp: avoid rsqrt(<0)
    scale = gamma.astype(f32) * lax.rsqrt(var + _BN_EPS)
    bias = beta.astype(f32) - mean * scale
    scale2 = scale.reshape(1, O2)                                      # tiny, unbroadcast
    bias2 = bias.reshape(1, O2)

    # ---- kernel 2: BN affine + ReLU + irfft2 ----
    inv_flops = B * (2 * (2 * H) * (2 * H) * (Co * Wf)
                     + 2 * (Co * H) * (2 * Wf) * W)
    inv_bytes = int(y.size * 2 + B * Co * H * W * np.dtype(in_dtype).itemsize
                    + (dhi.size + dwi.size) * 2 + 2 * O2 * 4)

    kernel2 = functools.partial(_bn_irfft_kernel, Co, H, W, Wf)
    out = pl.pallas_call(
        kernel2,
        grid=(B,),
        in_specs=[
            pl.BlockSpec((1, H * Wf, O2), lambda b: (b, 0, 0)),
            pl.BlockSpec((1, O2), lambda b: (0, 0)),                   # folded BN scale (resident)
            pl.BlockSpec((1, O2), lambda b: (0, 0)),                   # folded BN bias  (resident)
            pl.BlockSpec((2 * H, 2 * H), lambda b: (0, 0)),            # resident DFT table
            pl.BlockSpec((2 * Wf, W), lambda b: (0, 0)),               # resident DFT table
        ],
        out_specs=pl.BlockSpec((1, Co, H * W), lambda b: (b, 0, 0)),
        out_shape=jax.ShapeDtypeStruct((B, Co, H * W), in_dtype),      # lane-dense output slab
        compiler_params=pltpu.CompilerParams(
            dimension_semantics=("parallel",),
            vmem_limit_bytes=48 * 1024 * 1024,
        ),
        cost_estimate=pl.CostEstimate(flops=inv_flops, transcendentals=0,
                                      bytes_accessed=inv_bytes),
    )(y, scale2, bias2, dhi, dwi)
    return out.reshape(B, Co, H, W)


# ----------------------------- pure-JAX reference -----------------------------

def _reference(x, conv_w, gamma, beta):
    dtype = x.dtype
    xf = x.astype(jnp.float32)
    B, C, H, W = xf.shape
    ff = jnp.fft.rfft2(xf, norm="ortho")
    cat = jnp.concatenate([ff.real, ff.imag], axis=1)                  # (B, 2C, H, Wf)
    y = jnp.einsum("oi,bihw->bohw", conv_w.astype(jnp.float32), cat)
    mean = y.mean(axis=(0, 2, 3), keepdims=True)
    var = ((y - mean) ** 2).mean(axis=(0, 2, 3), keepdims=True)
    yn = (y - mean) / jnp.sqrt(var + _BN_EPS)
    yn = yn * gamma.reshape(1, -1, 1, 1) + beta.reshape(1, -1, 1, 1)
    yr = jnp.maximum(yn, 0.0)
    real, imag = jnp.split(yr, 2, axis=1)
    out = jnp.fft.irfft2(real + 1j * imag, s=(H, W), norm="ortho")
    return out.astype(dtype)


if __name__ == "__main__":
    B, C, H, W = 2, 4, 16, 16
    Co = 4  # out_channels

    key = jax.random.PRNGKey(0)
    k1, k2, k3, kx = jax.random.split(key, 4)
    conv_w = jax.random.normal(k1, (2 * Co, 2 * C), jnp.float32) / ((2.0 * C) ** 0.5)
    gamma = 1.0 + 0.1 * jax.random.normal(k2, (2 * Co,), jnp.float32)
    beta = 0.1 * jax.random.normal(k3, (2 * Co,), jnp.float32)
    x = jax.random.normal(kx, (B, C, H, W), jnp.float32)

    out = fourier_unit_forward(x, conv_w, gamma, beta)
    out = jax.block_until_ready(out)

    ref = _reference(x, conv_w, gamma, beta)
    err = float(jnp.max(jnp.abs(out - ref)))
    scale = float(jnp.max(jnp.abs(ref)))
    # bf16 MXU operands / bf16 spectrum round-trip (f32 accumulation) -> loose tolerance.
    assert err <= 5e-2 * max(1.0, scale), f"mismatch: max_abs_err={err}, ref_scale={scale}"
    print("KERNEL_OK")
</pallas_src>

<mosaic_0001>
module attributes {stable_mosaic.version = 11 : i64} {
  func.func @_fwd_conv_kernel(%arg0: i32, %arg1: memref<1x64x16xbf16, #tpu.memory_space<vmem>>, %arg2: memref<16x18xbf16, #tpu.memory_space<vmem>>, %arg3: memref<32x32xbf16, #tpu.memory_space<vmem>>, %arg4: memref<8x8xbf16, #tpu.memory_space<vmem>>, %arg5: memref<1x144x8xbf16, #tpu.memory_space<vmem>>, %arg6: memref<1x2x8xf32, #tpu.memory_space<vmem>>) attributes {dimension_semantics = [#tpu.dimension_semantics<parallel>], iteration_bounds = array<i64: 2>, scalar_prefetch = 0 : i64, scratch_operands = 0 : i64, tpu.core_type = #tpu.core_type<tc>, window_params = [{transform_indices = @transform_0, window_bounds = array<i64: 1, 64, 16>}, {pipeline_mode = #tpu.pipeline_mode<synchronous>, transform_indices = @transform_1, window_bounds = array<i64: 16, 18>}, {pipeline_mode = #tpu.pipeline_mode<synchronous>, transform_indices = @transform_2, window_bounds = array<i64: 32, 32>}, {pipeline_mode = #tpu.pipeline_mode<synchronous>, transform_indices = @transform_3, window_bounds = array<i64: 8, 8>}, {transform_indices = @transform_4, window_bounds = array<i64: 1, 144, 8>}, {transform_indices = @transform_5, window_bounds = array<i64: 1, 2, 8>}]} {
    %c0 = arith.constant 0 : index
    %c0_0 = arith.constant 0 : index
    %c0_1 = arith.constant 0 : index
    %0 = vector.load %arg1[%c0, %c0_0, %c0_1] : memref<1x64x16xbf16, #tpu.memory_space<vmem>>, vector<1x64x16xbf16>
    %1 = vector.shape_cast %0 : vector<1x64x16xbf16> to vector<64x16xbf16>
    %c0_2 = arith.constant 0 : index
    %c0_3 = arith.constant 0 : index
    %2 = vector.load %arg2[%c0_2, %c0_3] : memref<16x18xbf16, #tpu.memory_space<vmem>>, vector<16x18xbf16>
    %cst = arith.constant dense<0.000000e+00> : vector<64x18xf32>
    %3 = tpu.matmul %1, %2, %cst {dimension_numbers = #tpu.dot_dimension_numbers<[1], [0], [0], [1], [0, 0, 1, 1], [], []>} : vector<64x16xbf16>, vector<16x18xbf16>, vector<64x18xf32> -> vector<64x18xf32>
    %4 = arith.truncf %3 : vector<64x18xf32> to vector<64x18xbf16>
    %5 = vector.shape_cast %4 : vector<64x18xbf16> to vector<4x16x2x9xbf16>
    %6 = tpu.transpose %5, [2, 1, 0, 3] : vector<4x16x2x9xbf16> -> vector<2x16x4x9xbf16>
    %7 = vector.shape_cast %6 : vector<2x16x4x9xbf16> to vector<32x36xbf16>
    %c0_4 = arith.constant 0 : index
    %c0_5 = arith.constant 0 : index
    %8 = vector.load %arg3[%c0_4, %c0_5] : memref<32x32xbf16, #tpu.memory_space<vmem>>, vector<32x32xbf16>
    %cst_6 = arith.constant dense<0.000000e+00> : vector<32x36xf32>
    %9 = tpu.matmul %8, %7, %cst_6 {dimension_numbers = #tpu.dot_dimension_numbers<[1], [0], [0], [1], [0, 0, 1, 1], [], []>} : vector<32x32xbf16>, vector<32x36xbf16>, vector<32x36xf32> -> vector<32x36xf32>
    %10 = arith.truncf %9 : vector<32x36xf32> to vector<32x36xbf16>
    %11 = vector.shape_cast %10 : vector<32x36xbf16> to vector<2x16x4x9xbf16>
    %12 = tpu.transpose %11, [1, 3, 0, 2] : vector<2x16x4x9xbf16> -> vector<16x9x2x4xbf16>
    %13 = vector.shape_cast %12 : vector<16x9x2x4xbf16> to vector<144x8xbf16>
    %c0_7 = arith.constant 0 : index
    %c0_8 = arith.constant 0 : index
    %14 = vector.load %arg4[%c0_7, %c0_8] : memref<8x8xbf16, #tpu.memory_space<vmem>>, vector<8x8xbf16>
    %cst_9 = arith.constant dense<0.000000e+00> : vector<144x8xf32>
    %15 = tpu.matmul %13, %14, %cst_9 {dimension_numbers = #tpu.dot_dimension_numbers<[1], [0], [0], [1], [0, 0, 1, 1], [], []>} : vector<144x8xbf16>, vector<8x8xbf16>, vector<144x8xf32> -> vector<144x8xf32>
    %cst_10 = arith.constant dense<0.000000e+00> : vector<8xf32>
    %16 = vector.multi_reduction <add>, %15, %cst_10 [0] : vector<144x8xf32> to vector<8xf32>
    %17 = vector.shape_cast %16 : vector<8xf32> to vector<1x8xf32>
    %18 = arith.mulf %15, %15 : vector<144x8xf32>
    %cst_11 = arith.constant dense<0.000000e+00> : vector<8xf32>
    %19 = vector.multi_reduction <add>, %18, %cst_11 [0] : vector<144x8xf32> to vector<8xf32>
    %20 = vector.shape_cast %19 : vector<8xf32> to vector<1x8xf32>
    %21 = tpu.concatenate %17, %20 in 0 : vector<1x8xf32>, vector<1x8xf32> -> vector<2x8xf32>
    %c0_12 = arith.constant 0 : index
    %c0_13 = arith.constant 0 : index
    %c0_14 = arith.constant 0 : index
    %22 = vector.load %arg6[%c0_12, %c0_13, %c0_14] : memref<1x2x8xf32, #tpu.memory_space<vmem>>, vector<1x2x8xf32>
    %23 = vector.shape_cast %22 : vector<1x2x8xf32> to vector<2x8xf32>
    %24 = vector.shape_cast %21 : vector<2x8xf32> to vector<1x2x8xf32>
    tpu.vector_store %arg6[%c0_12, %c0_13, %c0_14], %24 {strides = array<i32>} : memref<1x2x8xf32, #tpu.memory_space<vmem>>, vector<1x2x8xf32>,
    %25 = arith.truncf %15 : vector<144x8xf32> to vector<144x8xbf16>
    %c0_15 = arith.constant 0 : index
    %c0_16 = arith.constant 0 : index
    %c0_17 = arith.constant 0 : index
    %26 = vector.load %arg5[%c0_15, %c0_16, %c0_17] : memref<1x144x8xbf16, #tpu.memory_space<vmem>>, vector<1x144x8xbf16>
    %27 = vector.shape_cast %26 : vector<1x144x8xbf16> to vector<144x8xbf16>
    %28 = vector.shape_cast %25 : vector<144x8xbf16> to vector<1x144x8xbf16>
    tpu.vector_store %arg5[%c0_15, %c0_16, %c0_17], %28 {strides = array<i32>} : memref<1x144x8xbf16, #tpu.memory_space<vmem>>, vector<1x144x8xbf16>,
    return
  }
  func.func @transform_0(%arg0: i32) -> (i32, i32, i32) {
    %c0_i32 = arith.constant 0 : i32
    %c0_i32_0 = arith.constant 0 : i32
    %c0_i32_1 = arith.constant 0 : i32
    return %arg0, %c0_i32, %c0_i32_0 : i32, i32, i32
  }
  func.func @transform_1(%arg0: i32) -> (i32, i32) {
    %c0_i32 = arith.constant 0 : i32
    %c0_i32_0 = arith.constant 0 : i32
    %c0_i32_1 = arith.constant 0 : i32
    return %c0_i32, %c0_i32_0 : i32, i32
  }
  func.func @transform_2(%arg0: i32) -> (i32, i32) {
    %c0_i32 = arith.constant 0 : i32
    %c0_i32_0 = arith.constant 0 : i32
    %c0_i32_1 = arith.constant 0 : i32
    return %c0_i32, %c0_i32_0 : i32, i32
  }
  func.func @transform_3(%arg0: i32) -> (i32, i32) {
    %c0_i32 = arith.constant 0 : i32
    %c0_i32_0 = arith.constant 0 : i32
    %c0_i32_1 = arith.constant 0 : i32
    return %c0_i32, %c0_i32_0 : i32, i32
  }
  func.func @transform_4(%arg0: i32) -> (i32, i32, i32) {
    %c0_i32 = arith.constant 0 : i32
    %c0_i32_0 = arith.constant 0 : i32
    %c0_i32_1 = arith.constant 0 : i32
    return %arg0, %c0_i32, %c0_i32_0 : i32, i32, i32
  }
  func.func @transform_5(%arg0: i32) -> (i32, i32, i32) {
    %c0_i32 = arith.constant 0 : i32
    %c0_i32_0 = arith.constant 0 : i32
    %c0_i32_1 = arith.constant 0 : i32
    return %arg0, %c0_i32, %c0_i32_0 : i32, i32, i32
  }
}

</mosaic_0001>

<llo_original>
// kernel: tpu_custom_call.1
$region0: #{tpu_custom_call.1}
  #allocation0 [shape = 'u32[]', space=smem, size = 0x4, offset = 0x4, fixed_abs, tag = 'smem constant byte address 0x4 - core index']
  #allocation1 [shape = 'u32[72,128]{1,0:T(1,128)}', space=vmem, size = 0x9000, scoped, tag = 'internal scratch']
  %s0 = inlined_call_operand.vmem [shape: bf16[2,64,16], index: 0, kind: input, shape index: {}]
  %s1 = inlined_call_operand.vmem [shape: bf16[16,18], index: 1, kind: input, shape index: {}]
  %s2 = inlined_call_operand.vmem [shape: bf16[32,32], index: 2, kind: input, shape index: {}]
  %s3 = inlined_call_operand.vmem [shape: bf16[8,8], index: 3, kind: input, shape index: {}]
  %s4 = inlined_call_operand.vmem [shape: bf16[2,144,8], index: 4, kind: output, shape index: {0}]
  %s5 = inlined_call_operand.hbm [shape: f32[2,2,8], index: 5, kind: output, shape index: {1}]
  %6 = xla_tuple %s4, %s5
  %s7 = sld [smem:[#allocation0]]
  $region57: #{tpu_custom_call.1} parent=0
    _
  %s9 = ssub.s32 1, %s7
  %s10 = scalar_select 0, %s9, %s7
  $region1: #{tpu_custom_call.1} parent=0
    #allocation2 [shape = 'u8[2048]{0}', space=vmem, size = 0x800, scoped, tag = 'output window, operand 1']
    #allocation3 [shape = 's32[2]{0}', space=sflag, size = 0x8, scoped, tag = 'scoped memory for tpu_custom_call.1']
    %11 = vsyncpa [#allocation3], 0
    %s12 = scalar_lea.sflag [#allocation3], 1
    %13 = vsyncpa %s12, 0
    loop: start=0, step=1, limit=4
    $region2: #{tpu_custom_call.1} parent=1 // loop_pre_header
      _
    $region3: #{tpu_custom_call.1} parent=1 // loop_header
      %s15 = sphi 0, %s19
      %p16 = scmp.ge.s32.totalorder %s15, 4
      %s25 = sphi 0, %s27
      %s28 = sphi 0, %s25
      %s29 = sphi 0, %s28
      %s45 = sphi 0, %s29
      %s49 = sphi 0, %s49
      %s51 = sphi 0, %s49
      %s52 = sphi 0, %s51
      %s66 = sphi 0, %s52
      %s70 = sphi 0, %s70
      %s72 = sphi 0, %s70
      %s73 = sphi 0, %s72
      %s87 = sphi 0, %s73
      %s91 = sphi 0, %s91
      %s93 = sphi 0, %s91
      %s94 = sphi 0, %s93
      %s108 = sphi 0, %s94
      %s114 = sphi 0, %s116
      %s117 = sphi 0, %s114
      %s118 = sphi 0, %s117
      %s134 = sphi 0, %s118
      %s140 = sphi 0, %s142
      %s143 = sphi 0, %s140
      %s144 = sphi 0, %s143
      %s160 = sphi 0, %s144
    $region4: #{tpu_custom_call.1} parent=1 // loop_header_branch
      %18 = sbr.rel (%p16) target = $region8
    $region5: #{tpu_custom_call.1} parent=1 // loop_body
      %s20 = ssub.s32 %s15, 1
      %s21 = ssub.s32 %s15, 2
      %s22 = sadd.s32 %s15, 1
      %s23 = ssub.s32 %s15, %s22
      %p24 = scmp.eq.s32.totalorder %s23, 0
      %s26 = sadd.s32 %s25, 1
      %s27 = scalar_select %p24, %s25, %s26
      %p30 = pneg %p24
      %p31 = scmp.eq.s32.totalorder %s15, 1
      %p32 = por %p30, %p31
      %p33 = scmp.ne.s32.totalorder %s25, %s28
      %p34 = scmp.eq.s32.totalorder %s15, 0
      %p35 = por %p33, %p34
      %p36 = scmp.ne.s32.totalorder %s25, %s28
      %p37 = scmp.eq.s32.totalorder %s20, 1
      %p38 = por %p36, %p37
      %p39 = scmp.ne.s32.totalorder %s28, %s29
      %p40 = scmp.eq.s32.totalorder %s20, 0
      %p41 = por %p39, %p40
      %p42 = scmp.ne.s32.totalorder %s28, %s29
      %p43 = scmp.eq.s32.totalorder %s21, 1
      %p44 = por %p42, %p43
      %p46 = scmp.ne.s32.totalorder %s29, %s45
      %p47 = scmp.eq.s32.totalorder %s21, 0
      %p48 = por %p46, %p47
      %s50 = sadd.s32 %s49, 1
      %p53 = scmp.eq.s32.totalorder %s15, 1
      %p54 = scmp.ne.s32.totalorder %s49, %s51
      %p55 = scmp.eq.s32.totalorder %s15, 0
      %p56 = por %p54, %p55
      %p57 = scmp.ne.s32.totalorder %s49, %s51
      %p58 = scmp.eq.s32.totalorder %s20, 1
      %p59 = por %p57, %p58
      %p60 = scmp.ne.s32.totalorder %s51, %s52
      %p61 = scmp.eq.s32.totalorder %s20, 0
      %p62 = por %p60, %p61
      %p63 = scmp.ne.s32.totalorder %s51, %s52
      %p64 = scmp.eq.s32.totalorder %s21, 1
      %p65 = por %p63, %p64
      %p67 = scmp.ne.s32.totalorder %s52, %s66
      %p68 = scmp.eq.s32.totalorder %s21, 0
      %p69 = por %p67, %p68
      %s71 = sadd.s32 %s70, 1
      %p74 = scmp.eq.s32.totalorder %s15, 1
      %p75 = scmp.ne.s32.totalorder %s70, %s72
      %p76 = scmp.eq.s32.totalorder %s15, 0
      %p77 = por %p75, %p76
      %p78 = scmp.ne.s32.totalorder %s70, %s72
      %p79 = scmp.eq.s32.totalorder %s20, 1
      %p80 = por %p78, %p79
      %p81 = scmp.ne.s32.totalorder %s72, %s73
      %p82 = scmp.eq.s32.totalorder %s20, 0
      %p83 = por %p81, %p82
      %p84 = scmp.ne.s32.totalorder %s72, %s73
      %p85 = scmp.eq.s32.totalorder %s21, 1
      %p86 = por %p84, %p85
      %p88 = scmp.ne.s32.totalorder %s73, %s87
      %p89 = scmp.eq.s32.totalorder %s21, 0
      %p90 = por %p88, %p89
      %s92 = sadd.s32 %s91, 1
      %p95 = scmp.eq.s32.totalorder %s15, 1
      %p96 = scmp.ne.s32.totalorder %s91, %s93
      %p97 = scmp.eq.s32.totalorder %s15, 0
      %p98 = por %p96, %p97
      %p99 = scmp.ne.s32.totalorder %s91, %s93
      %p100 = scmp.eq.s32.totalorder %s20, 1
      %p101 = por %p99, %p100
      %p102 = scmp.ne.s32.totalorder %s93, %s94
      %p103 = scmp.eq.s32.totalorder %s20, 0
      %p104 = por %p102, %p103
      %p105 = scmp.ne.s32.totalorder %s93, %s94
      %p106 = scmp.eq.s32.totalorder %s21, 1
      %p107 = por %p105, %p106
      %p109 = scmp.ne.s32.totalorder %s94, %s108
      %p110 = scmp.eq.s32.totalorder %s21, 0
      %p111 = por %p109, %p110
      %s112 = ssub.s32 %s15, %s22
      %p113 = scmp.eq.s32.totalorder %s112, 0
      %s115 = sadd.s32 %s114, 1
      %s116 = scalar_select %p113, %s114, %s115
      %p119 = pneg %p113
      %p120 = scmp.eq.s32.totalorder %s15, 1
      %p121 = por %p119, %p120
      %p122 = scmp.ne.s32.totalorder %s114, %s117
      %p123 = scmp.eq.s32.totalorder %s15, 0
      %p124 = por %p122, %p123
      %p125 = scmp.ne.s32.totalorder %s114, %s117
      %p126 = scmp.eq.s32.totalorder %s20, 1
      %p127 = por %p125, %p126
      %p128 = scmp.ne.s32.totalorder %s117, %s118
      %p129 = scmp.eq.s32.totalorder %s20, 0
      %p130 = por %p128, %p129
      %p131 = scmp.ne.s32.totalorder %s117, %s118
      %p132 = scmp.eq.s32.totalorder %s21, 1
      %p133 = por %p131, %p132
      %p135 = scmp.ne.s32.totalorder %s118, %s134
      %p136 = scmp.eq.s32.totalorder %s21, 0
      %p137 = por %p135, %p136
      %s138 = ssub.s32 %s15, %s22
      %p139 = scmp.eq.s32.totalorder %s138, 0
      %s141 = sadd.s32 %s140, 1
      %s142 = scalar_select %p139, %s140, %s141
      %p145 = pneg %p139
      %p146 = scmp.eq.s32.totalorder %s15, 1
      %p147 = por %p145, %p146
      %p148 = scmp.ne.s32.totalorder %s140, %s143
      %p149 = scmp.eq.s32.totalorder %s15, 0
      %p150 = por %p148, %p149
      %p151 = scmp.ne.s32.totalorder %s140, %s143
      %p152 = scmp.eq.s32.totalorder %s20, 1
      %p153 = por %p151, %p152
      %p154 = scmp.ne.s32.totalorder %s143, %s144
      %p155 = scmp.eq.s32.totalorder %s20, 0
      %p156 = por %p154, %p155
      %p157 = scmp.ne.s32.totalorder %s143, %s144
      %p158 = scmp.eq.s32.totalorder %s21, 1
      %p159 = por %p157, %p158
      %p161 = scmp.ne.s32.totalorder %s144, %s160
      %p162 = scmp.eq.s32.totalorder %s21, 0
      %p163 = por %p161, %p162
      %p164 = scmp.le.s32.totalorder 1, %s15
      %p165 = scmp.lt.s32.totalorder %s15, 3
      %p166 = pnand %p164, %p165
      %p167 = pneg %p166
      // Predicated region
      $region9: #{tpu_custom_call.1} parent=5 // pred_check
        _
      $region10: #{tpu_custom_call.1} parent=5 // pred_check_branch
        %169 = sbr.rel (%p166) target = $region12
      $region11: #{tpu_custom_call.1} parent=5 // pred_region
        %s170 = ssub.s32 %s15, 1
        // Predicated region
        $region13: #{tpu_custom_call.1} parent=11 // pred_check
          %p171 = pneg %p62
        $region14: #{tpu_custom_call.1} parent=11 // pred_check_branch
          %173 = sbr.rel (%p171) target = $region16
        $region15: #{tpu_custom_call.1} parent=11 // pred_region
          _
        $region16: #{tpu_custom_call.1} parent=11 // pred_fallthru
          _
        // Predicated region
        $region17: #{tpu_custom_call.1} parent=11 // pred_check
          %p174 = pneg %p83
        $region18: #{tpu_custom_call.1} parent=11 // pred_check_branch
          %176 = sbr.rel (%p174) target = $region20
        $region19: #{tpu_custom_call.1} parent=11 // pred_region
          _
        $region20: #{tpu_custom_call.1} parent=11 // pred_fallthru
          _
        // Predicated region
        $region21: #{tpu_custom_call.1} parent=11 // pred_check
          %p177 = pneg %p104
        $region22: #{tpu_custom_call.1} parent=11 // pred_check_branch
          %179 = sbr.rel (%p177) target = $region24
        $region23: #{tpu_custom_call.1} parent=11 // pred_region
          _
        $region24: #{tpu_custom_call.1} parent=11 // pred_fallthru
          _
      $region12: #{tpu_custom_call.1} parent=5 // pred_fallthru
        _
      %p180 = scmp.lt.s32.totalorder %s15, 2
      // Predicated region
      $region25: #{tpu_custom_call.1} parent=5 // pred_check
        %p181 = pneg %p180
      $region26: #{tpu_custom_call.1} parent=5 // pred_check_branch
        %183 = sbr.rel (%p181) target = $region28
      $region27: #{tpu_custom_call.1} parent=5 // pred_region
        // Predicated region
        $region29: #{tpu_custom_call.1} parent=27 // pred_check
          %p184 = pneg %p35
        $region30: #{tpu_custom_call.1} parent=27 // pred_check_branch
          %186 = sbr.rel (%p184) target = $region32
        $region31: #{tpu_custom_call.1} parent=27 // pred_region
          %p187 = scmp.lt.s32.totalorder %s15, 1
          %s188 = scalar_select %p187, %s15, 1
          %s189 = smul.addr %s188, 8
          %s190 = smul.addr %s189, 4
          %s191 = scalar_lea.vmem %s0, %s190
        $region32: #{tpu_custom_call.1} parent=27 // pred_fallthru
          _
      $region28: #{tpu_custom_call.1} parent=5 // pred_fallthru
        _
      %p192 = scmp.le.s32.totalorder 1, %s15
      %p193 = scmp.lt.s32.totalorder %s15, 3
      %p194 = pnand %p192, %p193
      %p195 = pneg %p194
      // Predicated region
      $region33: #{tpu_custom_call.1} parent=5 // pred_check
        _
      $region34: #{tpu_custom_call.1} parent=5 // pred_check_branch
        %197 = sbr.rel (%p194) target = $region36
      $region35: #{tpu_custom_call.1} parent=5 // pred_region
        %s198 = ssub.s32 %s15, 1
        %p199 = scmp.lt.s32.totalorder %s20, 1
        %s200 = scalar_select %p199, %s20, 1
        %s201 = smul.addr %s200, 8
        %s202 = smul.addr %s201, 4
        %s203 = scalar_lea.vmem %s0, %s202
        %p204 = pneg %p41
        %p205 = pneg %p38
        %p206 = pneg %p62
        %p207 = pneg %p59
        %p208 = pneg %p83
        %p209 = pneg %p80
        %p210 = pneg %p104
        %p211 = pneg %p101
        %p212 = pneg %p130
        %p213 = pneg %p127
        %p214 = scmp.lt.s32.totalorder %s20, 1
        %s215 = scalar_select %p214, %s20, 1
        %s216 = smul.addr %s215, 18
        %s217 = smul.addr %s216, 4
        %s218 = scalar_lea.vmem %s4, %s217
        %p219 = pneg %p156
        %p220 = pneg %p153
        %s221 = sand.u32 %s143, 1
        %s222 = scalar_lea.sflag [#allocation3], %s221
        %s223 = sand.u32 %s143, 1
        %s224 = smul.addr %s223, 2
        %s225 = scalar_lea.vmem [#allocation2], %s224
        %p226 = scmp.lt.s32.totalorder %s20, 1
        %s227 = scalar_select %p226, %s20, 1
        %s228 = smul.addr %s227, 8
        %s229 = smul.addr %s228, 4
        %s230 = scalar_lea.vmem %s0, %s229
        %p231 = scmp.lt.s32.totalorder %s20, 1
        %s232 = scalar_select %p231, %s20, 1
        %s233 = smul.addr %s232, 18
        %s234 = smul.addr %s233, 4
        %s235 = scalar_lea.vmem %s4, %s234
        %v237 = vld [vmem:[%s230] sm:$0xf]
        %v238 = vld [vmem:[%s230 + $0x4] sm:$0xf]
        %v239 = vld [vmem:[%s230 + $0x8] sm:$0xf]
        %v240 = vld [vmem:[%s230 + $0xc] sm:$0xf]
        %v241 = vld [vmem:[%s230 + $0x10] sm:$0xf]
        %v242 = vld [vmem:[%s230 + $0x14] sm:$0xf]
        %v243 = vld [vmem:[%s230 + $0x18] sm:$0xf]
        %v244 = vld [vmem:[%s230 + $0x1c] sm:$0xf]
        %v245 = vld [vmem:[%s1] sm:$0xf]
        %v246 = vld [vmem:[%s1 + $0x4] sm:$0xf]
        %v255 = vunpack.c.l.b16 %v237
        %v256 = vunpack.c.l.b16 %v238
        %v257 = vunpack.c.l.b16 %v239
        %v258 = vunpack.c.l.b16 %v240
        %v259 = vunpack.c.l.b16 %v241
        %v260 = vunpack.c.l.b16 %v242
        %v261 = vunpack.c.l.b16 %v243
        %v262 = vunpack.c.l.b16 %v244
        %v263 = vpack.c.b16 %v256, %v255
        %v264 = vpack.c.b16 %v258, %v257
        %v265 = vpack.c.b16 %v260, %v259
        %v266 = vpack.c.b16 %v262, %v261
        %v269 = vunpack.c.l.b16 %v245
        %v270 = vunpack.c.l.b16 %v246
        %v271 = vpack.c.b16 %v270, %v269
        %vm273 = vcmask 130048
        %v275 = vsel %vm273, %v263, 0
        %v278 = vsel %vm273, %v264, 0
        %v281 = vsel %vm273, %v265, 0
        %v284 = vsel %vm273, %v266, 0
        %286 = vmatpush.bf16.msra.mxu0 0
        %287 = vmatpush.bf16.msra.mxu0 0
        %288 = vmatpush.bf16.msra.mxu0 0
        %289 = vmatpush.bf16.msra.mxu0 0
        %290 = vmatpush.bf16.msra.mxu0 0
        %291 = vmatpush.bf16.msra.mxu0 0
        %292 = vmatpush.bf16.msra.mxu0 0
        %293 = vmatpush.bf16.msra.mxu0 %v271
        %294 = vmatmul.bf16.gmra.mxu0 %v275
        %v295 = vpop.f32.mrf.mxu0
        %v296 = vadd.f32 0.0, %v295
        %v297 = vpop.f32.mrf.mxu0
        %v298 = vadd.f32 0.0, %v297
        %299 = vmatmul.bf16.gmra.mxu0 %v278
        %v300 = vpop.f32.mrf.mxu0
        %v301 = vadd.f32 0.0, %v300
        %v302 = vpop.f32.mrf.mxu0
        %v303 = vadd.f32 0.0, %v302
        %304 = vmatmul.bf16.gmra.mxu0 %v281
        %v305 = vpop.f32.mrf.mxu0
        %v306 = vadd.f32 0.0, %v305
        %v307 = vpop.f32.mrf.mxu0
        %v308 = vadd.f32 0.0, %v307
        %309 = vmatmul.bf16.gmra.mxu0 %v284
        %v310 = vpop.f32.mrf.mxu0
        %v311 = vadd.f32 0.0, %v310
        %v312 = vpop.f32.mrf.mxu0
        %v313 = vadd.f32 0.0, %v312
        %314 = vdwg.mxu0
        %v315 = vpack.c.bf16 %v296, %v296
        %v316 = vpack.c.bf16 %v298, %v298
        %v317 = vpack.c.bf16 %v301, %v301
        %v318 = vpack.c.bf16 %v303, %v303
        %v319 = vpack.c.bf16 %v306, %v306
        %v320 = vpack.c.bf16 %v308, %v308
        %v321 = vpack.c.bf16 %v311, %v311
        %v322 = vpack.c.bf16 %v313, %v313
        %331 = vrot.lane.b32.xlu0 %v315, 119
        %v332 = vpop.permute.xlu0 %331
        %333 = vrot.lane.b32.xlu0 %v316, 119
        %v334 = vpop.permute.xlu0 %333
        %335 = vrot.lane.b32.xlu0 %v317, 119
        %v336 = vpop.permute.xlu0 %335
        %337 = vrot.lane.b32.xlu0 %v318, 119
        %v338 = vpop.permute.xlu0 %337
        %339 = vrot.lane.b32.xlu0 %v319, 119
        %v340 = vpop.permute.xlu0 %339
        %341 = vrot.lane.b32.xlu0 %v320, 119
        %v342 = vpop.permute.xlu0 %341
        %343 = vrot.lane.b32.xlu0 %v321, 119
        %v344 = vpop.permute.xlu0 %343
        %345 = vrot.lane.b32.xlu0 %v322, 119
        %v346 = vpop.permute.xlu0 %345
        %v349 = vpack.i.b16 %v332, %v315
        %v350 = vshrl.u32 %v315, 16
        %v351 = vshrl.u32 %v332, 16
        %v352 = vpack.i.b16 %v351, %v350
        %v355 = vpack.i.b16 %v334, %v316
        %v356 = vshrl.u32 %v316, 16
        %v357 = vshrl.u32 %v334, 16
        %v358 = vpack.i.b16 %v357, %v356
        %v361 = vpack.i.b16 %v336, %v317
        %v362 = vshrl.u32 %v317, 16
        %v363 = vshrl.u32 %v336, 16
        %v364 = vpack.i.b16 %v363, %v362
        %v367 = vpack.i.b16 %v338, %v318
        %v368 = vshrl.u32 %v318, 16
        %v369 = vshrl.u32 %v338, 16
        %v370 = vpack.i.b16 %v369, %v368
        %v373 = vpack.i.b16 %v340, %v319
        %v374 = vshrl.u32 %v319, 16
        %v375 = vshrl.u32 %v340, 16
        %v376 = vpack.i.b16 %v375, %v374
        %v379 = vpack.i.b16 %v342, %v320
        %v380 = vshrl.u32 %v320, 16
        %v381 = vshrl.u32 %v342, 16
        %v382 = vpack.i.b16 %v381, %v380
        %v385 = vpack.i.b16 %v344, %v321
        %v386 = vshrl.u32 %v321, 16
        %v387 = vshrl.u32 %v344, 16
        %v388 = vpack.i.b16 %v387, %v386
        %v391 = vpack.i.b16 %v346, %v322
        %v392 = vshrl.u32 %v322, 16
        %v393 = vshrl.u32 %v346, 16
        %v394 = vpack.i.b16 %v393, %v392
        %v397 = vunpack.c.l.s4 1983009808
        %v398 = vunpack.c.0.s8 %v397
        %v399 = vperm.slane %v349, %v398
        %v400 = vrot.slane %v399, 4
        %vm401 = vcmask 1047556
        %v402 = vsel %vm401, 0, %v400
        %v404 = vunpack.c.l.s4 1934713408
        %v405 = vunpack.c.0.s8 %v404
        %v406 = vperm.slane %v399, %v405
        %v408 = vunpack.c.l.s4 1934713408
        %v409 = vunpack.c.0.s8 %v408
        %v410 = vperm.slane %v402, %v409
        %v413 = vunpack.c.l.s4 1983009808
        %v414 = vunpack.c.0.s8 %v413
        %v415 = vperm.slane %v352, %v414
        %v416 = vrot.slane %v415, 4
        %v417 = vsel %vm401, 0, %v416
        %v419 = vunpack.c.l.s4 1934713408
        %v420 = vunpack.c.0.s8 %v419
        %v421 = vperm.slane %v415, %v420
        %v423 = vunpack.c.l.s4 1934713408
        %v424 = vunpack.c.0.s8 %v423
        %v425 = vperm.slane %v417, %v424
        %v428 = vunpack.c.l.s4 1983009808
        %v429 = vunpack.c.0.s8 %v428
        %v430 = vperm.slane %v355, %v429
        %v431 = vrot.slane %v430, 4
        %v432 = vsel %vm401, 0, %v431
        %v434 = vunpack.c.l.s4 1934713408
        %v435 = vunpack.c.0.s8 %v434
        %v436 = vperm.slane %v430, %v435
        %v438 = vunpack.c.l.s4 1934713408
        %v439 = vunpack.c.0.s8 %v438
        %v440 = vperm.slane %v432, %v439
        %v443 = vunpack.c.l.s4 1983009808
        %v444 = vunpack.c.0.s8 %v443
        %v445 = vperm.slane %v358, %v444
        %v446 = vrot.slane %v445, 4
        %v447 = vsel %vm401, 0, %v446
        %v449 = vunpack.c.l.s4 1934713408
        %v450 = vunpack.c.0.s8 %v449
        %v451 = vperm.slane %v445, %v450
        %v453 = vunpack.c.l.s4 1934713408
        %v454 = vunpack.c.0.s8 %v453
        %v455 = vperm.slane %v447, %v454
        %v458 = vunpack.c.l.s4 1983009808
        %v459 = vunpack.c.0.s8 %v458
        %v460 = vperm.slane %v361, %v459
        %v461 = vrot.slane %v460, 4
        %v462 = vsel %vm401, 0, %v461
        %v464 = vunpack.c.l.s4 1934713408
        %v465 = vunpack.c.0.s8 %v464
        %v466 = vperm.slane %v460, %v465
        %v468 = vunpack.c.l.s4 1934713408
        %v469 = vunpack.c.0.s8 %v468
        %v470 = vperm.slane %v462, %v469
        %v473 = vunpack.c.l.s4 1983009808
        %v474 = vunpack.c.0.s8 %v473
        %v475 = vperm.slane %v364, %v474
        %v476 = vrot.slane %v475, 4
        %v477 = vsel %vm401, 0, %v476
        %v479 = vunpack.c.l.s4 1934713408
        %v480 = vunpack.c.0.s8 %v479
        %v481 = vperm.slane %v475, %v480
        %v483 = vunpack.c.l.s4 1934713408
        %v484 = vunpack.c.0.s8 %v483
        %v485 = vperm.slane %v477, %v484
        %v488 = vunpack.c.l.s4 1983009808
        %v489 = vunpack.c.0.s8 %v488
        %v490 = vperm.slane %v367, %v489
        %v491 = vrot.slane %v490, 4
        %v492 = vsel %vm401, 0, %v491
        %v494 = vunpack.c.l.s4 1934713408
        %v495 = vunpack.c.0.s8 %v494
        %v496 = vperm.slane %v490, %v495
        %v498 = vunpack.c.l.s4 1934713408
        %v499 = vunpack.c.0.s8 %v498
        %v500 = vperm.slane %v492, %v499
        %v503 = vunpack.c.l.s4 1983009808
        %v504 = vunpack.c.0.s8 %v503
        %v505 = vperm.slane %v370, %v504
        %v506 = vrot.slane %v505, 4
        %v507 = vsel %vm401, 0, %v506
        %v509 = vunpack.c.l.s4 1934713408
        %v510 = vunpack.c.0.s8 %v509
        %v511 = vperm.slane %v505, %v510
        %v513 = vunpack.c.l.s4 1934713408
        %v514 = vunpack.c.0.s8 %v513
        %v515 = vperm.slane %v507, %v514
        %v518 = vunpack.c.l.s4 1983009808
        %v519 = vunpack.c.0.s8 %v518
        %v520 = vperm.slane %v373, %v519
        %v521 = vrot.slane %v520, 4
        %v522 = vsel %vm401, 0, %v521
        %v524 = vunpack.c.l.s4 1934713408
        %v525 = vunpack.c.0.s8 %v524
        %v526 = vperm.slane %v520, %v525
        %v528 = vunpack.c.l.s4 1934713408
        %v529 = vunpack.c.0.s8 %v528
        %v530 = vperm.slane %v522, %v529
        %v533 = vunpack.c.l.s4 1983009808
        %v534 = vunpack.c.0.s8 %v533
        %v535 = vperm.slane %v376, %v534
        %v536 = vrot.slane %v535, 4
        %v537 = vsel %vm401, 0, %v536
        %v539 = vunpack.c.l.s4 1934713408
        %v540 = vunpack.c.0.s8 %v539
        %v541 = vperm.slane %v535, %v540
        %v543 = vunpack.c.l.s4 1934713408
        %v544 = vunpack.c.0.s8 %v543
        %v545 = vperm.slane %v537, %v544
        %v548 = vunpack.c.l.s4 1983009808
        %v549 = vunpack.c.0.s8 %v548
        %v550 = vperm.slane %v379, %v549
        %v551 = vrot.slane %v550, 4
        %v552 = vsel %vm401, 0, %v551
        %v554 = vunpack.c.l.s4 1934713408
        %v555 = vunpack.c.0.s8 %v554
        %v556 = vperm.slane %v550, %v555
        %v558 = vunpack.c.l.s4 1934713408
        %v559 = vunpack.c.0.s8 %v558
        %v560 = vperm.slane %v552, %v559
        %v563 = vunpack.c.l.s4 1983009808
        %v564 = vunpack.c.0.s8 %v563
        %v565 = vperm.slane %v382, %v564
        %v566 = vrot.slane %v565, 4
        %v567 = vsel %vm401, 0, %v566
        %v569 = vunpack.c.l.s4 1934713408
        %v570 = vunpack.c.0.s8 %v569
        %v571 = vperm.slane %v565, %v570
        %v573 = vunpack.c.l.s4 1934713408
        %v574 = vunpack.c.0.s8 %v573
        %v575 = vperm.slane %v567, %v574
        %v578 = vunpack.c.l.s4 1983009808
        %v579 = vunpack.c.0.s8 %v578
        %v580 = vperm.slane %v385, %v579
        %v581 = vrot.slane %v580, 4
        %v582 = vsel %vm401, 0, %v581
        %v584 = vunpack.c.l.s4 1934713408
        %v585 = vunpack.c.0.s8 %v584
        %v586 = vperm.slane %v580, %v585
        %v588 = vunpack.c.l.s4 1934713408
        %v589 = vunpack.c.0.s8 %v588
        %v590 = vperm.slane %v582, %v589
        %v593 = vunpack.c.l.s4 1983009808
        %v594 = vunpack.c.0.s8 %v593
        %v595 = vperm.slane %v388, %v594
        %v596 = vrot.slane %v595, 4
        %v597 = vsel %vm401, 0, %v596
        %v599 = vunpack.c.l.s4 1934713408
        %v600 = vunpack.c.0.s8 %v599
        %v601 = vperm.slane %v595, %v600
        %v603 = vunpack.c.l.s4 1934713408
        %v604 = vunpack.c.0.s8 %v603
        %v605 = vperm.slane %v597, %v604
        %v608 = vunpack.c.l.s4 1983009808
        %v609 = vunpack.c.0.s8 %v608
        %v610 = vperm.slane %v391, %v609
        %v611 = vrot.slane %v610, 4
        %v612 = vsel %vm401, 0, %v611
        %v614 = vunpack.c.l.s4 1934713408
        %v615 = vunpack.c.0.s8 %v614
        %v616 = vperm.slane %v610, %v615
        %v618 = vunpack.c.l.s4 1934713408
        %v619 = vunpack.c.0.s8 %v618
        %v620 = vperm.slane %v612, %v619
        %v623 = vunpack.c.l.s4 1983009808
        %v624 = vunpack.c.0.s8 %v623
        %v625 = vperm.slane %v394, %v624
        %v626 = vrot.slane %v625, 4
        %v627 = vsel %vm401, 0, %v626
        %v629 = vunpack.c.l.s4 1934713408
        %v630 = vunpack.c.0.s8 %v629
        %v631 = vperm.slane %v625, %v630
        %v633 = vunpack.c.l.s4 1934713408
        %v634 = vunpack.c.0.s8 %v633
        %v635 = vperm.slane %v627, %v634
        %v636 = vrot.slane %v526, 4
        %v637 = vsel %vm401, %v636, %v406
        %v639 = vunpack.c.l.s4 1934713408
        %v640 = vunpack.c.0.s8 %v639
        %v641 = vperm.slane %v637, %v640
        %v642 = vrot.slane %v586, 4
        %v643 = vsel %vm401, %v642, %v466
        %v645 = vunpack.c.l.s4 1934713408
        %v646 = vunpack.c.0.s8 %v645
        %v647 = vperm.slane %v643, %v646
        %v648 = vrot.slane %v541, 4
        %v649 = vsel %vm401, %v648, %v421
        %v651 = vunpack.c.l.s4 1934713408
        %v652 = vunpack.c.0.s8 %v651
        %v653 = vperm.slane %v649, %v652
        %v654 = vrot.slane %v601, 4
        %v655 = vsel %vm401, %v654, %v481
        %v657 = vunpack.c.l.s4 1934713408
        %v658 = vunpack.c.0.s8 %v657
        %v659 = vperm.slane %v655, %v658
        %v660 = vrot.slane %v406, 4
        %v661 = vsel %vm401, 0, %v660
        %v662 = vsel %vm401, 0, %v636
        %v663 = vrot.slane %v662, 4
        %v664 = vsel %vm401, %v663, %v661
        %v666 = vunpack.c.l.s4 1934713408
        %v667 = vunpack.c.0.s8 %v666
        %v668 = vperm.slane %v664, %v667
        %v669 = vrot.slane %v466, 4
        %v670 = vsel %vm401, 0, %v669
        %v671 = vsel %vm401, 0, %v642
        %v672 = vrot.slane %v671, 4
        %v673 = vsel %vm401, %v672, %v670
        %v675 = vunpack.c.l.s4 1934713408
        %v676 = vunpack.c.0.s8 %v675
        %v677 = vperm.slane %v673, %v676
        %v678 = vrot.slane %v421, 4
        %v679 = vsel %vm401, 0, %v678
        %v680 = vsel %vm401, 0, %v648
        %v681 = vrot.slane %v680, 4
        %v682 = vsel %vm401, %v681, %v679
        %v684 = vunpack.c.l.s4 1934713408
        %v685 = vunpack.c.0.s8 %v684
        %v686 = vperm.slane %v682, %v685
        %v687 = vrot.slane %v481, 4
        %v688 = vsel %vm401, 0, %v687
        %v689 = vsel %vm401, 0, %v654
        %v690 = vrot.slane %v689, 4
        %v691 = vsel %vm401, %v690, %v688
        %v693 = vunpack.c.l.s4 1934713408
        %v694 = vunpack.c.0.s8 %v693
        %v695 = vperm.slane %v691, %v694
        %v696 = vrot.slane %v530, 4
        %v697 = vsel %vm401, %v696, %v410
        %v699 = vunpack.c.l.s4 1934713408
        %v700 = vunpack.c.0.s8 %v699
        %v701 = vperm.slane %v697, %v700
        %v702 = vrot.slane %v590, 4
        %v703 = vsel %vm401, %v702, %v470
        %v705 = vunpack.c.l.s4 1934713408
        %v706 = vunpack.c.0.s8 %v705
        %v707 = vperm.slane %v703, %v706
        %v708 = vrot.slane %v545, 4
        %v709 = vsel %vm401, %v708, %v425
        %v711 = vunpack.c.l.s4 1934713408
        %v712 = vunpack.c.0.s8 %v711
        %v713 = vperm.slane %v709, %v712
        %v714 = vrot.slane %v605, 4
        %v715 = vsel %vm401, %v714, %v485
        %v717 = vunpack.c.l.s4 1934713408
        %v718 = vunpack.c.0.s8 %v717
        %v719 = vperm.slane %v715, %v718
        %v720 = vrot.slane %v410, 4
        %v721 = vsel %vm401, 0, %v720
        %v722 = vsel %vm401, 0, %v696
        %v723 = vrot.slane %v722, 4
        %v724 = vsel %vm401, %v723, %v721
        %v726 = vunpack.c.l.s4 1934713408
        %v727 = vunpack.c.0.s8 %v726
        %v728 = vperm.slane %v724, %v727
        %v729 = vrot.slane %v470, 4
        %v730 = vsel %vm401, 0, %v729
        %v731 = vsel %vm401, 0, %v702
        %v732 = vrot.slane %v731, 4
        %v733 = vsel %vm401, %v732, %v730
        %v735 = vunpack.c.l.s4 1934713408
        %v736 = vunpack.c.0.s8 %v735
        %v737 = vperm.slane %v733, %v736
        %v738 = vrot.slane %v425, 4
        %v739 = vsel %vm401, 0, %v738
        %v740 = vsel %vm401, 0, %v708
        %v741 = vrot.slane %v740, 4
        %v742 = vsel %vm401, %v741, %v739
        %v744 = vunpack.c.l.s4 1934713408
        %v745 = vunpack.c.0.s8 %v744
        %v746 = vperm.slane %v742, %v745
        %v747 = vrot.slane %v485, 4
        %v748 = vsel %vm401, 0, %v747
        %v749 = vsel %vm401, 0, %v714
        %v750 = vrot.slane %v749, 4
        %v751 = vsel %vm401, %v750, %v748
        %v753 = vunpack.c.l.s4 1934713408
        %v754 = vunpack.c.0.s8 %v753
        %v755 = vperm.slane %v751, %v754
        %v756 = vrot.slane %v556, 4
        %v757 = vsel %vm401, %v756, %v436
        %v759 = vunpack.c.l.s4 1934713408
        %v760 = vunpack.c.0.s8 %v759
        %v761 = vperm.slane %v757, %v760
        %v762 = vrot.slane %v616, 4
        %v763 = vsel %vm401, %v762, %v496
        %v765 = vunpack.c.l.s4 1934713408
        %v766 = vunpack.c.0.s8 %v765
        %v767 = vperm.slane %v763, %v766
        %v768 = vrot.slane %v571, 4
        %v769 = vsel %vm401, %v768, %v451
        %v771 = vunpack.c.l.s4 1934713408
        %v772 = vunpack.c.0.s8 %v771
        %v773 = vperm.slane %v769, %v772
        %v774 = vrot.slane %v631, 4
        %v775 = vsel %vm401, %v774, %v511
        %v777 = vunpack.c.l.s4 1934713408
        %v778 = vunpack.c.0.s8 %v777
        %v779 = vperm.slane %v775, %v778
        %v780 = vrot.slane %v436, 4
        %v781 = vsel %vm401, 0, %v780
        %v782 = vsel %vm401, 0, %v756
        %v783 = vrot.slane %v782, 4
        %v784 = vsel %vm401, %v783, %v781
        %v786 = vunpack.c.l.s4 1934713408
        %v787 = vunpack.c.0.s8 %v786
        %v788 = vperm.slane %v784, %v787
        %v789 = vrot.slane %v496, 4
        %v790 = vsel %vm401, 0, %v789
        %v791 = vsel %vm401, 0, %v762
        %v792 = vrot.slane %v791, 4
        %v793 = vsel %vm401, %v792, %v790
        %v795 = vunpack.c.l.s4 1934713408
        %v796 = vunpack.c.0.s8 %v795
        %v797 = vperm.slane %v793, %v796
        %v798 = vrot.slane %v451, 4
        %v799 = vsel %vm401, 0, %v798
        %v800 = vsel %vm401, 0, %v768
        %v801 = vrot.slane %v800, 4
        %v802 = vsel %vm401, %v801, %v799
        %v804 = vunpack.c.l.s4 1934713408
        %v805 = vunpack.c.0.s8 %v804
        %v806 = vperm.slane %v802, %v805
        %v807 = vrot.slane %v511, 4
        %v808 = vsel %vm401, 0, %v807
        %v809 = vsel %vm401, 0, %v774
        %v810 = vrot.slane %v809, 4
        %v811 = vsel %vm401, %v810, %v808
        %v813 = vunpack.c.l.s4 1934713408
        %v814 = vunpack.c.0.s8 %v813
        %v815 = vperm.slane %v811, %v814
        %v816 = vrot.slane %v560, 4
        %v817 = vsel %vm401, %v816, %v440
        %v819 = vunpack.c.l.s4 1934713408
        %v820 = vunpack.c.0.s8 %v819
        %v821 = vperm.slane %v817, %v820
        %v822 = vrot.slane %v620, 4
        %v823 = vsel %vm401, %v822, %v500
        %v825 = vunpack.c.l.s4 1934713408
        %v826 = vunpack.c.0.s8 %v825
        %v827 = vperm.slane %v823, %v826
        %v828 = vrot.slane %v575, 4
        %v829 = vsel %vm401, %v828, %v455
        %v831 = vunpack.c.l.s4 1934713408
        %v832 = vunpack.c.0.s8 %v831
        %v833 = vperm.slane %v829, %v832
        %v834 = vrot.slane %v635, 4
        %v835 = vsel %vm401, %v834, %v515
        %v837 = vunpack.c.l.s4 1934713408
        %v838 = vunpack.c.0.s8 %v837
        %v839 = vperm.slane %v835, %v838
        %v840 = vrot.slane %v440, 4
        %v841 = vsel %vm401, 0, %v840
        %v842 = vsel %vm401, 0, %v816
        %v843 = vrot.slane %v842, 4
        %v844 = vsel %vm401, %v843, %v841
        %v846 = vunpack.c.l.s4 1934713408
        %v847 = vunpack.c.0.s8 %v846
        %v848 = vperm.slane %v844, %v847
        %v849 = vrot.slane %v500, 4
        %v850 = vsel %vm401, 0, %v849
        %v851 = vsel %vm401, 0, %v822
        %v852 = vrot.slane %v851, 4
        %v853 = vsel %vm401, %v852, %v850
        %v855 = vunpack.c.l.s4 1934713408
        %v856 = vunpack.c.0.s8 %v855
        %v857 = vperm.slane %v853, %v856
        %v858 = vrot.slane %v455, 4
        %v859 = vsel %vm401, 0, %v858
        %v860 = vsel %vm401, 0, %v828
        %v861 = vrot.slane %v860, 4
        %v862 = vsel %vm401, %v861, %v859
        %v864 = vunpack.c.l.s4 1934713408
        %v865 = vunpack.c.0.s8 %v864
        %v866 = vperm.slane %v862, %v865
        %v867 = vrot.slane %v515, 4
        %v868 = vsel %vm401, 0, %v867
        %v869 = vsel %vm401, 0, %v834
        %v870 = vrot.slane %v869, 4
        %v871 = vsel %vm401, %v870, %v868
        %v873 = vunpack.c.l.s4 1934713408
        %v874 = vunpack.c.0.s8 %v873
        %v875 = vperm.slane %v871, %v874
        %v878 = vpack.i.b16 %v647, %v641
        %v880 = vshrl.u32 %v641, 16
        %v881 = vshrl.u32 %v647, 16
        %v882 = vpack.i.b16 %v881, %v880
        %v886 = vpack.i.b16 %v659, %v653
        %v888 = vshrl.u32 %v653, 16
        %v889 = vshrl.u32 %v659, 16
        %v890 = vpack.i.b16 %v889, %v888
        %v894 = vpack.i.b16 %v677, %v668
        %v896 = vshrl.u32 %v668, 16
        %v897 = vshrl.u32 %v677, 16
        %v898 = vpack.i.b16 %v897, %v896
        %v902 = vpack.i.b16 %v695, %v686
        %v904 = vshrl.u32 %v686, 16
        %v905 = vshrl.u32 %v695, 16
        %v906 = vpack.i.b16 %v905, %v904
        %v910 = vpack.i.b16 %v707, %v701
        %v912 = vshrl.u32 %v701, 16
        %v913 = vshrl.u32 %v707, 16
        %v914 = vpack.i.b16 %v913, %v912
        %v918 = vpack.i.b16 %v719, %v713
        %v920 = vshrl.u32 %v713, 16
        %v921 = vshrl.u32 %v719, 16
        %v922 = vpack.i.b16 %v921, %v920
        %v926 = vpack.i.b16 %v737, %v728
        %v928 = vshrl.u32 %v728, 16
        %v929 = vshrl.u32 %v737, 16
        %v930 = vpack.i.b16 %v929, %v928
        %v934 = vpack.i.b16 %v755, %v746
        %v936 = vshrl.u32 %v746, 16
        %v937 = vshrl.u32 %v755, 16
        %v938 = vpack.i.b16 %v937, %v936
        %v942 = vpack.i.b16 %v767, %v761
        %v944 = vshrl.u32 %v761, 16
        %v945 = vshrl.u32 %v767, 16
        %v946 = vpack.i.b16 %v945, %v944
        %v950 = vpack.i.b16 %v779, %v773
        %v952 = vshrl.u32 %v773, 16
        %v953 = vshrl.u32 %v779, 16
        %v954 = vpack.i.b16 %v953, %v952
        %v958 = vpack.i.b16 %v797, %v788
        %v960 = vshrl.u32 %v788, 16
        %v961 = vshrl.u32 %v797, 16
        %v962 = vpack.i.b16 %v961, %v960
        %v966 = vpack.i.b16 %v815, %v806
        %v968 = vshrl.u32 %v806, 16
        %v969 = vshrl.u32 %v815, 16
        %v970 = vpack.i.b16 %v969, %v968
        %v974 = vpack.i.b16 %v827, %v821
        %v976 = vshrl.u32 %v821, 16
        %v977 = vshrl.u32 %v827, 16
        %v978 = vpack.i.b16 %v977, %v976
        %v982 = vpack.i.b16 %v839, %v833
        %v984 = vshrl.u32 %v833, 16
        %v985 = vshrl.u32 %v839, 16
        %v986 = vpack.i.b16 %v985, %v984
        %v990 = vpack.i.b16 %v857, %v848
        %v992 = vshrl.u32 %v848, 16
        %v993 = vshrl.u32 %v857, 16
        %v994 = vpack.i.b16 %v993, %v992
        %v998 = vpack.i.b16 %v875, %v866
        %v1000 = vshrl.u32 %v866, 16
        %v1001 = vshrl.u32 %v875, 16
        %v1002 = vpack.i.b16 %v1001, %v1000
        %v1004 = vrot.slane %v910, 4
        %v1005 = vsel %vm401, %v1004, %v878
        %v1007 = vunpack.c.l.s4 1983009808
        %v1008 = vunpack.c.0.s8 %v1007
        %v1009 = vperm.slane %v1005, %v1008
        %v1010 = vrot.slane %v926, 4
        %v1011 = vsel %vm401, %v1010, %v894
        %v1013 = vunpack.c.l.s4 1983009808
        %v1014 = vunpack.c.0.s8 %v1013
        %v1015 = vperm.slane %v1011, %v1014
        %v1016 = vrot.slane %v1015, 4
        %v1017 = vsel %vm401, %v1016, %v1009
        %v1019 = vunpack.c.l.s4 1934713408
        %v1020 = vunpack.c.0.s8 %v1019
        %v1021 = vperm.slane %v1017, %v1020
        %v1022 = vrot.slane %v1021, 4
        %v1023 = vsel %vm401, 0, %v1022
        %v1024 = vrot.slane %v918, 4
        %v1025 = vsel %vm401, %v1024, %v886
        %v1027 = vunpack.c.l.s4 1983009808
        %v1028 = vunpack.c.0.s8 %v1027
        %v1029 = vperm.slane %v1025, %v1028
        %v1030 = vrot.slane %v934, 4
        %v1031 = vsel %vm401, %v1030, %v902
        %v1033 = vunpack.c.l.s4 1983009808
        %v1034 = vunpack.c.0.s8 %v1033
        %v1035 = vperm.slane %v1031, %v1034
        %v1036 = vrot.slane %v1035, 4
        %v1037 = vsel %vm401, %v1036, %v1029
        %v1039 = vunpack.c.l.s4 1934713408
        %v1040 = vunpack.c.0.s8 %v1039
        %v1041 = vperm.slane %v1037, %v1040
        %v1042 = vrot.slane %v1041, 4
        %v1043 = vsel %vm401, 0, %v1042
        %v1044 = vrot.slane %v974, 4
        %v1045 = vsel %vm401, %v1044, %v942
        %v1047 = vunpack.c.l.s4 1983009808
        %v1048 = vunpack.c.0.s8 %v1047
        %v1049 = vperm.slane %v1045, %v1048
        %v1050 = vrot.slane %v990, 4
        %v1051 = vsel %vm401, %v1050, %v958
        %v1053 = vunpack.c.l.s4 1983009808
        %v1054 = vunpack.c.0.s8 %v1053
        %v1055 = vperm.slane %v1051, %v1054
        %v1056 = vrot.slane %v1055, 4
        %v1057 = vsel %vm401, %v1056, %v1049
        %v1059 = vunpack.c.l.s4 1934713408
        %v1060 = vunpack.c.0.s8 %v1059
        %v1061 = vperm.slane %v1057, %v1060
        %v1062 = vrot.slane %v1061, 4
        %v1063 = vsel %vm401, 0, %v1062
        %v1064 = vrot.slane %v982, 4
        %v1065 = vsel %vm401, %v1064, %v950
        %v1067 = vunpack.c.l.s4 1983009808
        %v1068 = vunpack.c.0.s8 %v1067
        %v1069 = vperm.slane %v1065, %v1068
        %v1070 = vrot.slane %v998, 4
        %v1071 = vsel %vm401, %v1070, %v966
        %v1073 = vunpack.c.l.s4 1983009808
        %v1074 = vunpack.c.0.s8 %v1073
        %v1075 = vperm.slane %v1071, %v1074
        %v1076 = vrot.slane %v1075, 4
        %v1077 = vsel %vm401, %v1076, %v1069
        %v1079 = vunpack.c.l.s4 1934713408
        %v1080 = vunpack.c.0.s8 %v1079
        %v1081 = vperm.slane %v1077, %v1080
        %v1082 = vrot.slane %v1081, 4
        %v1083 = vsel %vm401, 0, %v1082
        %v1084 = vrot.slane %v914, 4
        %v1085 = vsel %vm401, %v1084, %v882
        %v1087 = vunpack.c.l.s4 1983009808
        %v1088 = vunpack.c.0.s8 %v1087
        %v1089 = vperm.slane %v1085, %v1088
        %v1090 = vrot.slane %v930, 4
        %v1091 = vsel %vm401, %v1090, %v898
        %v1093 = vunpack.c.l.s4 1983009808
        %v1094 = vunpack.c.0.s8 %v1093
        %v1095 = vperm.slane %v1091, %v1094
        %v1096 = vrot.slane %v1095, 4
        %v1097 = vsel %vm401, %v1096, %v1089
        %v1099 = vunpack.c.l.s4 1934713408
        %v1100 = vunpack.c.0.s8 %v1099
        %v1101 = vperm.slane %v1097, %v1100
        %v1102 = vrot.slane %v1101, 4
        %v1103 = vsel %vm401, 0, %v1102
        %v1104 = vrot.slane %v922, 4
        %v1105 = vsel %vm401, %v1104, %v890
        %v1107 = vunpack.c.l.s4 1983009808
        %v1108 = vunpack.c.0.s8 %v1107
        %v1109 = vperm.slane %v1105, %v1108
        %v1110 = vrot.slane %v938, 4
        %v1111 = vsel %vm401, %v1110, %v906
        %v1113 = vunpack.c.l.s4 1983009808
        %v1114 = vunpack.c.0.s8 %v1113
        %v1115 = vperm.slane %v1111, %v1114
        %v1116 = vrot.slane %v1115, 4
        %v1117 = vsel %vm401, %v1116, %v1109
        %v1119 = vunpack.c.l.s4 1934713408
        %v1120 = vunpack.c.0.s8 %v1119
        %v1121 = vperm.slane %v1117, %v1120
        %v1122 = vrot.slane %v1121, 4
        %v1123 = vsel %vm401, 0, %v1122
        %v1124 = vrot.slane %v978, 4
        %v1125 = vsel %vm401, %v1124, %v946
        %v1127 = vunpack.c.l.s4 1983009808
        %v1128 = vunpack.c.0.s8 %v1127
        %v1129 = vperm.slane %v1125, %v1128
        %v1130 = vrot.slane %v994, 4
        %v1131 = vsel %vm401, %v1130, %v962
        %v1133 = vunpack.c.l.s4 1983009808
        %v1134 = vunpack.c.0.s8 %v1133
        %v1135 = vperm.slane %v1131, %v1134
        %v1136 = vrot.slane %v1135, 4
        %v1137 = vsel %vm401, %v1136, %v1129
        %v1139 = vunpack.c.l.s4 1934713408
        %v1140 = vunpack.c.0.s8 %v1139
        %v1141 = vperm.slane %v1137, %v1140
        %v1142 = vrot.slane %v1141, 4
        %v1143 = vsel %vm401, 0, %v1142
        %v1144 = vrot.slane %v986, 4
        %v1145 = vsel %vm401, %v1144, %v954
        %v1147 = vunpack.c.l.s4 1983009808
        %v1148 = vunpack.c.0.s8 %v1147
        %v1149 = vperm.slane %v1145, %v1148
        %v1150 = vrot.slane %v1002, 4
        %v1151 = vsel %vm401, %v1150, %v970
        %v1153 = vunpack.c.l.s4 1983009808
        %v1154 = vunpack.c.0.s8 %v1153
        %v1155 = vperm.slane %v1151, %v1154
        %v1156 = vrot.slane %v1155, 4
        %v1157 = vsel %vm401, %v1156, %v1149
        %v1159 = vunpack.c.l.s4 1934713408
        %v1160 = vunpack.c.0.s8 %v1159
        %v1161 = vperm.slane %v1157, %v1160
        %v1162 = vrot.slane %v1161, 4
        %v1163 = vsel %vm401, 0, %v1162
        %v1166 = vpack.i.b16 %v1041, %v1021
        %v1167 = vshrl.u32 %v1021, 16
        %v1168 = vshrl.u32 %v1041, 16
        %v1169 = vpack.i.b16 %v1168, %v1167
        %v1172 = vpack.i.b16 %v1043, %v1023
        %v1173 = vshrl.u32 %v1023, 16
        %v1174 = vshrl.u32 %v1043, 16
        %v1175 = vpack.i.b16 %v1174, %v1173
        %v1178 = vpack.i.b16 %v1081, %v1061
        %v1179 = vshrl.u32 %v1061, 16
        %v1180 = vshrl.u32 %v1081, 16
        %v1181 = vpack.i.b16 %v1180, %v1179
        %v1184 = vpack.i.b16 %v1083, %v1063
        %v1185 = vshrl.u32 %v1063, 16
        %v1186 = vshrl.u32 %v1083, 16
        %v1187 = vpack.i.b16 %v1186, %v1185
        %v1190 = vpack.i.b16 %v1121, %v1101
        %v1191 = vshrl.u32 %v1101, 16
        %v1192 = vshrl.u32 %v1121, 16
        %v1193 = vpack.i.b16 %v1192, %v1191
        %v1196 = vpack.i.b16 %v1123, %v1103
        %v1197 = vshrl.u32 %v1103, 16
        %v1198 = vshrl.u32 %v1123, 16
        %v1199 = vpack.i.b16 %v1198, %v1197
        %v1202 = vpack.i.b16 %v1161, %v1141
        %v1203 = vshrl.u32 %v1141, 16
        %v1204 = vshrl.u32 %v1161, 16
        %v1205 = vpack.i.b16 %v1204, %v1203
        %v1208 = vpack.i.b16 %v1163, %v1143
        %v1209 = vshrl.u32 %v1143, 16
        %v1210 = vshrl.u32 %v1163, 16
        %v1211 = vpack.i.b16 %v1210, %v1209
        %v1212 = vunpack.c.l.b16 %v1166
        %v1213 = vunpack.c.l.b16 %v1178
        %v1214 = vunpack.c.l.b16 %v1190
        %v1215 = vunpack.c.l.b16 %v1202
        %v1216 = vpack.c.b16 %v1213, %v1212
        %v1217 = vpack.c.b16 %v1215, %v1214
        %v1218 = vunpack.c.l.b16 %v1169
        %v1219 = vunpack.c.l.b16 %v1181
        %v1220 = vunpack.c.l.b16 %v1193
        %v1221 = vunpack.c.l.b16 %v1205
        %v1222 = vpack.c.b16 %v1219, %v1218
        %v1223 = vpack.c.b16 %v1221, %v1220
        %1224 = vrot.lane.b32.xlu0 %v1222, 9
        %v1225 = vpop.permute.xlu0 %1224
        %1226 = vrot.lane.b32.xlu0 %v1223, 9
        %v1227 = vpop.permute.xlu0 %1226
        %v1228 = vunpack.c.l.b16 %v1172
        %v1229 = vunpack.c.l.b16 %v1184
        %v1230 = vunpack.c.l.b16 %v1196
        %v1231 = vunpack.c.l.b16 %v1208
        %v1232 = vpack.c.b16 %v1229, %v1228
        %v1233 = vpack.c.b16 %v1231, %v1230
        %1234 = vrot.lane.b32.xlu0 %v1232, 18
        %v1235 = vpop.permute.xlu0 %1234
        %1236 = vrot.lane.b32.xlu0 %v1233, 18
        %v1237 = vpop.permute.xlu0 %1236
        %v1238 = vunpack.c.l.b16 %v1175
        %v1239 = vunpack.c.l.b16 %v1187
        %v1240 = vunpack.c.l.b16 %v1199
        %v1241 = vunpack.c.l.b16 %v1211
        %v1242 = vpack.c.b16 %v1239, %v1238
        %v1243 = vpack.c.b16 %v1241, %v1240
        %1244 = vrot.lane.b32.xlu0 %v1242, 27
        %v1245 = vpop.permute.xlu0 %1244
        %1246 = vrot.lane.b32.xlu0 %v1243, 27
        %v1247 = vpop.permute.xlu0 %1246
        %vm1248 = vcmask 72704
        %v1251 = vsel %vm1248, %v1216, %v1225
        %v1254 = vsel %vm1248, %v1217, %v1227
        %vm1255 = vcmask 146432
        %v1257 = vsel %vm1255, %v1251, %v1235
        %v1259 = vsel %vm1255, %v1254, %v1237
        %vm1260 = vcmask 220160
        %v1262 = vsel %vm1260, %v1257, %v1245
        %v1265 = vsel %vm1260, %v1259, %v1247
        %v1267 = vld [vmem:[%s2] sm:$0xf]
        %v1268 = vld [vmem:[%s2 + $0x4] sm:$0xf]
        %v1269 = vld [vmem:[%s2 + $0x8] sm:$0xf]
        %v1270 = vld [vmem:[%s2 + $0xc] sm:$0xf]
        %v1275 = vunpack.c.l.b16 %v1267
        %v1276 = vunpack.c.l.b16 %v1268
        %v1277 = vunpack.c.l.b16 %v1269
        %v1278 = vunpack.c.l.b16 %v1270
        %v1279 = vpack.c.b16 %v1276, %v1275
        %v1280 = vpack.c.b16 %v1278, %v1277
        %vm1281 = vcmask 261120
        %v1283 = vsel %vm1281, %v1279, 0
        %v1286 = vsel %vm1281, %v1280, 0
        %1288 = vmatpush.bf16.msra.mxu0 0
        %1289 = vmatpush.bf16.msra.mxu0 0
        %1290 = vmatpush.bf16.msra.mxu0 0
        %1291 = vmatpush.bf16.msra.mxu0 0
        %1292 = vmatpush.bf16.msra.mxu0 0
        %1293 = vmatpush.bf16.msra.mxu0 0
        %1294 = vmatpush.bf16.msra.mxu0 %v1265
        %1295 = vmatpush.bf16.msra.mxu0 %v1262
        %1296 = vmatmul.bf16.gmra.mxu0 %v1283
        %v1297 = vpop.f32.mrf.mxu0
        %v1298 = vadd.f32 0.0, %v1297
        %v1299 = vpop.f32.mrf.mxu0
        %v1300 = vadd.f32 0.0, %v1299
        %1301 = vmatmul.bf16.gmra.mxu0 %v1286
        %v1302 = vpop.f32.mrf.mxu0
        %v1303 = vadd.f32 0.0, %v1302
        %v1304 = vpop.f32.mrf.mxu0
        %v1305 = vadd.f32 0.0, %v1304
        %1306 = vdwg.mxu0
        %v1307 = vpack.c.bf16 %v1298, %v1298
        %v1308 = vpack.c.bf16 %v1300, %v1300
        %v1309 = vpack.c.bf16 %v1303, %v1303
        %v1310 = vpack.c.bf16 %v1305, %v1305
        %1315 = vrot.lane.b32.xlu0 %v1307, 119
        %v1316 = vpop.permute.xlu0 %1315
        %1317 = vrot.lane.b32.xlu0 %v1308, 119
        %v1318 = vpop.permute.xlu0 %1317
        %1319 = vrot.lane.b32.xlu0 %v1309, 119
        %v1320 = vpop.permute.xlu0 %1319
        %1321 = vrot.lane.b32.xlu0 %v1310, 119
        %v1322 = vpop.permute.xlu0 %1321
        %1323 = vrot.lane.b32.xlu0 %v1307, 110
        %v1324 = vpop.permute.xlu0 %1323
        %1325 = vrot.lane.b32.xlu0 %v1308, 110
        %v1326 = vpop.permute.xlu0 %1325
        %1327 = vrot.lane.b32.xlu0 %v1309, 110
        %v1328 = vpop.permute.xlu0 %1327
        %1329 = vrot.lane.b32.xlu0 %v1310, 110
        %v1330 = vpop.permute.xlu0 %1329
        %1331 = vrot.lane.b32.xlu0 %v1307, 101
        %v1332 = vpop.permute.xlu0 %1331
        %1333 = vrot.lane.b32.xlu0 %v1308, 101
        %v1334 = vpop.permute.xlu0 %1333
        %1335 = vrot.lane.b32.xlu0 %v1309, 101
        %v1336 = vpop.permute.xlu0 %1335
        %1337 = vrot.lane.b32.xlu0 %v1310, 101
        %v1338 = vpop.permute.xlu0 %1337
        %v1341 = vpack.i.b16 %v1316, %v1307
        %v1342 = vshrl.u32 %v1307, 16
        %v1343 = vshrl.u32 %v1316, 16
        %v1344 = vpack.i.b16 %v1343, %v1342
        %v1347 = vpack.i.b16 %v1332, %v1324
        %v1348 = vshrl.u32 %v1324, 16
        %v1349 = vshrl.u32 %v1332, 16
        %v1350 = vpack.i.b16 %v1349, %v1348
        %v1353 = vpack.i.b16 %v1318, %v1308
        %v1354 = vshrl.u32 %v1308, 16
        %v1355 = vshrl.u32 %v1318, 16
        %v1356 = vpack.i.b16 %v1355, %v1354
        %v1359 = vpack.i.b16 %v1334, %v1326
        %v1360 = vshrl.u32 %v1326, 16
        %v1361 = vshrl.u32 %v1334, 16
        %v1362 = vpack.i.b16 %v1361, %v1360
        %v1365 = vpack.i.b16 %v1320, %v1309
        %v1366 = vshrl.u32 %v1309, 16
        %v1367 = vshrl.u32 %v1320, 16
        %v1368 = vpack.i.b16 %v1367, %v1366
        %v1371 = vpack.i.b16 %v1336, %v1328
        %v1372 = vshrl.u32 %v1328, 16
        %v1373 = vshrl.u32 %v1336, 16
        %v1374 = vpack.i.b16 %v1373, %v1372
        %v1377 = vpack.i.b16 %v1322, %v1310
        %v1378 = vshrl.u32 %v1310, 16
        %v1379 = vshrl.u32 %v1322, 16
        %v1380 = vpack.i.b16 %v1379, %v1378
        %v1383 = vpack.i.b16 %v1338, %v1330
        %v1384 = vshrl.u32 %v1330, 16
        %v1385 = vshrl.u32 %v1338, 16
        %v1386 = vpack.i.b16 %v1385, %v1384
        %v1389 = vunpack.c.l.s4 1983009808
        %v1390 = vunpack.c.0.s8 %v1389
        %v1391 = vperm.slane %v1341, %v1390
        %v1394 = vunpack.c.l.s4 1983009808
        %v1395 = vunpack.c.0.s8 %v1394
        %v1396 = vperm.slane %v1347, %v1395
        %v1397 = vrot.slane %v1396, 4
        %v1398 = vsel %vm401, %v1397, %v1391
        %v1399 = vrot.slane %v1391, 4
        %v1400 = vsel %vm401, %v1396, %v1399
        %v1402 = vunpack.c.l.s4 1934713408
        %v1403 = vunpack.c.0.s8 %v1402
        %v1404 = vperm.slane %v1398, %v1403
        %v1406 = vunpack.c.l.s4 1934713408
        %v1407 = vunpack.c.0.s8 %v1406
        %v1408 = vperm.slane %v1400, %v1407
        %v1409 = vrot.slane %v1404, 4
        %v1410 = vsel %vm401, 0, %v1409
        %v1411 = vrot.slane %v1408, 4
        %v1412 = vsel %vm401, 0, %v1411
        %v1415 = vunpack.c.l.s4 1983009808
        %v1416 = vunpack.c.0.s8 %v1415
        %v1417 = vperm.slane %v1344, %v1416
        %v1420 = vunpack.c.l.s4 1983009808
        %v1421 = vunpack.c.0.s8 %v1420
        %v1422 = vperm.slane %v1350, %v1421
        %v1423 = vrot.slane %v1422, 4
        %v1424 = vsel %vm401, %v1423, %v1417
        %v1425 = vrot.slane %v1417, 4
        %v1426 = vsel %vm401, %v1422, %v1425
        %v1428 = vunpack.c.l.s4 1934713408
        %v1429 = vunpack.c.0.s8 %v1428
        %v1430 = vperm.slane %v1424, %v1429
        %v1432 = vunpack.c.l.s4 1934713408
        %v1433 = vunpack.c.0.s8 %v1432
        %v1434 = vperm.slane %v1426, %v1433
        %v1435 = vrot.slane %v1430, 4
        %v1436 = vsel %vm401, 0, %v1435
        %v1437 = vrot.slane %v1434, 4
        %v1438 = vsel %vm401, 0, %v1437
        %v1441 = vunpack.c.l.s4 1983009808
        %v1442 = vunpack.c.0.s8 %v1441
        %v1443 = vperm.slane %v1353, %v1442
        %v1446 = vunpack.c.l.s4 1983009808
        %v1447 = vunpack.c.0.s8 %v1446
        %v1448 = vperm.slane %v1359, %v1447
        %v1449 = vrot.slane %v1448, 4
        %v1450 = vsel %vm401, %v1449, %v1443
        %v1451 = vrot.slane %v1443, 4
        %v1452 = vsel %vm401, %v1448, %v1451
        %v1454 = vunpack.c.l.s4 1934713408
        %v1455 = vunpack.c.0.s8 %v1454
        %v1456 = vperm.slane %v1450, %v1455
        %v1458 = vunpack.c.l.s4 1934713408
        %v1459 = vunpack.c.0.s8 %v1458
        %v1460 = vperm.slane %v1452, %v1459
        %v1461 = vrot.slane %v1456, 4
        %v1462 = vsel %vm401, 0, %v1461
        %v1463 = vrot.slane %v1460, 4
        %v1464 = vsel %vm401, 0, %v1463
        %v1467 = vunpack.c.l.s4 1983009808
        %v1468 = vunpack.c.0.s8 %v1467
        %v1469 = vperm.slane %v1356, %v1468
        %v1472 = vunpack.c.l.s4 1983009808
        %v1473 = vunpack.c.0.s8 %v1472
        %v1474 = vperm.slane %v1362, %v1473
        %v1475 = vrot.slane %v1474, 4
        %v1476 = vsel %vm401, %v1475, %v1469
        %v1477 = vrot.slane %v1469, 4
        %v1478 = vsel %vm401, %v1474, %v1477
        %v1480 = vunpack.c.l.s4 1934713408
        %v1481 = vunpack.c.0.s8 %v1480
        %v1482 = vperm.slane %v1476, %v1481
        %v1484 = vunpack.c.l.s4 1934713408
        %v1485 = vunpack.c.0.s8 %v1484
        %v1486 = vperm.slane %v1478, %v1485
        %v1487 = vrot.slane %v1482, 4
        %v1488 = vsel %vm401, 0, %v1487
        %v1489 = vrot.slane %v1486, 4
        %v1490 = vsel %vm401, 0, %v1489
        %v1493 = vunpack.c.l.s4 1983009808
        %v1494 = vunpack.c.0.s8 %v1493
        %v1495 = vperm.slane %v1365, %v1494
        %v1498 = vunpack.c.l.s4 1983009808
        %v1499 = vunpack.c.0.s8 %v1498
        %v1500 = vperm.slane %v1371, %v1499
        %v1501 = vrot.slane %v1500, 4
        %v1502 = vsel %vm401, %v1501, %v1495
        %v1503 = vrot.slane %v1495, 4
        %v1504 = vsel %vm401, %v1500, %v1503
        %v1506 = vunpack.c.l.s4 1934713408
        %v1507 = vunpack.c.0.s8 %v1506
        %v1508 = vperm.slane %v1502, %v1507
        %v1510 = vunpack.c.l.s4 1934713408
        %v1511 = vunpack.c.0.s8 %v1510
        %v1512 = vperm.slane %v1504, %v1511
        %v1513 = vrot.slane %v1508, 4
        %v1514 = vsel %vm401, 0, %v1513
        %v1515 = vrot.slane %v1512, 4
        %v1516 = vsel %vm401, 0, %v1515
        %v1519 = vunpack.c.l.s4 1983009808
        %v1520 = vunpack.c.0.s8 %v1519
        %v1521 = vperm.slane %v1368, %v1520
        %v1524 = vunpack.c.l.s4 1983009808
        %v1525 = vunpack.c.0.s8 %v1524
        %v1526 = vperm.slane %v1374, %v1525
        %v1527 = vrot.slane %v1526, 4
        %v1528 = vsel %vm401, %v1527, %v1521
        %v1529 = vrot.slane %v1521, 4
        %v1530 = vsel %vm401, %v1526, %v1529
        %v1532 = vunpack.c.l.s4 1934713408
        %v1533 = vunpack.c.0.s8 %v1532
        %v1534 = vperm.slane %v1528, %v1533
        %v1536 = vunpack.c.l.s4 1934713408
        %v1537 = vunpack.c.0.s8 %v1536
        %v1538 = vperm.slane %v1530, %v1537
        %v1539 = vrot.slane %v1534, 4
        %v1540 = vsel %vm401, 0, %v1539
        %v1541 = vrot.slane %v1538, 4
        %v1542 = vsel %vm401, 0, %v1541
        %v1545 = vunpack.c.l.s4 1983009808
        %v1546 = vunpack.c.0.s8 %v1545
        %v1547 = vperm.slane %v1377, %v1546
        %v1550 = vunpack.c.l.s4 1983009808
        %v1551 = vunpack.c.0.s8 %v1550
        %v1552 = vperm.slane %v1383, %v1551
        %v1553 = vrot.slane %v1552, 4
        %v1554 = vsel %vm401, %v1553, %v1547
        %v1555 = vrot.slane %v1547, 4
        %v1556 = vsel %vm401, %v1552, %v1555
        %v1558 = vunpack.c.l.s4 1934713408
        %v1559 = vunpack.c.0.s8 %v1558
        %v1560 = vperm.slane %v1554, %v1559
        %v1562 = vunpack.c.l.s4 1934713408
        %v1563 = vunpack.c.0.s8 %v1562
        %v1564 = vperm.slane %v1556, %v1563
        %v1565 = vrot.slane %v1560, 4
        %v1566 = vsel %vm401, 0, %v1565
        %v1567 = vrot.slane %v1564, 4
        %v1568 = vsel %vm401, 0, %v1567
        %v1571 = vunpack.c.l.s4 1983009808
        %v1572 = vunpack.c.0.s8 %v1571
        %v1573 = vperm.slane %v1380, %v1572
        %v1576 = vunpack.c.l.s4 1983009808
        %v1577 = vunpack.c.0.s8 %v1576
        %v1578 = vperm.slane %v1386, %v1577
        %v1579 = vrot.slane %v1578, 4
        %v1580 = vsel %vm401, %v1579, %v1573
        %v1581 = vrot.slane %v1573, 4
        %v1582 = vsel %vm401, %v1578, %v1581
        %v1584 = vunpack.c.l.s4 1934713408
        %v1585 = vunpack.c.0.s8 %v1584
        %v1586 = vperm.slane %v1580, %v1585
        %v1588 = vunpack.c.l.s4 1934713408
        %v1589 = vunpack.c.0.s8 %v1588
        %v1590 = vperm.slane %v1582, %v1589
        %v1591 = vrot.slane %v1586, 4
        %v1592 = vsel %vm401, 0, %v1591
        %v1593 = vrot.slane %v1590, 4
        %v1594 = vsel %vm401, 0, %v1593
        %1595 = vxpose.xlu0.c.b16.start [1/8] %v1404, 128
        %1596 = vxpose.xlu0.c.b16.cont [2/8] 0, 128
        %1597 = vxpose.xlu0.c.b16.cont [3/8] 0, 128
        %1598 = vxpose.xlu0.c.b16.cont [4/8] 0, 128
        %1599 = vxpose.xlu0.c.b16.cont [5/8] 0, 128
        %1600 = vxpose.xlu0.c.b16.cont [6/8] 0, 128
        %1601 = vxpose.xlu0.c.b16.cont [7/8] 0, 128
        %1602 = vxpose.xlu0.c.b16.end [8/8] 0, 128
        %v1603 = vpop.trf.xlu0
        %v1604 = vpop.trf.xlu0
        %v1605 = vpop.trf.xlu0
        %v1606 = vpop.trf.xlu0
        %v1607 = vpop.trf.xlu0
        %v1608 = vpop.trf.xlu0
        %v1609 = vpop.trf.xlu0
        %v1610 = vpop.trf.xlu0
        %1611 = vxpose.xlu0.c.b16.start [1/8] %v1430, 128
        %1612 = vxpose.xlu0.c.b16.cont [2/8] 0, 128
        %1613 = vxpose.xlu0.c.b16.cont [3/8] 0, 128
        %1614 = vxpose.xlu0.c.b16.cont [4/8] 0, 128
        %1615 = vxpose.xlu0.c.b16.cont [5/8] 0, 128
        %1616 = vxpose.xlu0.c.b16.cont [6/8] 0, 128
        %1617 = vxpose.xlu0.c.b16.cont [7/8] 0, 128
        %1618 = vxpose.xlu0.c.b16.end [8/8] 0, 128
        %v1619 = vpop.trf.xlu0
        %v1620 = vpop.trf.xlu0
        %v1621 = vpop.trf.xlu0
        %v1622 = vpop.trf.xlu0
        %v1623 = vpop.trf.xlu0
        %v1624 = vpop.trf.xlu0
        %v1625 = vpop.trf.xlu0
        %v1626 = vpop.trf.xlu0
        %1627 = vxpose.xlu0.c.b16.start [1/8] %v1410, 128
        %1628 = vxpose.xlu0.c.b16.cont [2/8] 0, 128
        %1629 = vxpose.xlu0.c.b16.cont [3/8] 0, 128
        %1630 = vxpose.xlu0.c.b16.cont [4/8] 0, 128
        %1631 = vxpose.xlu0.c.b16.cont [5/8] 0, 128
        %1632 = vxpose.xlu0.c.b16.cont [6/8] 0, 128
        %1633 = vxpose.xlu0.c.b16.cont [7/8] 0, 128
        %1634 = vxpose.xlu0.c.b16.end [8/8] 0, 128
        %v1635 = vpop.trf.xlu0
        %v1636 = vpop.trf.xlu0
        %v1637 = vpop.trf.xlu0
        %v1638 = vpop.trf.xlu0
        %v1639 = vpop.trf.xlu0
        %v1640 = vpop.trf.xlu0
        %v1641 = vpop.trf.xlu0
        %v1642 = vpop.trf.xlu0
        %1643 = vxpose.xlu0.c.b16.start [1/8] %v1436, 128
        %1644 = vxpose.xlu0.c.b16.cont [2/8] 0, 128
        %1645 = vxpose.xlu0.c.b16.cont [3/8] 0, 128
        %1646 = vxpose.xlu0.c.b16.cont [4/8] 0, 128
        %1647 = vxpose.xlu0.c.b16.cont [5/8] 0, 128
        %1648 = vxpose.xlu0.c.b16.cont [6/8] 0, 128
        %1649 = vxpose.xlu0.c.b16.cont [7/8] 0, 128
        %1650 = vxpose.xlu0.c.b16.end [8/8] 0, 128
        %v1651 = vpop.trf.xlu0
        %v1652 = vpop.trf.xlu0
        %v1653 = vpop.trf.xlu0
        %v1654 = vpop.trf.xlu0
        %v1655 = vpop.trf.xlu0
        %v1656 = vpop.trf.xlu0
        %v1657 = vpop.trf.xlu0
        %v1658 = vpop.trf.xlu0
        %1659 = vxpose.xlu0.c.b16.start [1/8] %v1408, 128
        %1660 = vxpose.xlu0.c.b16.cont [2/8] 0, 128
        %1661 = vxpose.xlu0.c.b16.cont [3/8] 0, 128
        %1662 = vxpose.xlu0.c.b16.cont [4/8] 0, 128
        %1663 = vxpose.xlu0.c.b16.cont [5/8] 0, 128
        %1664 = vxpose.xlu0.c.b16.cont [6/8] 0, 128
        %1665 = vxpose.xlu0.c.b16.cont [7/8] 0, 128
        %1666 = vxpose.xlu0.c.b16.end [8/8] 0, 128
        %v1667 = vpop.trf.xlu0
        %v1668 = vpop.trf.xlu0
        %v1669 = vpop.trf.xlu0
        %v1670 = vpop.trf.xlu0
        %v1671 = vpop.trf.xlu0
        %v1672 = vpop.trf.xlu0
        %v1673 = vpop.trf.xlu0
        %v1674 = vpop.trf.xlu0
        %1675 = vxpose.xlu0.c.b16.start [1/8] %v1434, 128
        %1676 = vxpose.xlu0.c.b16.cont [2/8] 0, 128
        %1677 = vxpose.xlu0.c.b16.cont [3/8] 0, 128
        %1678 = vxpose.xlu0.c.b16.cont [4/8] 0, 128
        %1679 = vxpose.xlu0.c.b16.cont [5/8] 0, 128
        %1680 = vxpose.xlu0.c.b16.cont [6/8] 0, 128
        %1681 = vxpose.xlu0.c.b16.cont [7/8] 0, 128
        %1682 = vxpose.xlu0.c.b16.end [8/8] 0, 128
        %v1683 = vpop.trf.xlu0
        %v1684 = vpop.trf.xlu0
        %v1685 = vpop.trf.xlu0
        %v1686 = vpop.trf.xlu0
        %v1687 = vpop.trf.xlu0
        %v1688 = vpop.trf.xlu0
        %v1689 = vpop.trf.xlu0
        %v1690 = vpop.trf.xlu0
        %1691 = vxpose.xlu0.c.b16.start [1/8] %v1412, 128
        %1692 = vxpose.xlu0.c.b16.cont [2/8] 0, 128
        %1693 = vxpose.xlu0.c.b16.cont [3/8] 0, 128
        %1694 = vxpose.xlu0.c.b16.cont [4/8] 0, 128
        %1695 = vxpose.xlu0.c.b16.cont [5/8] 0, 128
        %1696 = vxpose.xlu0.c.b16.cont [6/8] 0, 128
        %1697 = vxpose.xlu0.c.b16.cont [7/8] 0, 128
        %1698 = vxpose.xlu0.c.b16.end [8/8] 0, 128
        %v1699 = vpop.trf.xlu0
        %v1700 = vpop.trf.xlu0
        %v1701 = vpop.trf.xlu0
        %v1702 = vpop.trf.xlu0
        %v1703 = vpop.trf.xlu0
        %v1704 = vpop.trf.xlu0
        %v1705 = vpop.trf.xlu0
        %v1706 = vpop.trf.xlu0
        %1707 = vxpose.xlu0.c.b16.start [1/8] %v1438, 128
        %1708 = vxpose.xlu0.c.b16.cont [2/8] 0, 128
        %1709 = vxpose.xlu0.c.b16.cont [3/8] 0, 128
        %1710 = vxpose.xlu0.c.b16.cont [4/8] 0, 128
        %1711 = vxpose.xlu0.c.b16.cont [5/8] 0, 128
        %1712 = vxpose.xlu0.c.b16.cont [6/8] 0, 128
        %1713 = vxpose.xlu0.c.b16.cont [7/8] 0, 128
        %1714 = vxpose.xlu0.c.b16.end [8/8] 0, 128
        %v1715 = vpop.trf.xlu0
        %v1716 = vpop.trf.xlu0
        %v1717 = vpop.trf.xlu0
        %v1718 = vpop.trf.xlu0
        %v1719 = vpop.trf.xlu0
        %v1720 = vpop.trf.xlu0
        %v1721 = vpop.trf.xlu0
        %v1722 = vpop.trf.xlu0
        %1723 = vxpose.xlu0.c.b16.start [1/8] %v1456, 128
        %1724 = vxpose.xlu0.c.b16.cont [2/8] 0, 128
        %1725 = vxpose.xlu0.c.b16.cont [3/8] 0, 128
        %1726 = vxpose.xlu0.c.b16.cont [4/8] 0, 128
        %1727 = vxpose.xlu0.c.b16.cont [5/8] 0, 128
        %1728 = vxpose.xlu0.c.b16.cont [6/8] 0, 128
        %1729 = vxpose.xlu0.c.b16.cont [7/8] 0, 128
        %1730 = vxpose.xlu0.c.b16.end [8/8] 0, 128
        %v1731 = vpop.trf.xlu0
        %v1732 = vpop.trf.xlu0
        %v1733 = vpop.trf.xlu0
        %v1734 = vpop.trf.xlu0
        %v1735 = vpop.trf.xlu0
        %v1736 = vpop.trf.xlu0
        %v1737 = vpop.trf.xlu0
        %v1738 = vpop.trf.xlu0
        %1739 = vxpose.xlu0.c.b16.start [1/8] %v1482, 128
        %1740 = vxpose.xlu0.c.b16.cont [2/8] 0, 128
        %1741 = vxpose.xlu0.c.b16.cont [3/8] 0, 128
        %1742 = vxpose.xlu0.c.b16.cont [4/8] 0, 128
        %1743 = vxpose.xlu0.c.b16.cont [5/8] 0, 128
        %1744 = vxpose.xlu0.c.b16.cont [6/8] 0, 128
        %1745 = vxpose.xlu0.c.b16.cont [7/8] 0, 128
        %1746 = vxpose.xlu0.c.b16.end [8/8] 0, 128
        %v1747 = vpop.trf.xlu0
        %v1748 = vpop.trf.xlu0
        %v1749 = vpop.trf.xlu0
        %v1750 = vpop.trf.xlu0
        %v1751 = vpop.trf.xlu0
        %v1752 = vpop.trf.xlu0
        %v1753 = vpop.trf.xlu0
        %v1754 = vpop.trf.xlu0
        %1755 = vxpose.xlu0.c.b16.start [1/8] %v1462, 128
        %1756 = vxpose.xlu0.c.b16.cont [2/8] 0, 128
        %1757 = vxpose.xlu0.c.b16.cont [3/8] 0, 128
        %1758 = vxpose.xlu0.c.b16.cont [4/8] 0, 128
        %1759 = vxpose.xlu0.c.b16.cont [5/8] 0, 128
        %1760 = vxpose.xlu0.c.b16.cont [6/8] 0, 128
        %1761 = vxpose.xlu0.c.b16.cont [7/8] 0, 128
        %1762 = vxpose.xlu0.c.b16.end [8/8] 0, 128
        %v1763 = vpop.trf.xlu0
        %v1764 = vpop.trf.xlu0
        %v1765 = vpop.trf.xlu0
        %v1766 = vpop.trf.xlu0
        %v1767 = vpop.trf.xlu0
        %v1768 = vpop.trf.xlu0
        %v1769 = vpop.trf.xlu0
        %v1770 = vpop.trf.xlu0
        %1771 = vxpose.xlu0.c.b16.start [1/8] %v1488, 128
        %1772 = vxpose.xlu0.c.b16.cont [2/8] 0, 128
        %1773 = vxpose.xlu0.c.b16.cont [3/8] 0, 128
        %1774 = vxpose.xlu0.c.b16.cont [4/8] 0, 128
        %1775 = vxpose.xlu0.c.b16.cont [5/8] 0, 128
        %1776 = vxpose.xlu0.c.b16.cont [6/8] 0, 128
        %1777 = vxpose.xlu0.c.b16.cont [7/8] 0, 128
        %1778 = vxpose.xlu0.c.b16.end [8/8] 0, 128
        %v1779 = vpop.trf.xlu0
        %v1780 = vpop.trf.xlu0
        %v1781 = vpop.trf.xlu0
        %v1782 = vpop.trf.xlu0
        %v1783 = vpop.trf.xlu0
        %v1784 = vpop.trf.xlu0
        %v1785 = vpop.trf.xlu0
        %v1786 = vpop.trf.xlu0
        %1787 = vxpose.xlu0.c.b16.start [1/8] %v1460, 128
        %1788 = vxpose.xlu0.c.b16.cont [2/8] 0, 128
        %1789 = vxpose.xlu0.c.b16.cont [3/8] 0, 128
        %1790 = vxpose.xlu0.c.b16.cont [4/8] 0, 128
        %1791 = vxpose.xlu0.c.b16.cont [5/8] 0, 128
        %1792 = vxpose.xlu0.c.b16.cont [6/8] 0, 128
        %1793 = vxpose.xlu0.c.b16.cont [7/8] 0, 128
        %1794 = vxpose.xlu0.c.b16.end [8/8] 0, 128
        %v1795 = vpop.trf.xlu0
        %v1796 = vpop.trf.xlu0
        %v1797 = vpop.trf.xlu0
        %v1798 = vpop.trf.xlu0
        %v1799 = vpop.trf.xlu0
        %v1800 = vpop.trf.xlu0
        %v1801 = vpop.trf.xlu0
        %v1802 = vpop.trf.xlu0
        %1803 = vxpose.xlu0.c.b16.start [1/8] %v1486, 128
        %1804 = vxpose.xlu0.c.b16.cont [2/8] 0, 128
        %1805 = vxpose.xlu0.c.b16.cont [3/8] 0, 128
        %1806 = vxpose.xlu0.c.b16.cont [4/8] 0, 128
        %1807 = vxpose.xlu0.c.b16.cont [5/8] 0, 128
        %1808 = vxpose.xlu0.c.b16.cont [6/8] 0, 128
        %1809 = vxpose.xlu0.c.b16.cont [7/8] 0, 128
        %1810 = vxpose.xlu0.c.b16.end [8/8] 0, 128
        %v1811 = vpop.trf.xlu0
        %v1812 = vpop.trf.xlu0
        %v1813 = vpop.trf.xlu0
        %v1814 = vpop.trf.xlu0
        %v1815 = vpop.trf.xlu0
        %v1816 = vpop.trf.xlu0
        %v1817 = vpop.trf.xlu0
        %v1818 = vpop.trf.xlu0
        %1819 = vxpose.xlu0.c.b16.start [1/8] %v1464, 128
        %1820 = vxpose.xlu0.c.b16.cont [2/8] 0, 128
        %1821 = vxpose.xlu0.c.b16.cont [3/8] 0, 128
        %1822 = vxpose.xlu0.c.b16.cont [4/8] 0, 128
        %1823 = vxpose.xlu0.c.b16.cont [5/8] 0, 128
        %1824 = vxpose.xlu0.c.b16.cont [6/8] 0, 128
        %1825 = vxpose.xlu0.c.b16.cont [7/8] 0, 128
        %1826 = vxpose.xlu0.c.b16.end [8/8] 0, 128
        %v1827 = vpop.trf.xlu0
        %v1828 = vpop.trf.xlu0
        %v1829 = vpop.trf.xlu0
        %v1830 = vpop.trf.xlu0
        %v1831 = vpop.trf.xlu0
        %v1832 = vpop.trf.xlu0
        %v1833 = vpop.trf.xlu0
        %v1834 = vpop.trf.xlu0
        %1835 = vxpose.xlu0.c.b16.start [1/8] %v1490, 128
        %1836 = vxpose.xlu0.c.b16.cont [2/8] 0, 128
        %1837 = vxpose.xlu0.c.b16.cont [3/8] 0, 128
        %1838 = vxpose.xlu0.c.b16.cont [4/8] 0, 128
        %1839 = vxpose.xlu0.c.b16.cont [5/8] 0, 128
        %1840 = vxpose.xlu0.c.b16.cont [6/8] 0, 128
        %1841 = vxpose.xlu0.c.b16.cont [7/8] 0, 128
        %1842 = vxpose.xlu0.c.b16.end [8/8] 0, 128
        %v1843 = vpop.trf.xlu0
        %v1844 = vpop.trf.xlu0
        %v1845 = vpop.trf.xlu0
        %v1846 = vpop.trf.xlu0
        %v1847 = vpop.trf.xlu0
        %v1848 = vpop.trf.xlu0
        %v1849 = vpop.trf.xlu0
        %v1850 = vpop.trf.xlu0
        %1851 = vxpose.xlu0.c.b16.start [1/8] %v1508, 128
        %1852 = vxpose.xlu0.c.b16.cont [2/8] 0, 128
        %1853 = vxpose.xlu0.c.b16.cont [3/8] 0, 128
        %1854 = vxpose.xlu0.c.b16.cont [4/8] 0, 128
        %1855 = vxpose.xlu0.c.b16.cont [5/8] 0, 128
        %1856 = vxpose.xlu0.c.b16.cont [6/8] 0, 128
        %1857 = vxpose.xlu0.c.b16.cont [7/8] 0, 128
        %1858 = vxpose.xlu0.c.b16.end [8/8] 0, 128
        %v1859 = vpop.trf.xlu0
        %v1860 = vpop.trf.xlu0
        %v1861 = vpop.trf.xlu0
        %v1862 = vpop.trf.xlu0
        %v1863 = vpop.trf.xlu0
        %v1864 = vpop.trf.xlu0
        %v1865 = vpop.trf.xlu0
        %v1866 = vpop.trf.xlu0
        %1867 = vxpose.xlu0.c.b16.start [1/8] %v1534, 128
        %1868 = vxpose.xlu0.c.b16.cont [2/8] 0, 128
        %1869 = vxpose.xlu0.c.b16.cont [3/8] 0, 128
        %1870 = vxpose.xlu0.c.b16.cont [4/8] 0, 128
        %1871 = vxpose.xlu0.c.b16.cont [5/8] 0, 128
        %1872 = vxpose.xlu0.c.b16.cont [6/8] 0, 128
        %1873 = vxpose.xlu0.c.b16.cont [7/8] 0, 128
        %1874 = vxpose.xlu0.c.b16.end [8/8] 0, 128
        %v1875 = vpop.trf.xlu0
        %v1876 = vpop.trf.xlu0
        %v1877 = vpop.trf.xlu0
        %v1878 = vpop.trf.xlu0
        %v1879 = vpop.trf.xlu0
        %v1880 = vpop.trf.xlu0
        %v1881 = vpop.trf.xlu0
        %v1882 = vpop.trf.xlu0
        %1883 = vxpose.xlu0.c.b16.start [1/8] %v1514, 128
        %1884 = vxpose.xlu0.c.b16.cont [2/8] 0, 128
        %1885 = vxpose.xlu0.c.b16.cont [3/8] 0, 128
        %1886 = vxpose.xlu0.c.b16.cont [4/8] 0, 128
        %1887 = vxpose.xlu0.c.b16.cont [5/8] 0, 128
        %1888 = vxpose.xlu0.c.b16.cont [6/8] 0, 128
        %1889 = vxpose.xlu0.c.b16.cont [7/8] 0, 128
        %1890 = vxpose.xlu0.c.b16.end [8/8] 0, 128
        %v1891 = vpop.trf.xlu0
        %v1892 = vpop.trf.xlu0
        %v1893 = vpop.trf.xlu0
        %v1894 = vpop.trf.xlu0
        %v1895 = vpop.trf.xlu0
        %v1896 = vpop.trf.xlu0
        %v1897 = vpop.trf.xlu0
        %v1898 = vpop.trf.xlu0
        %1899 = vxpose.xlu0.c.b16.start [1/8] %v1540, 128
        %1900 = vxpose.xlu0.c.b16.cont [2/8] 0, 128
        %1901 = vxpose.xlu0.c.b16.cont [3/8] 0, 128
        %1902 = vxpose.xlu0.c.b16.cont [4/8] 0, 128
        %1903 = vxpose.xlu0.c.b16.cont [5/8] 0, 128
        %1904 = vxpose.xlu0.c.b16.cont [6/8] 0, 128
        %1905 = vxpose.xlu0.c.b16.cont [7/8] 0, 128
        %1906 = vxpose.xlu0.c.b16.end [8/8] 0, 128
        %v1907 = vpop.trf.xlu0
        %v1908 = vpop.trf.xlu0
        %v1909 = vpop.trf.xlu0
        %v1910 = vpop.trf.xlu0
        %v1911 = vpop.trf.xlu0
        %v1912 = vpop.trf.xlu0
        %v1913 = vpop.trf.xlu0
        %v1914 = vpop.trf.xlu0
        %1915 = vxpose.xlu0.c.b16.start [1/8] %v1512, 128
        %1916 = vxpose.xlu0.c.b16.cont [2/8] 0, 128
        %1917 = vxpose.xlu0.c.b16.cont [3/8] 0, 128
        %1918 = vxpose.xlu0.c.b16.cont [4/8] 0, 128
        %1919 = vxpose.xlu0.c.b16.cont [5/8] 0, 128
        %1920 = vxpose.xlu0.c.b16.cont [6/8] 0, 128
        %1921 = vxpose.xlu0.c.b16.cont [7/8] 0, 128
        %1922 = vxpose.xlu0.c.b16.end [8/8] 0, 128
        %v1923 = vpop.trf.xlu0
        %v1924 = vpop.trf.xlu0
        %v1925 = vpop.trf.xlu0
        %v1926 = vpop.trf.xlu0
        %v1927 = vpop.trf.xlu0
        %v1928 = vpop.trf.xlu0
        %v1929 = vpop.trf.xlu0
        %v1930 = vpop.trf.xlu0
        %1931 = vxpose.xlu0.c.b16.start [1/8] %v1538, 128
        %1932 = vxpose.xlu0.c.b16.cont [2/8] 0, 128
        %1933 = vxpose.xlu0.c.b16.cont [3/8] 0, 128
        %1934 = vxpose.xlu0.c.b16.cont [4/8] 0, 128
        %1935 = vxpose.xlu0.c.b16.cont [5/8] 0, 128
        %1936 = vxpose.xlu0.c.b16.cont [6/8] 0, 128
        %1937 = vxpose.xlu0.c.b16.cont [7/8] 0, 128
        %1938 = vxpose.xlu0.c.b16.end [8/8] 0, 128
        %v1939 = vpop.trf.xlu0
        %v1940 = vpop.trf.xlu0
        %v1941 = vpop.trf.xlu0
        %v1942 = vpop.trf.xlu0
        %v1943 = vpop.trf.xlu0
        %v1944 = vpop.trf.xlu0
        %v1945 = vpop.trf.xlu0
        %v1946 = vpop.trf.xlu0
        %1947 = vxpose.xlu0.c.b16.start [1/8] %v1516, 128
        %1948 = vxpose.xlu0.c.b16.cont [2/8] 0, 128
        %1949 = vxpose.xlu0.c.b16.cont [3/8] 0, 128
        %1950 = vxpose.xlu0.c.b16.cont [4/8] 0, 128
        %1951 = vxpose.xlu0.c.b16.cont [5/8] 0, 128
        %1952 = vxpose.xlu0.c.b16.cont [6/8] 0, 128
        %1953 = vxpose.xlu0.c.b16.cont [7/8] 0, 128
        %1954 = vxpose.xlu0.c.b16.end [8/8] 0, 128
        %v1955 = vpop.trf.xlu0
        %v1956 = vpop.trf.xlu0
        %v1957 = vpop.trf.xlu0
        %v1958 = vpop.trf.xlu0
        %v1959 = vpop.trf.xlu0
        %v1960 = vpop.trf.xlu0
        %v1961 = vpop.trf.xlu0
        %v1962 = vpop.trf.xlu0
        %1963 = vxpose.xlu0.c.b16.start [1/8] %v1542, 128
        %1964 = vxpose.xlu0.c.b16.cont [2/8] 0, 128
        %1965 = vxpose.xlu0.c.b16.cont [3/8] 0, 128
        %1966 = vxpose.xlu0.c.b16.cont [4/8] 0, 128
        %1967 = vxpose.xlu0.c.b16.cont [5/8] 0, 128
        %1968 = vxpose.xlu0.c.b16.cont [6/8] 0, 128
        %1969 = vxpose.xlu0.c.b16.cont [7/8] 0, 128
        %1970 = vxpose.xlu0.c.b16.end [8/8] 0, 128
        %v1971 = vpop.trf.xlu0
        %v1972 = vpop.trf.xlu0
        %v1973 = vpop.trf.xlu0
        %v1974 = vpop.trf.xlu0
        %v1975 = vpop.trf.xlu0
        %v1976 = vpop.trf.xlu0
        %v1977 = vpop.trf.xlu0
        %v1978 = vpop.trf.xlu0
        %1979 = vxpose.xlu0.c.b16.start [1/8] %v1560, 128
        %1980 = vxpose.xlu0.c.b16.cont [2/8] 0, 128
        %1981 = vxpose.xlu0.c.b16.cont [3/8] 0, 128
        %1982 = vxpose.xlu0.c.b16.cont [4/8] 0, 128
        %1983 = vxpose.xlu0.c.b16.cont [5/8] 0, 128
        %1984 = vxpose.xlu0.c.b16.cont [6/8] 0, 128
        %1985 = vxpose.xlu0.c.b16.cont [7/8] 0, 128
        %1986 = vxpose.xlu0.c.b16.end [8/8] 0, 128
        %v1987 = vpop.trf.xlu0
        %v1988 = vpop.trf.xlu0
        %v1989 = vpop.trf.xlu0
        %v1990 = vpop.trf.xlu0
        %v1991 = vpop.trf.xlu0
        %v1992 = vpop.trf.xlu0
        %v1993 = vpop.trf.xlu0
        %v1994 = vpop.trf.xlu0
        %1995 = vxpose.xlu0.c.b16.start [1/8] %v1586, 128
        %1996 = vxpose.xlu0.c.b16.cont [2/8] 0, 128
        %1997 = vxpose.xlu0.c.b16.cont [3/8] 0, 128
        %1998 = vxpose.xlu0.c.b16.cont [4/8] 0, 128
        %1999 = vxpose.xlu0.c.b16.cont [5/8] 0, 128
        %2000 = vxpose.xlu0.c.b16.cont [6/8] 0, 128
        %2001 = vxpose.xlu0.c.b16.cont [7/8] 0, 128
        %2002 = vxpose.xlu0.c.b16.end [8/8] 0, 128
        %v2003 = vpop.trf.xlu0
        %v2004 = vpop.trf.xlu0
        %v2005 = vpop.trf.xlu0
        %v2006 = vpop.trf.xlu0
        %v2007 = vpop.trf.xlu0
        %v2008 = vpop.trf.xlu0
        %v2009 = vpop.trf.xlu0
        %v2010 = vpop.trf.xlu0
        %2011 = vxpose.xlu0.c.b16.start [1/8] %v1566, 128
        %2012 = vxpose.xlu0.c.b16.cont [2/8] 0, 128
        %2013 = vxpose.xlu0.c.b16.cont [3/8] 0, 128
        %2014 = vxpose.xlu0.c.b16.cont [4/8] 0, 128
        %2015 = vxpose.xlu0.c.b16.cont [5/8] 0, 128
        %2016 = vxpose.xlu0.c.b16.cont [6/8] 0, 128
        %2017 = vxpose.xlu0.c.b16.cont [7/8] 0, 128
        %2018 = vxpose.xlu0.c.b16.end [8/8] 0, 128
        %v2019 = vpop.trf.xlu0
        %v2020 = vpop.trf.xlu0
        %v2021 = vpop.trf.xlu0
        %v2022 = vpop.trf.xlu0
        %v2023 = vpop.trf.xlu0
        %v2024 = vpop.trf.xlu0
        %v2025 = vpop.trf.xlu0
        %v2026 = vpop.trf.xlu0
        %2027 = vxpose.xlu0.c.b16.start [1/8] %v1592, 128
        %2028 = vxpose.xlu0.c.b16.cont [2/8] 0, 128
        %2029 = vxpose.xlu0.c.b16.cont [3/8] 0, 128
        %2030 = vxpose.xlu0.c.b16.cont [4/8] 0, 128
        %2031 = vxpose.xlu0.c.b16.cont [5/8] 0, 128
        %2032 = vxpose.xlu0.c.b16.cont [6/8] 0, 128
        %2033 = vxpose.xlu0.c.b16.cont [7/8] 0, 128
        %2034 = vxpose.xlu0.c.b16.end [8/8] 0, 128
        %v2035 = vpop.trf.xlu0
        %v2036 = vpop.trf.xlu0
        %v2037 = vpop.trf.xlu0
        %v2038 = vpop.trf.xlu0
        %v2039 = vpop.trf.xlu0
        %v2040 = vpop.trf.xlu0
        %v2041 = vpop.trf.xlu0
        %v2042 = vpop.trf.xlu0
        %2043 = vxpose.xlu0.c.b16.start [1/8] %v1564, 128
        %2044 = vxpose.xlu0.c.b16.cont [2/8] 0, 128
        %2045 = vxpose.xlu0.c.b16.cont [3/8] 0, 128
        %2046 = vxpose.xlu0.c.b16.cont [4/8] 0, 128
        %2047 = vxpose.xlu0.c.b16.cont [5/8] 0, 128
        %2048 = vxpose.xlu0.c.b16.cont [6/8] 0, 128
        %2049 = vxpose.xlu0.c.b16.cont [7/8] 0, 128
        %2050 = vxpose.xlu0.c.b16.end [8/8] 0, 128
        %v2051 = vpop.trf.xlu0
        %v2052 = vpop.trf.xlu0
        %v2053 = vpop.trf.xlu0
        %v2054 = vpop.trf.xlu0
        %v2055 = vpop.trf.xlu0
        %v2056 = vpop.trf.xlu0
        %v2057 = vpop.trf.xlu0
        %v2058 = vpop.trf.xlu0
        %2059 = vxpose.xlu0.c.b16.start [1/8] %v1590, 128
        %2060 = vxpose.xlu0.c.b16.cont [2/8] 0, 128
        %2061 = vxpose.xlu0.c.b16.cont [3/8] 0, 128
        %2062 = vxpose.xlu0.c.b16.cont [4/8] 0, 128
        %2063 = vxpose.xlu0.c.b16.cont [5/8] 0, 128
        %2064 = vxpose.xlu0.c.b16.cont [6/8] 0, 128
        %2065 = vxpose.xlu0.c.b16.cont [7/8] 0, 128
        %2066 = vxpose.xlu0.c.b16.end [8/8] 0, 128
        %v2067 = vpop.trf.xlu0
        %v2068 = vpop.trf.xlu0
        %v2069 = vpop.trf.xlu0
        %v2070 = vpop.trf.xlu0
        %v2071 = vpop.trf.xlu0
        %v2072 = vpop.trf.xlu0
        %v2073 = vpop.trf.xlu0
        %v2074 = vpop.trf.xlu0
        %2075 = vxpose.xlu0.c.b16.start [1/8] %v1568, 128
        %2076 = vxpose.xlu0.c.b16.cont [2/8] 0, 128
        %2077 = vxpose.xlu0.c.b16.cont [3/8] 0, 128
        %2078 = vxpose.xlu0.c.b16.cont [4/8] 0, 128
        %2079 = vxpose.xlu0.c.b16.cont [5/8] 0, 128
        %2080 = vxpose.xlu0.c.b16.cont [6/8] 0, 128
        %2081 = vxpose.xlu0.c.b16.cont [7/8] 0, 128
        %2082 = vxpose.xlu0.c.b16.end [8/8] 0, 128
        %v2083 = vpop.trf.xlu0
        %v2084 = vpop.trf.xlu0
        %v2085 = vpop.trf.xlu0
        %v2086 = vpop.trf.xlu0
        %v2087 = vpop.trf.xlu0
        %v2088 = vpop.trf.xlu0
        %v2089 = vpop.trf.xlu0
        %v2090 = vpop.trf.xlu0
        %2091 = vxpose.xlu0.c.b16.start [1/8] %v1594, 128
        %2092 = vxpose.xlu0.c.b16.cont [2/8] 0, 128
        %2093 = vxpose.xlu0.c.b16.cont [3/8] 0, 128
        %2094 = vxpose.xlu0.c.b16.cont [4/8] 0, 128
        %2095 = vxpose.xlu0.c.b16.cont [5/8] 0, 128
        %2096 = vxpose.xlu0.c.b16.cont [6/8] 0, 128
        %2097 = vxpose.xlu0.c.b16.cont [7/8] 0, 128
        %2098 = vxpose.xlu0.c.b16.end [8/8] 0, 128
        %v2099 = vpop.trf.xlu0
        %v2100 = vpop.trf.xlu0
        %v2101 = vpop.trf.xlu0
        %v2102 = vpop.trf.xlu0
        %v2103 = vpop.trf.xlu0
        %v2104 = vpop.trf.xlu0
        %v2105 = vpop.trf.xlu0
        %v2106 = vpop.trf.xlu0
        %v2108 = vunpack.c.l.s4 1983009808
        %v2109 = vunpack.c.0.s8 %v2108
        %v2110 = vperm.slane %v1603, %v2109
        %v2111 = vrot.slane %v2110, 4
        %v2112 = vsel %vm401, 0, %v2111
        %v2114 = vunpack.c.l.s4 1934713408
        %v2115 = vunpack.c.0.s8 %v2114
        %v2116 = vperm.slane %v2110, %v2115
        %v2118 = vunpack.c.l.s4 1934713408
        %v2119 = vunpack.c.0.s8 %v2118
        %v2120 = vperm.slane %v2112, %v2119
        %v2121 = vrot.slane %v2116, 4
        %v2122 = vsel %vm401, 0, %v2121
        %v2123 = vrot.slane %v2120, 4
        %v2124 = vsel %vm401, 0, %v2123
        %v2125 = vrot.slane %v1603, 4
        %v2126 = vsel %vm401, 0, %v2125
        %v2128 = vunpack.c.l.s4 1983009808
        %v2129 = vunpack.c.0.s8 %v2128
        %v2130 = vperm.slane %v1859, %v2129
        %v2131 = vrot.slane %v2130, 4
        %v2132 = vsel %vm401, 0, %v2131
        %v2134 = vunpack.c.l.s4 1934713408
        %v2135 = vunpack.c.0.s8 %v2134
        %v2136 = vperm.slane %v2130, %v2135
        %v2138 = vunpack.c.l.s4 1934713408
        %v2139 = vunpack.c.0.s8 %v2138
        %v2140 = vperm.slane %v2132, %v2139
        %v2141 = vrot.slane %v2136, 4
        %v2142 = vsel %vm401, 0, %v2141
        %v2143 = vrot.slane %v2140, 4
        %v2144 = vsel %vm401, 0, %v2143
        %v2145 = vrot.slane %v1859, 4
        %v2146 = vsel %vm401, 0, %v2145
        %v2148 = vunpack.c.l.s4 1983009808
        %v2149 = vunpack.c.0.s8 %v2148
        %v2150 = vperm.slane %v1619, %v2149
        %v2151 = vrot.slane %v2150, 4
        %v2152 = vsel %vm401, 0, %v2151
        %v2154 = vunpack.c.l.s4 1934713408
        %v2155 = vunpack.c.0.s8 %v2154
        %v2156 = vperm.slane %v2150, %v2155
        %v2158 = vunpack.c.l.s4 1934713408
        %v2159 = vunpack.c.0.s8 %v2158
        %v2160 = vperm.slane %v2152, %v2159
        %v2161 = vrot.slane %v2156, 4
        %v2162 = vsel %vm401, 0, %v2161
        %v2163 = vrot.slane %v2160, 4
        %v2164 = vsel %vm401, 0, %v2163
        %v2165 = vrot.slane %v1619, 4
        %v2166 = vsel %vm401, 0, %v2165
        %v2168 = vunpack.c.l.s4 1983009808
        %v2169 = vunpack.c.0.s8 %v2168
        %v2170 = vperm.slane %v1875, %v2169
        %v2171 = vrot.slane %v2170, 4
        %v2172 = vsel %vm401, 0, %v2171
        %v2174 = vunpack.c.l.s4 1934713408
        %v2175 = vunpack.c.0.s8 %v2174
        %v2176 = vperm.slane %v2170, %v2175
        %v2178 = vunpack.c.l.s4 1934713408
        %v2179 = vunpack.c.0.s8 %v2178
        %v2180 = vperm.slane %v2172, %v2179
        %v2181 = vrot.slane %v2176, 4
        %v2182 = vsel %vm401, 0, %v2181
        %v2183 = vrot.slane %v2180, 4
        %v2184 = vsel %vm401, 0, %v2183
        %v2185 = vrot.slane %v1875, 4
        %v2186 = vsel %vm401, 0, %v2185
        %v2188 = vunpack.c.l.s4 1983009808
        %v2189 = vunpack.c.0.s8 %v2188
        %v2190 = vperm.slane %v1635, %v2189
        %v2191 = vrot.slane %v2190, 4
        %v2192 = vsel %vm401, 0, %v2191
        %v2194 = vunpack.c.l.s4 1934713408
        %v2195 = vunpack.c.0.s8 %v2194
        %v2196 = vperm.slane %v2190, %v2195
        %v2198 = vunpack.c.l.s4 1934713408
        %v2199 = vunpack.c.0.s8 %v2198
        %v2200 = vperm.slane %v2192, %v2199
        %v2201 = vrot.slane %v2196, 4
        %v2202 = vsel %vm401, 0, %v2201
        %v2203 = vrot.slane %v2200, 4
        %v2204 = vsel %vm401, 0, %v2203
        %v2205 = vrot.slane %v1635, 4
        %v2206 = vsel %vm401, 0, %v2205
        %v2208 = vunpack.c.l.s4 1983009808
        %v2209 = vunpack.c.0.s8 %v2208
        %v2210 = vperm.slane %v1891, %v2209
        %v2211 = vrot.slane %v2210, 4
        %v2212 = vsel %vm401, 0, %v2211
        %v2214 = vunpack.c.l.s4 1934713408
        %v2215 = vunpack.c.0.s8 %v2214
        %v2216 = vperm.slane %v2210, %v2215
        %v2218 = vunpack.c.l.s4 1934713408
        %v2219 = vunpack.c.0.s8 %v2218
        %v2220 = vperm.slane %v2212, %v2219
        %v2221 = vrot.slane %v2216, 4
        %v2222 = vsel %vm401, 0, %v2221
        %v2223 = vrot.slane %v2220, 4
        %v2224 = vsel %vm401, 0, %v2223
        %v2225 = vrot.slane %v1891, 4
        %v2226 = vsel %vm401, 0, %v2225
        %v2228 = vunpack.c.l.s4 1983009808
        %v2229 = vunpack.c.0.s8 %v2228
        %v2230 = vperm.slane %v1651, %v2229
        %v2231 = vrot.slane %v2230, 4
        %v2232 = vsel %vm401, 0, %v2231
        %v2234 = vunpack.c.l.s4 1934713408
        %v2235 = vunpack.c.0.s8 %v2234
        %v2236 = vperm.slane %v2230, %v2235
        %v2238 = vunpack.c.l.s4 1934713408
        %v2239 = vunpack.c.0.s8 %v2238
        %v2240 = vperm.slane %v2232, %v2239
        %v2241 = vrot.slane %v2236, 4
        %v2242 = vsel %vm401, 0, %v2241
        %v2243 = vrot.slane %v2240, 4
        %v2244 = vsel %vm401, 0, %v2243
        %v2245 = vrot.slane %v1651, 4
        %v2246 = vsel %vm401, 0, %v2245
        %v2248 = vunpack.c.l.s4 1983009808
        %v2249 = vunpack.c.0.s8 %v2248
        %v2250 = vperm.slane %v1907, %v2249
        %v2251 = vrot.slane %v2250, 4
        %v2252 = vsel %vm401, 0, %v2251
        %v2254 = vunpack.c.l.s4 1934713408
        %v2255 = vunpack.c.0.s8 %v2254
        %v2256 = vperm.slane %v2250, %v2255
        %v2258 = vunpack.c.l.s4 1934713408
        %v2259 = vunpack.c.0.s8 %v2258
        %v2260 = vperm.slane %v2252, %v2259
        %v2261 = vrot.slane %v2256, 4
        %v2262 = vsel %vm401, 0, %v2261
        %v2263 = vrot.slane %v2260, 4
        %v2264 = vsel %vm401, 0, %v2263
        %v2265 = vrot.slane %v1907, 4
        %v2266 = vsel %vm401, 0, %v2265
        %v2268 = vunpack.c.l.s4 1983009808
        %v2269 = vunpack.c.0.s8 %v2268
        %v2270 = vperm.slane %v1667, %v2269
        %v2271 = vrot.slane %v2270, 4
        %v2272 = vsel %vm401, 0, %v2271
        %v2274 = vunpack.c.l.s4 1934713408
        %v2275 = vunpack.c.0.s8 %v2274
        %v2276 = vperm.slane %v2270, %v2275
        %v2278 = vunpack.c.l.s4 1934713408
        %v2279 = vunpack.c.0.s8 %v2278
        %v2280 = vperm.slane %v2272, %v2279
        %v2281 = vrot.slane %v2276, 4
        %v2282 = vsel %vm401, 0, %v2281
        %v2283 = vrot.slane %v2280, 4
        %v2284 = vsel %vm401, 0, %v2283
        %v2285 = vrot.slane %v1667, 4
        %v2286 = vsel %vm401, 0, %v2285
        %v2288 = vunpack.c.l.s4 1983009808
        %v2289 = vunpack.c.0.s8 %v2288
        %v2290 = vperm.slane %v1923, %v2289
        %v2291 = vrot.slane %v2290, 4
        %v2292 = vsel %vm401, 0, %v2291
        %v2294 = vunpack.c.l.s4 1934713408
        %v2295 = vunpack.c.0.s8 %v2294
        %v2296 = vperm.slane %v2290, %v2295
        %v2298 = vunpack.c.l.s4 1934713408
        %v2299 = vunpack.c.0.s8 %v2298
        %v2300 = vperm.slane %v2292, %v2299
        %v2301 = vrot.slane %v2296, 4
        %v2302 = vsel %vm401, 0, %v2301
        %v2303 = vrot.slane %v2300, 4
        %v2304 = vsel %vm401, 0, %v2303
        %v2305 = vrot.slane %v1923, 4
        %v2306 = vsel %vm401, 0, %v2305
        %v2308 = vunpack.c.l.s4 1983009808
        %v2309 = vunpack.c.0.s8 %v2308
        %v2310 = vperm.slane %v1683, %v2309
        %v2311 = vrot.slane %v2310, 4
        %v2312 = vsel %vm401, 0, %v2311
        %v2314 = vunpack.c.l.s4 1934713408
        %v2315 = vunpack.c.0.s8 %v2314
        %v2316 = vperm.slane %v2310, %v2315
        %v2318 = vunpack.c.l.s4 1934713408
        %v2319 = vunpack.c.0.s8 %v2318
        %v2320 = vperm.slane %v2312, %v2319
        %v2321 = vrot.slane %v2316, 4
        %v2322 = vsel %vm401, 0, %v2321
        %v2323 = vrot.slane %v2320, 4
        %v2324 = vsel %vm401, 0, %v2323
        %v2325 = vrot.slane %v1683, 4
        %v2326 = vsel %vm401, 0, %v2325
        %v2328 = vunpack.c.l.s4 1983009808
        %v2329 = vunpack.c.0.s8 %v2328
        %v2330 = vperm.slane %v1939, %v2329
        %v2331 = vrot.slane %v2330, 4
        %v2332 = vsel %vm401, 0, %v2331
        %v2334 = vunpack.c.l.s4 1934713408
        %v2335 = vunpack.c.0.s8 %v2334
        %v2336 = vperm.slane %v2330, %v2335
        %v2338 = vunpack.c.l.s4 1934713408
        %v2339 = vunpack.c.0.s8 %v2338
        %v2340 = vperm.slane %v2332, %v2339
        %v2341 = vrot.slane %v2336, 4
        %v2342 = vsel %vm401, 0, %v2341
        %v2343 = vrot.slane %v2340, 4
        %v2344 = vsel %vm401, 0, %v2343
        %v2345 = vrot.slane %v1939, 4
        %v2346 = vsel %vm401, 0, %v2345
        %v2348 = vunpack.c.l.s4 1983009808
        %v2349 = vunpack.c.0.s8 %v2348
        %v2350 = vperm.slane %v1699, %v2349
        %v2351 = vrot.slane %v2350, 4
        %v2352 = vsel %vm401, 0, %v2351
        %v2354 = vunpack.c.l.s4 1934713408
        %v2355 = vunpack.c.0.s8 %v2354
        %v2356 = vperm.slane %v2350, %v2355
        %v2358 = vunpack.c.l.s4 1934713408
        %v2359 = vunpack.c.0.s8 %v2358
        %v2360 = vperm.slane %v2352, %v2359
        %v2361 = vrot.slane %v2356, 4
        %v2362 = vsel %vm401, 0, %v2361
        %v2363 = vrot.slane %v2360, 4
        %v2364 = vsel %vm401, 0, %v2363
        %v2365 = vrot.slane %v1699, 4
        %v2366 = vsel %vm401, 0, %v2365
        %v2368 = vunpack.c.l.s4 1983009808
        %v2369 = vunpack.c.0.s8 %v2368
        %v2370 = vperm.slane %v1955, %v2369
        %v2371 = vrot.slane %v2370, 4
        %v2372 = vsel %vm401, 0, %v2371
        %v2374 = vunpack.c.l.s4 1934713408
        %v2375 = vunpack.c.0.s8 %v2374
        %v2376 = vperm.slane %v2370, %v2375
        %v2378 = vunpack.c.l.s4 1934713408
        %v2379 = vunpack.c.0.s8 %v2378
        %v2380 = vperm.slane %v2372, %v2379
        %v2381 = vrot.slane %v2376, 4
        %v2382 = vsel %vm401, 0, %v2381
        %v2383 = vrot.slane %v2380, 4
        %v2384 = vsel %vm401, 0, %v2383
        %v2385 = vrot.slane %v1955, 4
        %v2386 = vsel %vm401, 0, %v2385
        %v2388 = vunpack.c.l.s4 1983009808
        %v2389 = vunpack.c.0.s8 %v2388
        %v2390 = vperm.slane %v1715, %v2389
        %v2391 = vrot.slane %v2390, 4
        %v2392 = vsel %vm401, 0, %v2391
        %v2394 = vunpack.c.l.s4 1934713408
        %v2395 = vunpack.c.0.s8 %v2394
        %v2396 = vperm.slane %v2390, %v2395
        %v2398 = vunpack.c.l.s4 1934713408
        %v2399 = vunpack.c.0.s8 %v2398
        %v2400 = vperm.slane %v2392, %v2399
        %v2401 = vrot.slane %v2396, 4
        %v2402 = vsel %vm401, 0, %v2401
        %v2403 = vrot.slane %v2400, 4
        %v2404 = vsel %vm401, 0, %v2403
        %v2405 = vrot.slane %v1715, 4
        %v2406 = vsel %vm401, 0, %v2405
        %v2408 = vunpack.c.l.s4 1983009808
        %v2409 = vunpack.c.0.s8 %v2408
        %v2410 = vperm.slane %v1971, %v2409
        %v2411 = vrot.slane %v2410, 4
        %v2412 = vsel %vm401, 0, %v2411
        %v2414 = vunpack.c.l.s4 1934713408
        %v2415 = vunpack.c.0.s8 %v2414
        %v2416 = vperm.slane %v2410, %v2415
        %v2418 = vunpack.c.l.s4 1934713408
        %v2419 = vunpack.c.0.s8 %v2418
        %v2420 = vperm.slane %v2412, %v2419
        %v2421 = vrot.slane %v2416, 4
        %v2422 = vsel %vm401, 0, %v2421
        %v2423 = vrot.slane %v2420, 4
        %v2424 = vsel %vm401, 0, %v2423
        %v2425 = vrot.slane %v1971, 4
        %v2426 = vsel %vm401, 0, %v2425
        %v2428 = vunpack.c.l.s4 1983009808
        %v2429 = vunpack.c.0.s8 %v2428
        %v2430 = vperm.slane %v1731, %v2429
        %v2431 = vrot.slane %v2430, 4
        %v2432 = vsel %vm401, 0, %v2431
        %v2434 = vunpack.c.l.s4 1934713408
        %v2435 = vunpack.c.0.s8 %v2434
        %v2436 = vperm.slane %v2430, %v2435
        %v2438 = vunpack.c.l.s4 1934713408
        %v2439 = vunpack.c.0.s8 %v2438
        %v2440 = vperm.slane %v2432, %v2439
        %v2441 = vrot.slane %v2436, 4
        %v2442 = vsel %vm401, 0, %v2441
        %v2443 = vrot.slane %v2440, 4
        %v2444 = vsel %vm401, 0, %v2443
        %v2445 = vrot.slane %v1731, 4
        %v2446 = vsel %vm401, 0, %v2445
        %v2448 = vunpack.c.l.s4 1983009808
        %v2449 = vunpack.c.0.s8 %v2448
        %v2450 = vperm.slane %v1987, %v2449
        %v2451 = vrot.slane %v2450, 4
        %v2452 = vsel %vm401, 0, %v2451
        %v2454 = vunpack.c.l.s4 1934713408
        %v2455 = vunpack.c.0.s8 %v2454
        %v2456 = vperm.slane %v2450, %v2455
        %v2458 = vunpack.c.l.s4 1934713408
        %v2459 = vunpack.c.0.s8 %v2458
        %v2460 = vperm.slane %v2452, %v2459
        %v2461 = vrot.slane %v2456, 4
        %v2462 = vsel %vm401, 0, %v2461
        %v2463 = vrot.slane %v2460, 4
        %v2464 = vsel %vm401, 0, %v2463
        %v2465 = vrot.slane %v1987, 4
        %v2466 = vsel %vm401, 0, %v2465
        %v2468 = vunpack.c.l.s4 1983009808
        %v2469 = vunpack.c.0.s8 %v2468
        %v2470 = vperm.slane %v1747, %v2469
        %v2471 = vrot.slane %v2470, 4
        %v2472 = vsel %vm401, 0, %v2471
        %v2474 = vunpack.c.l.s4 1934713408
        %v2475 = vunpack.c.0.s8 %v2474
        %v2476 = vperm.slane %v2470, %v2475
        %v2478 = vunpack.c.l.s4 1934713408
        %v2479 = vunpack.c.0.s8 %v2478
        %v2480 = vperm.slane %v2472, %v2479
        %v2481 = vrot.slane %v2476, 4
        %v2482 = vsel %vm401, 0, %v2481
        %v2483 = vrot.slane %v2480, 4
        %v2484 = vsel %vm401, 0, %v2483
        %v2485 = vrot.slane %v1747, 4
        %v2486 = vsel %vm401, 0, %v2485
        %v2488 = vunpack.c.l.s4 1983009808
        %v2489 = vunpack.c.0.s8 %v2488
        %v2490 = vperm.slane %v2003, %v2489
        %v2491 = vrot.slane %v2490, 4
        %v2492 = vsel %vm401, 0, %v2491
        %v2494 = vunpack.c.l.s4 1934713408
        %v2495 = vunpack.c.0.s8 %v2494
        %v2496 = vperm.slane %v2490, %v2495
        %v2498 = vunpack.c.l.s4 1934713408
        %v2499 = vunpack.c.0.s8 %v2498
        %v2500 = vperm.slane %v2492, %v2499
        %v2501 = vrot.slane %v2496, 4
        %v2502 = vsel %vm401, 0, %v2501
        %v2503 = vrot.slane %v2500, 4
        %v2504 = vsel %vm401, 0, %v2503
        %v2505 = vrot.slane %v2003, 4
        %v2506 = vsel %vm401, 0, %v2505
        %v2508 = vunpack.c.l.s4 1983009808
        %v2509 = vunpack.c.0.s8 %v2508
        %v2510 = vperm.slane %v1763, %v2509
        %v2511 = vrot.slane %v2510, 4
        %v2512 = vsel %vm401, 0, %v2511
        %v2514 = vunpack.c.l.s4 1934713408
        %v2515 = vunpack.c.0.s8 %v2514
        %v2516 = vperm.slane %v2510, %v2515
        %v2518 = vunpack.c.l.s4 1934713408
        %v2519 = vunpack.c.0.s8 %v2518
        %v2520 = vperm.slane %v2512, %v2519
        %v2521 = vrot.slane %v2516, 4
        %v2522 = vsel %vm401, 0, %v2521
        %v2523 = vrot.slane %v2520, 4
        %v2524 = vsel %vm401, 0, %v2523
        %v2525 = vrot.slane %v1763, 4
        %v2526 = vsel %vm401, 0, %v2525
        %v2528 = vunpack.c.l.s4 1983009808
        %v2529 = vunpack.c.0.s8 %v2528
        %v2530 = vperm.slane %v2019, %v2529
        %v2531 = vrot.slane %v2530, 4
        %v2532 = vsel %vm401, 0, %v2531
        %v2534 = vunpack.c.l.s4 1934713408
        %v2535 = vunpack.c.0.s8 %v2534
        %v2536 = vperm.slane %v2530, %v2535
        %v2538 = vunpack.c.l.s4 1934713408
        %v2539 = vunpack.c.0.s8 %v2538
        %v2540 = vperm.slane %v2532, %v2539
        %v2541 = vrot.slane %v2536, 4
        %v2542 = vsel %vm401, 0, %v2541
        %v2543 = vrot.slane %v2540, 4
        %v2544 = vsel %vm401, 0, %v2543
        %v2545 = vrot.slane %v2019, 4
        %v2546 = vsel %vm401, 0, %v2545
        %v2548 = vunpack.c.l.s4 1983009808
        %v2549 = vunpack.c.0.s8 %v2548
        %v2550 = vperm.slane %v1779, %v2549
        %v2551 = vrot.slane %v2550, 4
        %v2552 = vsel %vm401, 0, %v2551
        %v2554 = vunpack.c.l.s4 1934713408
        %v2555 = vunpack.c.0.s8 %v2554
        %v2556 = vperm.slane %v2550, %v2555
        %v2558 = vunpack.c.l.s4 1934713408
        %v2559 = vunpack.c.0.s8 %v2558
        %v2560 = vperm.slane %v2552, %v2559
        %v2561 = vrot.slane %v2556, 4
        %v2562 = vsel %vm401, 0, %v2561
        %v2563 = vrot.slane %v2560, 4
        %v2564 = vsel %vm401, 0, %v2563
        %v2565 = vrot.slane %v1779, 4
        %v2566 = vsel %vm401, 0, %v2565
        %v2568 = vunpack.c.l.s4 1983009808
        %v2569 = vunpack.c.0.s8 %v2568
        %v2570 = vperm.slane %v2035, %v2569
        %v2571 = vrot.slane %v2570, 4
        %v2572 = vsel %vm401, 0, %v2571
        %v2574 = vunpack.c.l.s4 1934713408
        %v2575 = vunpack.c.0.s8 %v2574
        %v2576 = vperm.slane %v2570, %v2575
        %v2578 = vunpack.c.l.s4 1934713408
        %v2579 = vunpack.c.0.s8 %v2578
        %v2580 = vperm.slane %v2572, %v2579
        %v2581 = vrot.slane %v2576, 4
        %v2582 = vsel %vm401, 0, %v2581
        %v2583 = vrot.slane %v2580, 4
        %v2584 = vsel %vm401, 0, %v2583
        %v2585 = vrot.slane %v2035, 4
        %v2586 = vsel %vm401, 0, %v2585
        %v2588 = vunpack.c.l.s4 1983009808
        %v2589 = vunpack.c.0.s8 %v2588
        %v2590 = vperm.slane %v1795, %v2589
        %v2591 = vrot.slane %v2590, 4
        %v2592 = vsel %vm401, 0, %v2591
        %v2594 = vunpack.c.l.s4 1934713408
        %v2595 = vunpack.c.0.s8 %v2594
        %v2596 = vperm.slane %v2590, %v2595
        %v2598 = vunpack.c.l.s4 1934713408
        %v2599 = vunpack.c.0.s8 %v2598
        %v2600 = vperm.slane %v2592, %v2599
        %v2601 = vrot.slane %v2596, 4
        %v2602 = vsel %vm401, 0, %v2601
        %v2603 = vrot.slane %v2600, 4
        %v2604 = vsel %vm401, 0, %v2603
        %v2605 = vrot.slane %v1795, 4
        %v2606 = vsel %vm401, 0, %v2605
        %v2608 = vunpack.c.l.s4 1983009808
        %v2609 = vunpack.c.0.s8 %v2608
        %v2610 = vperm.slane %v2051, %v2609
        %v2611 = vrot.slane %v2610, 4
        %v2612 = vsel %vm401, 0, %v2611
        %v2614 = vunpack.c.l.s4 1934713408
        %v2615 = vunpack.c.0.s8 %v2614
        %v2616 = vperm.slane %v2610, %v2615
        %v2618 = vunpack.c.l.s4 1934713408
        %v2619 = vunpack.c.0.s8 %v2618
        %v2620 = vperm.slane %v2612, %v2619
        %v2621 = vrot.slane %v2616, 4
        %v2622 = vsel %vm401, 0, %v2621
        %v2623 = vrot.slane %v2620, 4
        %v2624 = vsel %vm401, 0, %v2623
        %v2625 = vrot.slane %v2051, 4
        %v2626 = vsel %vm401, 0, %v2625
        %v2628 = vunpack.c.l.s4 1983009808
        %v2629 = vunpack.c.0.s8 %v2628
        %v2630 = vperm.slane %v1811, %v2629
        %v2631 = vrot.slane %v2630, 4
        %v2632 = vsel %vm401, 0, %v2631
        %v2634 = vunpack.c.l.s4 1934713408
        %v2635 = vunpack.c.0.s8 %v2634
        %v2636 = vperm.slane %v2630, %v2635
        %v2638 = vunpack.c.l.s4 1934713408
        %v2639 = vunpack.c.0.s8 %v2638
        %v2640 = vperm.slane %v2632, %v2639
        %v2641 = vrot.slane %v2636, 4
        %v2642 = vsel %vm401, 0, %v2641
        %v2643 = vrot.slane %v2640, 4
        %v2644 = vsel %vm401, 0, %v2643
        %v2645 = vrot.slane %v1811, 4
        %v2646 = vsel %vm401, 0, %v2645
        %v2648 = vunpack.c.l.s4 1983009808
        %v2649 = vunpack.c.0.s8 %v2648
        %v2650 = vperm.slane %v2067, %v2649
        %v2651 = vrot.slane %v2650, 4
        %v2652 = vsel %vm401, 0, %v2651
        %v2654 = vunpack.c.l.s4 1934713408
        %v2655 = vunpack.c.0.s8 %v2654
        %v2656 = vperm.slane %v2650, %v2655
        %v2658 = vunpack.c.l.s4 1934713408
        %v2659 = vunpack.c.0.s8 %v2658
        %v2660 = vperm.slane %v2652, %v2659
        %v2661 = vrot.slane %v2656, 4
        %v2662 = vsel %vm401, 0, %v2661
        %v2663 = vrot.slane %v2660, 4
        %v2664 = vsel %vm401, 0, %v2663
        %v2665 = vrot.slane %v2067, 4
        %v2666 = vsel %vm401, 0, %v2665
        %v2668 = vunpack.c.l.s4 1983009808
        %v2669 = vunpack.c.0.s8 %v2668
        %v2670 = vperm.slane %v1827, %v2669
        %v2671 = vrot.slane %v2670, 4
        %v2672 = vsel %vm401, 0, %v2671
        %v2674 = vunpack.c.l.s4 1934713408
        %v2675 = vunpack.c.0.s8 %v2674
        %v2676 = vperm.slane %v2670, %v2675
        %v2678 = vunpack.c.l.s4 1934713408
        %v2679 = vunpack.c.0.s8 %v2678
        %v2680 = vperm.slane %v2672, %v2679
        %v2681 = vrot.slane %v2676, 4
        %v2682 = vsel %vm401, 0, %v2681
        %v2683 = vrot.slane %v2680, 4
        %v2684 = vsel %vm401, 0, %v2683
        %v2685 = vrot.slane %v1827, 4
        %v2686 = vsel %vm401, 0, %v2685
        %v2688 = vunpack.c.l.s4 1983009808
        %v2689 = vunpack.c.0.s8 %v2688
        %v2690 = vperm.slane %v2083, %v2689
        %v2691 = vrot.slane %v2690, 4
        %v2692 = vsel %vm401, 0, %v2691
        %v2694 = vunpack.c.l.s4 1934713408
        %v2695 = vunpack.c.0.s8 %v2694
        %v2696 = vperm.slane %v2690, %v2695
        %v2698 = vunpack.c.l.s4 1934713408
        %v2699 = vunpack.c.0.s8 %v2698
        %v2700 = vperm.slane %v2692, %v2699
        %v2701 = vrot.slane %v2696, 4
        %v2702 = vsel %vm401, 0, %v2701
        %v2703 = vrot.slane %v2700, 4
        %v2704 = vsel %vm401, 0, %v2703
        %v2705 = vrot.slane %v2083, 4
        %v2706 = vsel %vm401, 0, %v2705
        %v2708 = vunpack.c.l.s4 1983009808
        %v2709 = vunpack.c.0.s8 %v2708
        %v2710 = vperm.slane %v1843, %v2709
        %v2711 = vrot.slane %v2710, 4
        %v2712 = vsel %vm401, 0, %v2711
        %v2714 = vunpack.c.l.s4 1934713408
        %v2715 = vunpack.c.0.s8 %v2714
        %v2716 = vperm.slane %v2710, %v2715
        %v2718 = vunpack.c.l.s4 1934713408
        %v2719 = vunpack.c.0.s8 %v2718
        %v2720 = vperm.slane %v2712, %v2719
        %v2721 = vrot.slane %v2716, 4
        %v2722 = vsel %vm401, 0, %v2721
        %v2723 = vrot.slane %v2720, 4
        %v2724 = vsel %vm401, 0, %v2723
        %v2725 = vrot.slane %v1843, 4
        %v2726 = vsel %vm401, 0, %v2725
        %v2728 = vunpack.c.l.s4 1983009808
        %v2729 = vunpack.c.0.s8 %v2728
        %v2730 = vperm.slane %v2099, %v2729
        %v2731 = vrot.slane %v2730, 4
        %v2732 = vsel %vm401, 0, %v2731
        %v2734 = vunpack.c.l.s4 1934713408
        %v2735 = vunpack.c.0.s8 %v2734
        %v2736 = vperm.slane %v2730, %v2735
        %v2738 = vunpack.c.l.s4 1934713408
        %v2739 = vunpack.c.0.s8 %v2738
        %v2740 = vperm.slane %v2732, %v2739
        %v2741 = vrot.slane %v2736, 4
        %v2742 = vsel %vm401, 0, %v2741
        %v2743 = vrot.slane %v2740, 4
        %v2744 = vsel %vm401, 0, %v2743
        %v2745 = vrot.slane %v2099, 4
        %v2746 = vsel %vm401, 0, %v2745
        %v2749 = vpack.i.b16 %v2136, %v2116
        %v2751 = vshrl.u32 %v2116, 16
        %v2752 = vshrl.u32 %v2136, 16
        %v2753 = vpack.i.b16 %v2752, %v2751
        %v2757 = vpack.i.b16 %v2142, %v2122
        %v2759 = vshrl.u32 %v2122, 16
        %v2760 = vshrl.u32 %v2142, 16
        %v2761 = vpack.i.b16 %v2760, %v2759
        %v2765 = vpack.i.b16 %v2140, %v2120
        %v2767 = vshrl.u32 %v2120, 16
        %v2768 = vshrl.u32 %v2140, 16
        %v2769 = vpack.i.b16 %v2768, %v2767
        %v2773 = vpack.i.b16 %v2144, %v2124
        %v2775 = vshrl.u32 %v2124, 16
        %v2776 = vshrl.u32 %v2144, 16
        %v2777 = vpack.i.b16 %v2776, %v2775
        %v2781 = vpack.i.b16 %v2146, %v2126
        %v2785 = vpack.i.b16 %v2176, %v2156
        %v2787 = vshrl.u32 %v2156, 16
        %v2788 = vshrl.u32 %v2176, 16
        %v2789 = vpack.i.b16 %v2788, %v2787
        %v2793 = vpack.i.b16 %v2182, %v2162
        %v2795 = vshrl.u32 %v2162, 16
        %v2796 = vshrl.u32 %v2182, 16
        %v2797 = vpack.i.b16 %v2796, %v2795
        %v2801 = vpack.i.b16 %v2180, %v2160
        %v2803 = vshrl.u32 %v2160, 16
        %v2804 = vshrl.u32 %v2180, 16
        %v2805 = vpack.i.b16 %v2804, %v2803
        %v2809 = vpack.i.b16 %v2184, %v2164
        %v2811 = vshrl.u32 %v2164, 16
        %v2812 = vshrl.u32 %v2184, 16
        %v2813 = vpack.i.b16 %v2812, %v2811
        %v2817 = vpack.i.b16 %v2186, %v2166
        %v2821 = vpack.i.b16 %v2216, %v2196
        %v2823 = vshrl.u32 %v2196, 16
        %v2824 = vshrl.u32 %v2216, 16
        %v2825 = vpack.i.b16 %v2824, %v2823
        %v2829 = vpack.i.b16 %v2222, %v2202
        %v2831 = vshrl.u32 %v2202, 16
        %v2832 = vshrl.u32 %v2222, 16
        %v2833 = vpack.i.b16 %v2832, %v2831
        %v2837 = vpack.i.b16 %v2220, %v2200
        %v2839 = vshrl.u32 %v2200, 16
        %v2840 = vshrl.u32 %v2220, 16
        %v2841 = vpack.i.b16 %v2840, %v2839
        %v2845 = vpack.i.b16 %v2224, %v2204
        %v2847 = vshrl.u32 %v2204, 16
        %v2848 = vshrl.u32 %v2224, 16
        %v2849 = vpack.i.b16 %v2848, %v2847
        %v2853 = vpack.i.b16 %v2226, %v2206
        %v2857 = vpack.i.b16 %v2256, %v2236
        %v2859 = vshrl.u32 %v2236, 16
        %v2860 = vshrl.u32 %v2256, 16
        %v2861 = vpack.i.b16 %v2860, %v2859
        %v2865 = vpack.i.b16 %v2262, %v2242
        %v2867 = vshrl.u32 %v2242, 16
        %v2868 = vshrl.u32 %v2262, 16
        %v2869 = vpack.i.b16 %v2868, %v2867
        %v2873 = vpack.i.b16 %v2260, %v2240
        %v2875 = vshrl.u32 %v2240, 16
        %v2876 = vshrl.u32 %v2260, 16
        %v2877 = vpack.i.b16 %v2876, %v2875
        %v2881 = vpack.i.b16 %v2264, %v2244
        %v2883 = vshrl.u32 %v2244, 16
        %v2884 = vshrl.u32 %v2264, 16
        %v2885 = vpack.i.b16 %v2884, %v2883
        %v2889 = vpack.i.b16 %v2266, %v2246
        %v2893 = vpack.i.b16 %v2296, %v2276
        %v2895 = vshrl.u32 %v2276, 16
        %v2896 = vshrl.u32 %v2296, 16
        %v2897 = vpack.i.b16 %v2896, %v2895
        %v2901 = vpack.i.b16 %v2302, %v2282
        %v2903 = vshrl.u32 %v2282, 16
        %v2904 = vshrl.u32 %v2302, 16
        %v2905 = vpack.i.b16 %v2904, %v2903
        %v2909 = vpack.i.b16 %v2300, %v2280
        %v2911 = vshrl.u32 %v2280, 16
        %v2912 = vshrl.u32 %v2300, 16
        %v2913 = vpack.i.b16 %v2912, %v2911
        %v2917 = vpack.i.b16 %v2304, %v2284
        %v2919 = vshrl.u32 %v2284, 16
        %v2920 = vshrl.u32 %v2304, 16
        %v2921 = vpack.i.b16 %v2920, %v2919
        %v2925 = vpack.i.b16 %v2306, %v2286
        %v2929 = vpack.i.b16 %v2336, %v2316
        %v2931 = vshrl.u32 %v2316, 16
        %v2932 = vshrl.u32 %v2336, 16
        %v2933 = vpack.i.b16 %v2932, %v2931
        %v2937 = vpack.i.b16 %v2342, %v2322
        %v2939 = vshrl.u32 %v2322, 16
        %v2940 = vshrl.u32 %v2342, 16
        %v2941 = vpack.i.b16 %v2940, %v2939
        %v2945 = vpack.i.b16 %v2340, %v2320
        %v2947 = vshrl.u32 %v2320, 16
        %v2948 = vshrl.u32 %v2340, 16
        %v2949 = vpack.i.b16 %v2948, %v2947
        %v2953 = vpack.i.b16 %v2344, %v2324
        %v2955 = vshrl.u32 %v2324, 16
        %v2956 = vshrl.u32 %v2344, 16
        %v2957 = vpack.i.b16 %v2956, %v2955
        %v2961 = vpack.i.b16 %v2346, %v2326
        %v2965 = vpack.i.b16 %v2376, %v2356
        %v2967 = vshrl.u32 %v2356, 16
        %v2968 = vshrl.u32 %v2376, 16
        %v2969 = vpack.i.b16 %v2968, %v2967
        %v2973 = vpack.i.b16 %v2382, %v2362
        %v2975 = vshrl.u32 %v2362, 16
        %v2976 = vshrl.u32 %v2382, 16
        %v2977 = vpack.i.b16 %v2976, %v2975
        %v2981 = vpack.i.b16 %v2380, %v2360
        %v2983 = vshrl.u32 %v2360, 16
        %v2984 = vshrl.u32 %v2380, 16
        %v2985 = vpack.i.b16 %v2984, %v2983
        %v2989 = vpack.i.b16 %v2384, %v2364
        %v2991 = vshrl.u32 %v2364, 16
        %v2992 = vshrl.u32 %v2384, 16
        %v2993 = vpack.i.b16 %v2992, %v2991
        %v2997 = vpack.i.b16 %v2386, %v2366
        %v3001 = vpack.i.b16 %v2416, %v2396
        %v3003 = vshrl.u32 %v2396, 16
        %v3004 = vshrl.u32 %v2416, 16
        %v3005 = vpack.i.b16 %v3004, %v3003
        %v3009 = vpack.i.b16 %v2422, %v2402
        %v3011 = vshrl.u32 %v2402, 16
        %v3012 = vshrl.u32 %v2422, 16
        %v3013 = vpack.i.b16 %v3012, %v3011
        %v3017 = vpack.i.b16 %v2420, %v2400
        %v3019 = vshrl.u32 %v2400, 16
        %v3020 = vshrl.u32 %v2420, 16
        %v3021 = vpack.i.b16 %v3020, %v3019
        %v3025 = vpack.i.b16 %v2424, %v2404
        %v3027 = vshrl.u32 %v2404, 16
        %v3028 = vshrl.u32 %v2424, 16
        %v3029 = vpack.i.b16 %v3028, %v3027
        %v3033 = vpack.i.b16 %v2426, %v2406
        %v3037 = vpack.i.b16 %v2456, %v2436
        %v3039 = vshrl.u32 %v2436, 16
        %v3040 = vshrl.u32 %v2456, 16
        %v3041 = vpack.i.b16 %v3040, %v3039
        %v3045 = vpack.i.b16 %v2462, %v2442
        %v3047 = vshrl.u32 %v2442, 16
        %v3048 = vshrl.u32 %v2462, 16
        %v3049 = vpack.i.b16 %v3048, %v3047
        %v3053 = vpack.i.b16 %v2460, %v2440
        %v3055 = vshrl.u32 %v2440, 16
        %v3056 = vshrl.u32 %v2460, 16
        %v3057 = vpack.i.b16 %v3056, %v3055
        %v3061 = vpack.i.b16 %v2464, %v2444
        %v3063 = vshrl.u32 %v2444, 16
        %v3064 = vshrl.u32 %v2464, 16
        %v3065 = vpack.i.b16 %v3064, %v3063
        %v3069 = vpack.i.b16 %v2466, %v2446
        %v3073 = vpack.i.b16 %v2496, %v2476
        %v3075 = vshrl.u32 %v2476, 16
        %v3076 = vshrl.u32 %v2496, 16
        %v3077 = vpack.i.b16 %v3076, %v3075
        %v3081 = vpack.i.b16 %v2502, %v2482
        %v3083 = vshrl.u32 %v2482, 16
        %v3084 = vshrl.u32 %v2502, 16
        %v3085 = vpack.i.b16 %v3084, %v3083
        %v3089 = vpack.i.b16 %v2500, %v2480
        %v3091 = vshrl.u32 %v2480, 16
        %v3092 = vshrl.u32 %v2500, 16
        %v3093 = vpack.i.b16 %v3092, %v3091
        %v3097 = vpack.i.b16 %v2504, %v2484
        %v3099 = vshrl.u32 %v2484, 16
        %v3100 = vshrl.u32 %v2504, 16
        %v3101 = vpack.i.b16 %v3100, %v3099
        %v3105 = vpack.i.b16 %v2506, %v2486
        %v3109 = vpack.i.b16 %v2536, %v2516
        %v3111 = vshrl.u32 %v2516, 16
        %v3112 = vshrl.u32 %v2536, 16
        %v3113 = vpack.i.b16 %v3112, %v3111
        %v3117 = vpack.i.b16 %v2542, %v2522
        %v3119 = vshrl.u32 %v2522, 16
        %v3120 = vshrl.u32 %v2542, 16
        %v3121 = vpack.i.b16 %v3120, %v3119
        %v3125 = vpack.i.b16 %v2540, %v2520
        %v3127 = vshrl.u32 %v2520, 16
        %v3128 = vshrl.u32 %v2540, 16
        %v3129 = vpack.i.b16 %v3128, %v3127
        %v3133 = vpack.i.b16 %v2544, %v2524
        %v3135 = vshrl.u32 %v2524, 16
        %v3136 = vshrl.u32 %v2544, 16
        %v3137 = vpack.i.b16 %v3136, %v3135
        %v3141 = vpack.i.b16 %v2546, %v2526
        %v3145 = vpack.i.b16 %v2576, %v2556
        %v3147 = vshrl.u32 %v2556, 16
        %v3148 = vshrl.u32 %v2576, 16
        %v3149 = vpack.i.b16 %v3148, %v3147
        %v3153 = vpack.i.b16 %v2582, %v2562
        %v3155 = vshrl.u32 %v2562, 16
        %v3156 = vshrl.u32 %v2582, 16
        %v3157 = vpack.i.b16 %v3156, %v3155
        %v3161 = vpack.i.b16 %v2580, %v2560
        %v3163 = vshrl.u32 %v2560, 16
        %v3164 = vshrl.u32 %v2580, 16
        %v3165 = vpack.i.b16 %v3164, %v3163
        %v3169 = vpack.i.b16 %v2584, %v2564
        %v3171 = vshrl.u32 %v2564, 16
        %v3172 = vshrl.u32 %v2584, 16
        %v3173 = vpack.i.b16 %v3172, %v3171
        %v3177 = vpack.i.b16 %v2586, %v2566
        %v3181 = vpack.i.b16 %v2616, %v2596
        %v3183 = vshrl.u32 %v2596, 16
        %v3184 = vshrl.u32 %v2616, 16
        %v3185 = vpack.i.b16 %v3184, %v3183
        %v3189 = vpack.i.b16 %v2622, %v2602
        %v3191 = vshrl.u32 %v2602, 16
        %v3192 = vshrl.u32 %v2622, 16
        %v3193 = vpack.i.b16 %v3192, %v3191
        %v3197 = vpack.i.b16 %v2620, %v2600
        %v3199 = vshrl.u32 %v2600, 16
        %v3200 = vshrl.u32 %v2620, 16
        %v3201 = vpack.i.b16 %v3200, %v3199
        %v3205 = vpack.i.b16 %v2624, %v2604
        %v3207 = vshrl.u32 %v2604, 16
        %v3208 = vshrl.u32 %v2624, 16
        %v3209 = vpack.i.b16 %v3208, %v3207
        %v3213 = vpack.i.b16 %v2626, %v2606
        %v3217 = vpack.i.b16 %v2656, %v2636
        %v3219 = vshrl.u32 %v2636, 16
        %v3220 = vshrl.u32 %v2656, 16
        %v3221 = vpack.i.b16 %v3220, %v3219
        %v3225 = vpack.i.b16 %v2662, %v2642
        %v3227 = vshrl.u32 %v2642, 16
        %v3228 = vshrl.u32 %v2662, 16
        %v3229 = vpack.i.b16 %v3228, %v3227
        %v3233 = vpack.i.b16 %v2660, %v2640
        %v3235 = vshrl.u32 %v2640, 16
        %v3236 = vshrl.u32 %v2660, 16
        %v3237 = vpack.i.b16 %v3236, %v3235
        %v3241 = vpack.i.b16 %v2664, %v2644
        %v3243 = vshrl.u32 %v2644, 16
        %v3244 = vshrl.u32 %v2664, 16
        %v3245 = vpack.i.b16 %v3244, %v3243
        %v3249 = vpack.i.b16 %v2666, %v2646
        %v3253 = vpack.i.b16 %v2696, %v2676
        %v3255 = vshrl.u32 %v2676, 16
        %v3256 = vshrl.u32 %v2696, 16
        %v3257 = vpack.i.b16 %v3256, %v3255
        %v3261 = vpack.i.b16 %v2702, %v2682
        %v3263 = vshrl.u32 %v2682, 16
        %v3264 = vshrl.u32 %v2702, 16
        %v3265 = vpack.i.b16 %v3264, %v3263
        %v3269 = vpack.i.b16 %v2700, %v2680
        %v3271 = vshrl.u32 %v2680, 16
        %v3272 = vshrl.u32 %v2700, 16
        %v3273 = vpack.i.b16 %v3272, %v3271
        %v3277 = vpack.i.b16 %v2704, %v2684
        %v3279 = vshrl.u32 %v2684, 16
        %v3280 = vshrl.u32 %v2704, 16
        %v3281 = vpack.i.b16 %v3280, %v3279
        %v3285 = vpack.i.b16 %v2706, %v2686
        %v3289 = vpack.i.b16 %v2736, %v2716
        %v3291 = vshrl.u32 %v2716, 16
        %v3292 = vshrl.u32 %v2736, 16
        %v3293 = vpack.i.b16 %v3292, %v3291
        %v3297 = vpack.i.b16 %v2742, %v2722
        %v3299 = vshrl.u32 %v2722, 16
        %v3300 = vshrl.u32 %v2742, 16
        %v3301 = vpack.i.b16 %v3300, %v3299
        %v3305 = vpack.i.b16 %v2740, %v2720
        %v3307 = vshrl.u32 %v2720, 16
        %v3308 = vshrl.u32 %v2740, 16
        %v3309 = vpack.i.b16 %v3308, %v3307
        %v3313 = vpack.i.b16 %v2744, %v2724
        %v3315 = vshrl.u32 %v2724, 16
        %v3316 = vshrl.u32 %v2744, 16
        %v3317 = vpack.i.b16 %v3316, %v3315
        %v3321 = vpack.i.b16 %v2746, %v2726
        %v3323 = vrot.slane %v2765, 4
        %v3324 = vsel %vm401, %v3323, %v2749
        %v3326 = vunpack.c.l.s4 1983009808
        %v3327 = vunpack.c.0.s8 %v3326
        %v3328 = vperm.slane %v3324, %v3327
        %v3329 = vrot.slane %v2773, 4
        %v3330 = vsel %vm401, %v3329, %v2757
        %v3332 = vunpack.c.l.s4 1983009808
        %v3333 = vunpack.c.0.s8 %v3332
        %v3334 = vperm.slane %v3330, %v3333
        %v3335 = vrot.slane %v2797, 4
        %v3336 = vsel %vm401, %v3335, %v2781
        %v3338 = vunpack.c.l.s4 1983009808
        %v3339 = vunpack.c.0.s8 %v3338
        %v3340 = vperm.slane %v3336, %v3339
        %v3341 = vrot.slane %v2805, 4
        %v3342 = vsel %vm401, %v3341, %v2789
        %v3344 = vunpack.c.l.s4 1983009808
        %v3345 = vunpack.c.0.s8 %v3344
        %v3346 = vperm.slane %v3342, %v3345
        %v3347 = vrot.slane %v3334, 4
        %v3348 = vsel %vm401, %v3347, %v3328
        %v3350 = vunpack.c.l.s4 1934713408
        %v3351 = vunpack.c.0.s8 %v3350
        %v3352 = vperm.slane %v3348, %v3351
        %v3353 = vrot.slane %v3346, 4
        %v3354 = vsel %vm401, %v3353, %v3340
        %v3356 = vunpack.c.l.s4 1934713408
        %v3357 = vunpack.c.0.s8 %v3356
        %v3358 = vperm.slane %v3354, %v3357
        %v3359 = vrot.slane %v3358, 4
        %v3360 = vsel %vm401, %v3359, %v3352
        %v3361 = vrot.slane %v2769, 4
        %v3362 = vsel %vm401, %v3361, %v2753
        %v3364 = vunpack.c.l.s4 1983009808
        %v3365 = vunpack.c.0.s8 %v3364
        %v3366 = vperm.slane %v3362, %v3365
        %v3367 = vrot.slane %v2777, 4
        %v3368 = vsel %vm401, %v3367, %v2761
        %v3370 = vunpack.c.l.s4 1983009808
        %v3371 = vunpack.c.0.s8 %v3370
        %v3372 = vperm.slane %v3368, %v3371
        %v3373 = vrot.slane %v2801, 4
        %v3374 = vsel %vm401, %v3373, %v2785
        %v3376 = vunpack.c.l.s4 1983009808
        %v3377 = vunpack.c.0.s8 %v3376
        %v3378 = vperm.slane %v3374, %v3377
        %v3379 = vrot.slane %v2809, 4
        %v3380 = vsel %vm401, %v3379, %v2793
        %v3382 = vunpack.c.l.s4 1983009808
        %v3383 = vunpack.c.0.s8 %v3382
        %v3384 = vperm.slane %v3380, %v3383
        %v3385 = vrot.slane %v3372, 4
        %v3386 = vsel %vm401, %v3385, %v3366
        %v3388 = vunpack.c.l.s4 1934713408
        %v3389 = vunpack.c.0.s8 %v3388
        %v3390 = vperm.slane %v3386, %v3389
        %v3391 = vrot.slane %v3384, 4
        %v3392 = vsel %vm401, %v3391, %v3378
        %v3394 = vunpack.c.l.s4 1934713408
        %v3395 = vunpack.c.0.s8 %v3394
        %v3396 = vperm.slane %v3392, %v3395
        %v3397 = vrot.slane %v3396, 4
        %v3398 = vsel %vm401, %v3397, %v3390
        %v3399 = vrot.slane %v2829, 4
        %v3400 = vsel %vm401, %v3399, %v2813
        %v3402 = vunpack.c.l.s4 1983009808
        %v3403 = vunpack.c.0.s8 %v3402
        %v3404 = vperm.slane %v3400, %v3403
        %v3405 = vrot.slane %v2837, 4
        %v3406 = vsel %vm401, %v3405, %v2821
        %v3408 = vunpack.c.l.s4 1983009808
        %v3409 = vunpack.c.0.s8 %v3408
        %v3410 = vperm.slane %v3406, %v3409
        %v3411 = vrot.slane %v2861, 4
        %v3412 = vsel %vm401, %v3411, %v2845
        %v3414 = vunpack.c.l.s4 1983009808
        %v3415 = vunpack.c.0.s8 %v3414
        %v3416 = vperm.slane %v3412, %v3415
        %v3417 = vrot.slane %v2869, 4
        %v3418 = vsel %vm401, %v3417, %v2853
        %v3420 = vunpack.c.l.s4 1983009808
        %v3421 = vunpack.c.0.s8 %v3420
        %v3422 = vperm.slane %v3418, %v3421
        %v3423 = vrot.slane %v3410, 4
        %v3424 = vsel %vm401, %v3423, %v3404
        %v3426 = vunpack.c.l.s4 1934713408
        %v3427 = vunpack.c.0.s8 %v3426
        %v3428 = vperm.slane %v3424, %v3427
        %v3429 = vrot.slane %v3422, 4
        %v3430 = vsel %vm401, %v3429, %v3416
        %v3432 = vunpack.c.l.s4 1934713408
        %v3433 = vunpack.c.0.s8 %v3432
        %v3434 = vperm.slane %v3430, %v3433
        %v3435 = vrot.slane %v3434, 4
        %v3436 = vsel %vm401, %v3435, %v3428
        %v3437 = vrot.slane %v2833, 4
        %v3438 = vsel %vm401, %v3437, %v2817
        %v3440 = vunpack.c.l.s4 1983009808
        %v3441 = vunpack.c.0.s8 %v3440
        %v3442 = vperm.slane %v3438, %v3441
        %v3443 = vrot.slane %v2841, 4
        %v3444 = vsel %vm401, %v3443, %v2825
        %v3446 = vunpack.c.l.s4 1983009808
        %v3447 = vunpack.c.0.s8 %v3446
        %v3448 = vperm.slane %v3444, %v3447
        %v3449 = vrot.slane %v2865, 4
        %v3450 = vsel %vm401, %v3449, %v2849
        %v3452 = vunpack.c.l.s4 1983009808
        %v3453 = vunpack.c.0.s8 %v3452
        %v3454 = vperm.slane %v3450, %v3453
        %v3455 = vrot.slane %v2873, 4
        %v3456 = vsel %vm401, %v3455, %v2857
        %v3458 = vunpack.c.l.s4 1983009808
        %v3459 = vunpack.c.0.s8 %v3458
        %v3460 = vperm.slane %v3456, %v3459
        %v3461 = vrot.slane %v3448, 4
        %v3462 = vsel %vm401, %v3461, %v3442
        %v3464 = vunpack.c.l.s4 1934713408
        %v3465 = vunpack.c.0.s8 %v3464
        %v3466 = vperm.slane %v3462, %v3465
        %v3467 = vrot.slane %v3460, 4
        %v3468 = vsel %vm401, %v3467, %v3454
        %v3470 = vunpack.c.l.s4 1934713408
        %v3471 = vunpack.c.0.s8 %v3470
        %v3472 = vperm.slane %v3468, %v3471
        %v3473 = vrot.slane %v3472, 4
        %v3474 = vsel %vm401, %v3473, %v3466
        %v3475 = vrot.slane %v2893, 4
        %v3476 = vsel %vm401, %v3475, %v2877
        %v3478 = vunpack.c.l.s4 1983009808
        %v3479 = vunpack.c.0.s8 %v3478
        %v3480 = vperm.slane %v3476, %v3479
        %v3481 = vrot.slane %v2901, 4
        %v3482 = vsel %vm401, %v3481, %v2885
        %v3484 = vunpack.c.l.s4 1983009808
        %v3485 = vunpack.c.0.s8 %v3484
        %v3486 = vperm.slane %v3482, %v3485
        %v3487 = vrot.slane %v2925, 4
        %v3488 = vsel %vm401, %v3487, %v2909
        %v3490 = vunpack.c.l.s4 1983009808
        %v3491 = vunpack.c.0.s8 %v3490
        %v3492 = vperm.slane %v3488, %v3491
        %v3493 = vrot.slane %v2933, 4
        %v3494 = vsel %vm401, %v3493, %v2917
        %v3496 = vunpack.c.l.s4 1983009808
        %v3497 = vunpack.c.0.s8 %v3496
        %v3498 = vperm.slane %v3494, %v3497
        %v3499 = vrot.slane %v3486, 4
        %v3500 = vsel %vm401, %v3499, %v3480
        %v3502 = vunpack.c.l.s4 1934713408
        %v3503 = vunpack.c.0.s8 %v3502
        %v3504 = vperm.slane %v3500, %v3503
        %v3505 = vrot.slane %v3498, 4
        %v3506 = vsel %vm401, %v3505, %v3492
        %v3508 = vunpack.c.l.s4 1934713408
        %v3509 = vunpack.c.0.s8 %v3508
        %v3510 = vperm.slane %v3506, %v3509
        %v3511 = vrot.slane %v3510, 4
        %v3512 = vsel %vm401, %v3511, %v3504
        %v3513 = vrot.slane %v2897, 4
        %v3514 = vsel %vm401, %v3513, %v2881
        %v3516 = vunpack.c.l.s4 1983009808
        %v3517 = vunpack.c.0.s8 %v3516
        %v3518 = vperm.slane %v3514, %v3517
        %v3519 = vrot.slane %v2905, 4
        %v3520 = vsel %vm401, %v3519, %v2889
        %v3522 = vunpack.c.l.s4 1983009808
        %v3523 = vunpack.c.0.s8 %v3522
        %v3524 = vperm.slane %v3520, %v3523
        %v3525 = vrot.slane %v2929, 4
        %v3526 = vsel %vm401, %v3525, %v2913
        %v3528 = vunpack.c.l.s4 1983009808
        %v3529 = vunpack.c.0.s8 %v3528
        %v3530 = vperm.slane %v3526, %v3529
        %v3531 = vrot.slane %v2937, 4
        %v3532 = vsel %vm401, %v3531, %v2921
        %v3534 = vunpack.c.l.s4 1983009808
        %v3535 = vunpack.c.0.s8 %v3534
        %v3536 = vperm.slane %v3532, %v3535
        %v3537 = vrot.slane %v3524, 4
        %v3538 = vsel %vm401, %v3537, %v3518
        %v3540 = vunpack.c.l.s4 1934713408
        %v3541 = vunpack.c.0.s8 %v3540
        %v3542 = vperm.slane %v3538, %v3541
        %v3543 = vrot.slane %v3536, 4
        %v3544 = vsel %vm401, %v3543, %v3530
        %v3546 = vunpack.c.l.s4 1934713408
        %v3547 = vunpack.c.0.s8 %v3546
        %v3548 = vperm.slane %v3544, %v3547
        %v3549 = vrot.slane %v3548, 4
        %v3550 = vsel %vm401, %v3549, %v3542
        %v3551 = vrot.slane %v2957, 4
        %v3552 = vsel %vm401, %v3551, %v2941
        %v3554 = vunpack.c.l.s4 1983009808
        %v3555 = vunpack.c.0.s8 %v3554
        %v3556 = vperm.slane %v3552, %v3555
        %v3557 = vrot.slane %v2965, 4
        %v3558 = vsel %vm401, %v3557, %v2949
        %v3560 = vunpack.c.l.s4 1983009808
        %v3561 = vunpack.c.0.s8 %v3560
        %v3562 = vperm.slane %v3558, %v3561
        %v3563 = vrot.slane %v2989, 4
        %v3564 = vsel %vm401, %v3563, %v2973
        %v3566 = vunpack.c.l.s4 1983009808
        %v3567 = vunpack.c.0.s8 %v3566
        %v3568 = vperm.slane %v3564, %v3567
        %v3569 = vrot.slane %v2997, 4
        %v3570 = vsel %vm401, %v3569, %v2981
        %v3572 = vunpack.c.l.s4 1983009808
        %v3573 = vunpack.c.0.s8 %v3572
        %v3574 = vperm.slane %v3570, %v3573
        %v3575 = vrot.slane %v3562, 4
        %v3576 = vsel %vm401, %v3575, %v3556
        %v3578 = vunpack.c.l.s4 1934713408
        %v3579 = vunpack.c.0.s8 %v3578
        %v3580 = vperm.slane %v3576, %v3579
        %v3581 = vrot.slane %v3574, 4
        %v3582 = vsel %vm401, %v3581, %v3568
        %v3584 = vunpack.c.l.s4 1934713408
        %v3585 = vunpack.c.0.s8 %v3584
        %v3586 = vperm.slane %v3582, %v3585
        %v3587 = vrot.slane %v3586, 4
        %v3588 = vsel %vm401, %v3587, %v3580
        %v3589 = vrot.slane %v2961, 4
        %v3590 = vsel %vm401, %v3589, %v2945
        %v3592 = vunpack.c.l.s4 1983009808
        %v3593 = vunpack.c.0.s8 %v3592
        %v3594 = vperm.slane %v3590, %v3593
        %v3595 = vrot.slane %v2969, 4
        %v3596 = vsel %vm401, %v3595, %v2953
        %v3598 = vunpack.c.l.s4 1983009808
        %v3599 = vunpack.c.0.s8 %v3598
        %v3600 = vperm.slane %v3596, %v3599
        %v3601 = vrot.slane %v2993, 4
        %v3602 = vsel %vm401, %v3601, %v2977
        %v3604 = vunpack.c.l.s4 1983009808
        %v3605 = vunpack.c.0.s8 %v3604
        %v3606 = vperm.slane %v3602, %v3605
        %v3607 = vrot.slane %v3001, 4
        %v3608 = vsel %vm401, %v3607, %v2985
        %v3610 = vunpack.c.l.s4 1983009808
        %v3611 = vunpack.c.0.s8 %v3610
        %v3612 = vperm.slane %v3608, %v3611
        %v3613 = vrot.slane %v3600, 4
        %v3614 = vsel %vm401, %v3613, %v3594
        %v3616 = vunpack.c.l.s4 1934713408
        %v3617 = vunpack.c.0.s8 %v3616
        %v3618 = vperm.slane %v3614, %v3617
        %v3619 = vrot.slane %v3612, 4
        %v3620 = vsel %vm401, %v3619, %v3606
        %v3622 = vunpack.c.l.s4 1934713408
        %v3623 = vunpack.c.0.s8 %v3622
        %v3624 = vperm.slane %v3620, %v3623
        %v3625 = vrot.slane %v3624, 4
        %v3626 = vsel %vm401, %v3625, %v3618
        %v3627 = vrot.slane %v3021, 4
        %v3628 = vsel %vm401, %v3627, %v3005
        %v3630 = vunpack.c.l.s4 1983009808
        %v3631 = vunpack.c.0.s8 %v3630
        %v3632 = vperm.slane %v3628, %v3631
        %v3633 = vrot.slane %v3029, 4
        %v3634 = vsel %vm401, %v3633, %v3013
        %v3636 = vunpack.c.l.s4 1983009808
        %v3637 = vunpack.c.0.s8 %v3636
        %v3638 = vperm.slane %v3634, %v3637
        %v3639 = vrot.slane %v3053, 4
        %v3640 = vsel %vm401, %v3639, %v3037
        %v3642 = vunpack.c.l.s4 1983009808
        %v3643 = vunpack.c.0.s8 %v3642
        %v3644 = vperm.slane %v3640, %v3643
        %v3645 = vrot.slane %v3061, 4
        %v3646 = vsel %vm401, %v3645, %v3045
        %v3648 = vunpack.c.l.s4 1983009808
        %v3649 = vunpack.c.0.s8 %v3648
        %v3650 = vperm.slane %v3646, %v3649
        %v3651 = vrot.slane %v3638, 4
        %v3652 = vsel %vm401, %v3651, %v3632
        %v3654 = vunpack.c.l.s4 1934713408
        %v3655 = vunpack.c.0.s8 %v3654
        %v3656 = vperm.slane %v3652, %v3655
        %v3657 = vrot.slane %v3650, 4
        %v3658 = vsel %vm401, %v3657, %v3644
        %v3660 = vunpack.c.l.s4 1934713408
        %v3661 = vunpack.c.0.s8 %v3660
        %v3662 = vperm.slane %v3658, %v3661
        %v3663 = vrot.slane %v3662, 4
        %v3664 = vsel %vm401, %v3663, %v3656
        %v3665 = vrot.slane %v3025, 4
        %v3666 = vsel %vm401, %v3665, %v3009
        %v3668 = vunpack.c.l.s4 1983009808
        %v3669 = vunpack.c.0.s8 %v3668
        %v3670 = vperm.slane %v3666, %v3669
        %v3671 = vrot.slane %v3033, 4
        %v3672 = vsel %vm401, %v3671, %v3017
        %v3674 = vunpack.c.l.s4 1983009808
        %v3675 = vunpack.c.0.s8 %v3674
        %v3676 = vperm.slane %v3672, %v3675
        %v3677 = vrot.slane %v3057, 4
        %v3678 = vsel %vm401, %v3677, %v3041
        %v3680 = vunpack.c.l.s4 1983009808
        %v3681 = vunpack.c.0.s8 %v3680
        %v3682 = vperm.slane %v3678, %v3681
        %v3683 = vrot.slane %v3065, 4
        %v3684 = vsel %vm401, %v3683, %v3049
        %v3686 = vunpack.c.l.s4 1983009808
        %v3687 = vunpack.c.0.s8 %v3686
        %v3688 = vperm.slane %v3684, %v3687
        %v3689 = vrot.slane %v3676, 4
        %v3690 = vsel %vm401, %v3689, %v3670
        %v3692 = vunpack.c.l.s4 1934713408
        %v3693 = vunpack.c.0.s8 %v3692
        %v3694 = vperm.slane %v3690, %v3693
        %v3695 = vrot.slane %v3688, 4
        %v3696 = vsel %vm401, %v3695, %v3682
        %v3698 = vunpack.c.l.s4 1934713408
        %v3699 = vunpack.c.0.s8 %v3698
        %v3700 = vperm.slane %v3696, %v3699
        %v3701 = vrot.slane %v3700, 4
        %v3702 = vsel %vm401, %v3701, %v3694
        %v3703 = vrot.slane %v3085, 4
        %v3704 = vsel %vm401, %v3703, %v3069
        %v3706 = vunpack.c.l.s4 1983009808
        %v3707 = vunpack.c.0.s8 %v3706
        %v3708 = vperm.slane %v3704, %v3707
        %v3709 = vrot.slane %v3093, 4
        %v3710 = vsel %vm401, %v3709, %v3077
        %v3712 = vunpack.c.l.s4 1983009808
        %v3713 = vunpack.c.0.s8 %v3712
        %v3714 = vperm.slane %v3710, %v3713
        %v3715 = vrot.slane %v3117, 4
        %v3716 = vsel %vm401, %v3715, %v3101
        %v3718 = vunpack.c.l.s4 1983009808
        %v3719 = vunpack.c.0.s8 %v3718
        %v3720 = vperm.slane %v3716, %v3719
        %v3721 = vrot.slane %v3125, 4
        %v3722 = vsel %vm401, %v3721, %v3109
        %v3724 = vunpack.c.l.s4 1983009808
        %v3725 = vunpack.c.0.s8 %v3724
        %v3726 = vperm.slane %v3722, %v3725
        %v3727 = vrot.slane %v3714, 4
        %v3728 = vsel %vm401, %v3727, %v3708
        %v3730 = vunpack.c.l.s4 1934713408
        %v3731 = vunpack.c.0.s8 %v3730
        %v3732 = vperm.slane %v3728, %v3731
        %v3733 = vrot.slane %v3726, 4
        %v3734 = vsel %vm401, %v3733, %v3720
        %v3736 = vunpack.c.l.s4 1934713408
        %v3737 = vunpack.c.0.s8 %v3736
        %v3738 = vperm.slane %v3734, %v3737
        %v3739 = vrot.slane %v3738, 4
        %v3740 = vsel %vm401, %v3739, %v3732
        %v3741 = vrot.slane %v3089, 4
        %v3742 = vsel %vm401, %v3741, %v3073
        %v3744 = vunpack.c.l.s4 1983009808
        %v3745 = vunpack.c.0.s8 %v3744
        %v3746 = vperm.slane %v3742, %v3745
        %v3747 = vrot.slane %v3097, 4
        %v3748 = vsel %vm401, %v3747, %v3081
        %v3750 = vunpack.c.l.s4 1983009808
        %v3751 = vunpack.c.0.s8 %v3750
        %v3752 = vperm.slane %v3748, %v3751
        %v3753 = vrot.slane %v3121, 4
        %v3754 = vsel %vm401, %v3753, %v3105
        %v3756 = vunpack.c.l.s4 1983009808
        %v3757 = vunpack.c.0.s8 %v3756
        %v3758 = vperm.slane %v3754, %v3757
        %v3759 = vrot.slane %v3129, 4
        %v3760 = vsel %vm401, %v3759, %v3113
        %v3762 = vunpack.c.l.s4 1983009808
        %v3763 = vunpack.c.0.s8 %v3762
        %v3764 = vperm.slane %v3760, %v3763
        %v3765 = vrot.slane %v3752, 4
        %v3766 = vsel %vm401, %v3765, %v3746
        %v3768 = vunpack.c.l.s4 1934713408
        %v3769 = vunpack.c.0.s8 %v3768
        %v3770 = vperm.slane %v3766, %v3769
        %v3771 = vrot.slane %v3764, 4
        %v3772 = vsel %vm401, %v3771, %v3758
        %v3774 = vunpack.c.l.s4 1934713408
        %v3775 = vunpack.c.0.s8 %v3774
        %v3776 = vperm.slane %v3772, %v3775
        %v3777 = vrot.slane %v3776, 4
        %v3778 = vsel %vm401, %v3777, %v3770
        %v3779 = vrot.slane %v3149, 4
        %v3780 = vsel %vm401, %v3779, %v3133
        %v3782 = vunpack.c.l.s4 1983009808
        %v3783 = vunpack.c.0.s8 %v3782
        %v3784 = vperm.slane %v3780, %v3783
        %v3785 = vrot.slane %v3157, 4
        %v3786 = vsel %vm401, %v3785, %v3141
        %v3788 = vunpack.c.l.s4 1983009808
        %v3789 = vunpack.c.0.s8 %v3788
        %v3790 = vperm.slane %v3786, %v3789
        %v3791 = vrot.slane %v3181, 4
        %v3792 = vsel %vm401, %v3791, %v3165
        %v3794 = vunpack.c.l.s4 1983009808
        %v3795 = vunpack.c.0.s8 %v3794
        %v3796 = vperm.slane %v3792, %v3795
        %v3797 = vrot.slane %v3189, 4
        %v3798 = vsel %vm401, %v3797, %v3173
        %v3800 = vunpack.c.l.s4 1983009808
        %v3801 = vunpack.c.0.s8 %v3800
        %v3802 = vperm.slane %v3798, %v3801
        %v3803 = vrot.slane %v3790, 4
        %v3804 = vsel %vm401, %v3803, %v3784
        %v3806 = vunpack.c.l.s4 1934713408
        %v3807 = vunpack.c.0.s8 %v3806
        %v3808 = vperm.slane %v3804, %v3807
        %v3809 = vrot.slane %v3802, 4
        %v3810 = vsel %vm401, %v3809, %v3796
        %v3812 = vunpack.c.l.s4 1934713408
        %v3813 = vunpack.c.0.s8 %v3812
        %v3814 = vperm.slane %v3810, %v3813
        %v3815 = vrot.slane %v3814, 4
        %v3816 = vsel %vm401, %v3815, %v3808
        %v3817 = vrot.slane %v3153, 4
        %v3818 = vsel %vm401, %v3817, %v3137
        %v3820 = vunpack.c.l.s4 1983009808
        %v3821 = vunpack.c.0.s8 %v3820
        %v3822 = vperm.slane %v3818, %v3821
        %v3823 = vrot.slane %v3161, 4
        %v3824 = vsel %vm401, %v3823, %v3145
        %v3826 = vunpack.c.l.s4 1983009808
        %v3827 = vunpack.c.0.s8 %v3826
        %v3828 = vperm.slane %v3824, %v3827
        %v3829 = vrot.slane %v3185, 4
        %v3830 = vsel %vm401, %v3829, %v3169
        %v3832 = vunpack.c.l.s4 1983009808
        %v3833 = vunpack.c.0.s8 %v3832
        %v3834 = vperm.slane %v3830, %v3833
        %v3835 = vrot.slane %v3193, 4
        %v3836 = vsel %vm401, %v3835, %v3177
        %v3838 = vunpack.c.l.s4 1983009808
        %v3839 = vunpack.c.0.s8 %v3838
        %v3840 = vperm.slane %v3836, %v3839
        %v3841 = vrot.slane %v3828, 4
        %v3842 = vsel %vm401, %v3841, %v3822
        %v3844 = vunpack.c.l.s4 1934713408
        %v3845 = vunpack.c.0.s8 %v3844
        %v3846 = vperm.slane %v3842, %v3845
        %v3847 = vrot.slane %v3840, 4
        %v3848 = vsel %vm401, %v3847, %v3834
        %v3850 = vunpack.c.l.s4 1934713408
        %v3851 = vunpack.c.0.s8 %v3850
        %v3852 = vperm.slane %v3848, %v3851
        %v3853 = vrot.slane %v3852, 4
        %v3854 = vsel %vm401, %v3853, %v3846
        %v3855 = vrot.slane %v3213, 4
        %v3856 = vsel %vm401, %v3855, %v3197
        %v3858 = vunpack.c.l.s4 1983009808
        %v3859 = vunpack.c.0.s8 %v3858
        %v3860 = vperm.slane %v3856, %v3859
        %v3861 = vrot.slane %v3221, 4
        %v3862 = vsel %vm401, %v3861, %v3205
        %v3864 = vunpack.c.l.s4 1983009808
        %v3865 = vunpack.c.0.s8 %v3864
        %v3866 = vperm.slane %v3862, %v3865
        %v3867 = vrot.slane %v3245, 4
        %v3868 = vsel %vm401, %v3867, %v3229
        %v3870 = vunpack.c.l.s4 1983009808
        %v3871 = vunpack.c.0.s8 %v3870
        %v3872 = vperm.slane %v3868, %v3871
        %v3873 = vrot.slane %v3253, 4
        %v3874 = vsel %vm401, %v3873, %v3237
        %v3876 = vunpack.c.l.s4 1983009808
        %v3877 = vunpack.c.0.s8 %v3876
        %v3878 = vperm.slane %v3874, %v3877
        %v3879 = vrot.slane %v3866, 4
        %v3880 = vsel %vm401, %v3879, %v3860
        %v3882 = vunpack.c.l.s4 1934713408
        %v3883 = vunpack.c.0.s8 %v3882
        %v3884 = vperm.slane %v3880, %v3883
        %v3885 = vrot.slane %v3878, 4
        %v3886 = vsel %vm401, %v3885, %v3872
        %v3888 = vunpack.c.l.s4 1934713408
        %v3889 = vunpack.c.0.s8 %v3888
        %v3890 = vperm.slane %v3886, %v3889
        %v3891 = vrot.slane %v3890, 4
        %v3892 = vsel %vm401, %v3891, %v3884
        %v3893 = vrot.slane %v3217, 4
        %v3894 = vsel %vm401, %v3893, %v3201
        %v3896 = vunpack.c.l.s4 1983009808
        %v3897 = vunpack.c.0.s8 %v3896
        %v3898 = vperm.slane %v3894, %v3897
        %v3899 = vrot.slane %v3225, 4
        %v3900 = vsel %vm401, %v3899, %v3209
        %v3902 = vunpack.c.l.s4 1983009808
        %v3903 = vunpack.c.0.s8 %v3902
        %v3904 = vperm.slane %v3900, %v3903
        %v3905 = vrot.slane %v3249, 4
        %v3906 = vsel %vm401, %v3905, %v3233
        %v3908 = vunpack.c.l.s4 1983009808
        %v3909 = vunpack.c.0.s8 %v3908
        %v3910 = vperm.slane %v3906, %v3909
        %v3911 = vrot.slane %v3257, 4
        %v3912 = vsel %vm401, %v3911, %v3241
        %v3914 = vunpack.c.l.s4 1983009808
        %v3915 = vunpack.c.0.s8 %v3914
        %v3916 = vperm.slane %v3912, %v3915
        %v3917 = vrot.slane %v3904, 4
        %v3918 = vsel %vm401, %v3917, %v3898
        %v3920 = vunpack.c.l.s4 1934713408
        %v3921 = vunpack.c.0.s8 %v3920
        %v3922 = vperm.slane %v3918, %v3921
        %v3923 = vrot.slane %v3916, 4
        %v3924 = vsel %vm401, %v3923, %v3910
        %v3926 = vunpack.c.l.s4 1934713408
        %v3927 = vunpack.c.0.s8 %v3926
        %v3928 = vperm.slane %v3924, %v3927
        %v3929 = vrot.slane %v3928, 4
        %v3930 = vsel %vm401, %v3929, %v3922
        %v3931 = vrot.slane %v3277, 4
        %v3932 = vsel %vm401, %v3931, %v3261
        %v3934 = vunpack.c.l.s4 1983009808
        %v3935 = vunpack.c.0.s8 %v3934
        %v3936 = vperm.slane %v3932, %v3935
        %v3937 = vrot.slane %v3285, 4
        %v3938 = vsel %vm401, %v3937, %v3269
        %v3940 = vunpack.c.l.s4 1983009808
        %v3941 = vunpack.c.0.s8 %v3940
        %v3942 = vperm.slane %v3938, %v3941
        %v3943 = vrot.slane %v3309, 4
        %v3944 = vsel %vm401, %v3943, %v3293
        %v3946 = vunpack.c.l.s4 1983009808
        %v3947 = vunpack.c.0.s8 %v3946
        %v3948 = vperm.slane %v3944, %v3947
        %v3949 = vrot.slane %v3317, 4
        %v3950 = vsel %vm401, %v3949, %v3301
        %v3952 = vunpack.c.l.s4 1983009808
        %v3953 = vunpack.c.0.s8 %v3952
        %v3954 = vperm.slane %v3950, %v3953
        %v3955 = vrot.slane %v3942, 4
        %v3956 = vsel %vm401, %v3955, %v3936
        %v3958 = vunpack.c.l.s4 1934713408
        %v3959 = vunpack.c.0.s8 %v3958
        %v3960 = vperm.slane %v3956, %v3959
        %v3961 = vrot.slane %v3954, 4
        %v3962 = vsel %vm401, %v3961, %v3948
        %v3964 = vunpack.c.l.s4 1934713408
        %v3965 = vunpack.c.0.s8 %v3964
        %v3966 = vperm.slane %v3962, %v3965
        %v3967 = vrot.slane %v3966, 4
        %v3968 = vsel %vm401, %v3967, %v3960
        %v3969 = vrot.slane %v3281, 4
        %v3970 = vsel %vm401, %v3969, %v3265
        %v3972 = vunpack.c.l.s4 1983009808
        %v3973 = vunpack.c.0.s8 %v3972
        %v3974 = vperm.slane %v3970, %v3973
        %v3975 = vrot.slane %v3289, 4
        %v3976 = vsel %vm401, %v3975, %v3273
        %v3978 = vunpack.c.l.s4 1983009808
        %v3979 = vunpack.c.0.s8 %v3978
        %v3980 = vperm.slane %v3976, %v3979
        %v3981 = vrot.slane %v3313, 4
        %v3982 = vsel %vm401, %v3981, %v3297
        %v3984 = vunpack.c.l.s4 1983009808
        %v3985 = vunpack.c.0.s8 %v3984
        %v3986 = vperm.slane %v3982, %v3985
        %v3987 = vrot.slane %v3321, 4
        %v3988 = vsel %vm401, %v3987, %v3305
        %v3990 = vunpack.c.l.s4 1983009808
        %v3991 = vunpack.c.0.s8 %v3990
        %v3992 = vperm.slane %v3988, %v3991
        %v3993 = vrot.slane %v3980, 4
        %v3994 = vsel %vm401, %v3993, %v3974
        %v3996 = vunpack.c.l.s4 1934713408
        %v3997 = vunpack.c.0.s8 %v3996
        %v3998 = vperm.slane %v3994, %v3997
        %v3999 = vrot.slane %v3992, 4
        %v4000 = vsel %vm401, %v3999, %v3986
        %v4002 = vunpack.c.l.s4 1934713408
        %v4003 = vunpack.c.0.s8 %v4002
        %v4004 = vperm.slane %v4000, %v4003
        %v4005 = vrot.slane %v4004, 4
        %v4006 = vsel %vm401, %v4005, %v3998
        %v4009 = vpack.i.b16 %v3398, %v3360
        %v4010 = vshrl.u32 %v3360, 16
        %v4011 = vshrl.u32 %v3398, 16
        %v4012 = vpack.i.b16 %v4011, %v4010
        %v4015 = vpack.i.b16 %v3474, %v3436
        %v4016 = vshrl.u32 %v3436, 16
        %v4017 = vshrl.u32 %v3474, 16
        %v4018 = vpack.i.b16 %v4017, %v4016
        %v4021 = vpack.i.b16 %v3550, %v3512
        %v4022 = vshrl.u32 %v3512, 16
        %v4023 = vshrl.u32 %v3550, 16
        %v4024 = vpack.i.b16 %v4023, %v4022
        %v4027 = vpack.i.b16 %v3626, %v3588
        %v4028 = vshrl.u32 %v3588, 16
        %v4029 = vshrl.u32 %v3626, 16
        %v4030 = vpack.i.b16 %v4029, %v4028
        %v4033 = vpack.i.b16 %v3702, %v3664
        %v4034 = vshrl.u32 %v3664, 16
        %v4035 = vshrl.u32 %v3702, 16
        %v4036 = vpack.i.b16 %v4035, %v4034
        %v4039 = vpack.i.b16 %v3778, %v3740
        %v4040 = vshrl.u32 %v3740, 16
        %v4041 = vshrl.u32 %v3778, 16
        %v4042 = vpack.i.b16 %v4041, %v4040
        %v4045 = vpack.i.b16 %v3854, %v3816
        %v4046 = vshrl.u32 %v3816, 16
        %v4047 = vshrl.u32 %v3854, 16
        %v4048 = vpack.i.b16 %v4047, %v4046
        %v4051 = vpack.i.b16 %v3930, %v3892
        %v4052 = vshrl.u32 %v3892, 16
        %v4053 = vshrl.u32 %v3930, 16
        %v4054 = vpack.i.b16 %v4053, %v4052
        %v4057 = vpack.i.b16 %v4006, %v3968
        %v4058 = vshrl.u32 %v3968, 16
        %v4059 = vshrl.u32 %v4006, 16
        %v4060 = vpack.i.b16 %v4059, %v4058
        %4061 = vrot.lane.b32.xlu0 %v4012, 4
        %v4062 = vpop.permute.xlu0 %4061
        %4063 = vrot.lane.b32.xlu0 %v4018, 4
        %v4064 = vpop.permute.xlu0 %4063
        %4065 = vrot.lane.b32.xlu0 %v4024, 4
        %v4066 = vpop.permute.xlu0 %4065
        %4067 = vrot.lane.b32.xlu0 %v4030, 4
        %v4068 = vpop.permute.xlu0 %4067
        %4069 = vrot.lane.b32.xlu0 %v4036, 4
        %v4070 = vpop.permute.xlu0 %4069
        %4071 = vrot.lane.b32.xlu0 %v4042, 4
        %v4072 = vpop.permute.xlu0 %4071
        %4073 = vrot.lane.b32.xlu0 %v4048, 4
        %v4074 = vpop.permute.xlu0 %4073
        %4075 = vrot.lane.b32.xlu0 %v4054, 4
        %v4076 = vpop.permute.xlu0 %4075
        %4077 = vrot.lane.b32.xlu0 %v4060, 4
        %v4078 = vpop.permute.xlu0 %4077
        %vm4079 = vcmask 31744
        %v4082 = vsel %vm4079, %v4009, %v4062
        %v4085 = vsel %vm4079, %v4015, %v4064
        %v4088 = vsel %vm4079, %v4021, %v4066
        %v4091 = vsel %vm4079, %v4027, %v4068
        %v4094 = vsel %vm4079, %v4033, %v4070
        %v4097 = vsel %vm4079, %v4039, %v4072
        %v4100 = vsel %vm4079, %v4045, %v4074
        %v4103 = vsel %vm4079, %v4051, %v4076
        %v4106 = vsel %vm4079, %v4057, %v4078
        %v4107 = vld [vmem:[%s3] sm:$0xf]
        %vm4108 = vcmask 64512
        %v4109 = vsel %vm4108, %v4082, 0
        %v4111 = vsel %vm4108, %v4085, 0
        %v4113 = vsel %vm4108, %v4088, 0
        %v4115 = vsel %vm4108, %v4091, 0
        %v4117 = vsel %vm4108, %v4094, 0
        %v4119 = vsel %vm4108, %v4097, 0
        %v4121 = vsel %vm4108, %v4100, 0
        %v4123 = vsel %vm4108, %v4103, 0
        %v4125 = vsel %vm4108, %v4106, 0
        %vm4127 = vcmask 1043456
        %v4129 = vsel %vm4127, %v4107, 0
        %4131 = vmatpush.bf16.msra.mxu0 0
        %4132 = vmatpush.bf16.msra.mxu0 0
        %4133 = vmatpush.bf16.msra.mxu0 0
        %4134 = vmatpush.bf16.msra.mxu0 0
        %4135 = vmatpush.bf16.msra.mxu0 0
        %4136 = vmatpush.bf16.msra.mxu0 0
        %4137 = vmatpush.bf16.msra.mxu0 0
        %4138 = vmatpush.bf16.msra.mxu0 %v4129
        %4139 = vmatmul.bf16.gmra.mxu0 %v4109
        %v4140 = vpop.f32.mrf.mxu0
        %v4141 = vadd.f32 0.0, %v4140
        %v4142 = vpop.f32.mrf.mxu0
        %v4143 = vadd.f32 0.0, %v4142
        %4144 = vmatmul.bf16.gmra.mxu0 %v4111
        %v4145 = vpop.f32.mrf.mxu0
        %v4146 = vadd.f32 0.0, %v4145
        %v4147 = vpop.f32.mrf.mxu0
        %v4148 = vadd.f32 0.0, %v4147
        %4149 = vmatmul.bf16.gmra.mxu0 %v4113
        %v4150 = vpop.f32.mrf.mxu0
        %v4151 = vadd.f32 0.0, %v4150
        %v4152 = vpop.f32.mrf.mxu0
        %v4153 = vadd.f32 0.0, %v4152
        %4154 = vmatmul.bf16.gmra.mxu0 %v4115
        %v4155 = vpop.f32.mrf.mxu0
        %v4156 = vadd.f32 0.0, %v4155
        %v4157 = vpop.f32.mrf.mxu0
        %v4158 = vadd.f32 0.0, %v4157
        %4159 = vmatmul.bf16.gmra.mxu0 %v4117
        %v4160 = vpop.f32.mrf.mxu0
        %v4161 = vadd.f32 0.0, %v4160
        %v4162 = vpop.f32.mrf.mxu0
        %v4163 = vadd.f32 0.0, %v4162
        %4164 = vmatmul.bf16.gmra.mxu0 %v4119
        %v4165 = vpop.f32.mrf.mxu0
        %v4166 = vadd.f32 0.0, %v4165
        %v4167 = vpop.f32.mrf.mxu0
        %v4168 = vadd.f32 0.0, %v4167
        %4169 = vmatmul.bf16.gmra.mxu0 %v4121
        %v4170 = vpop.f32.mrf.mxu0
        %v4171 = vadd.f32 0.0, %v4170
        %v4172 = vpop.f32.mrf.mxu0
        %v4173 = vadd.f32 0.0, %v4172
        %4174 = vmatmul.bf16.gmra.mxu0 %v4123
        %v4175 = vpop.f32.mrf.mxu0
        %v4176 = vadd.f32 0.0, %v4175
        %v4177 = vpop.f32.mrf.mxu0
        %v4178 = vadd.f32 0.0, %v4177
        %4179 = vmatmul.bf16.gmra.mxu0 %v4125
        %v4180 = vpop.f32.mrf.mxu0
        %v4181 = vadd.f32 0.0, %v4180
        %v4182 = vpop.f32.mrf.mxu0
        %v4183 = vadd.f32 0.0, %v4182
        %4184 = vdwg.mxu0
        %v4185 = vsel %vm4108, %v4141, 0.0
        %v4186 = vsel %vm4108, %v4143, 0.0
        %v4187 = vadd.f32 %v4185, %v4186
        %v4188 = vsel %vm4108, %v4146, 0.0
        %v4189 = vadd.f32 %v4187, %v4188
        %v4190 = vsel %vm4108, %v4148, 0.0
        %v4191 = vadd.f32 %v4189, %v4190
        %v4192 = vsel %vm4108, %v4151, 0.0
        %v4193 = vadd.f32 %v4191, %v4192
        %v4194 = vsel %vm4108, %v4153, 0.0
        %v4195 = vadd.f32 %v4193, %v4194
        %v4196 = vsel %vm4108, %v4156, 0.0
        %v4197 = vadd.f32 %v4195, %v4196
        %v4198 = vsel %vm4108, %v4158, 0.0
        %v4199 = vadd.f32 %v4197, %v4198
        %v4200 = vsel %vm4108, %v4161, 0.0
        %v4201 = vadd.f32 %v4199, %v4200
        %v4202 = vsel %vm4108, %v4163, 0.0
        %v4203 = vadd.f32 %v4201, %v4202
        %v4204 = vsel %vm4108, %v4166, 0.0
        %v4205 = vadd.f32 %v4203, %v4204
        %v4206 = vsel %vm4108, %v4168, 0.0
        %v4207 = vadd.f32 %v4205, %v4206
        %v4208 = vsel %vm4108, %v4171, 0.0
        %v4209 = vadd.f32 %v4207, %v4208
        %v4210 = vsel %vm4108, %v4173, 0.0
        %v4211 = vadd.f32 %v4209, %v4210
        %v4212 = vsel %vm4108, %v4176, 0.0
        %v4213 = vadd.f32 %v4211, %v4212
        %v4214 = vsel %vm4108, %v4178, 0.0
        %v4215 = vadd.f32 %v4213, %v4214
        %v4216 = vsel %vm4108, %v4181, 0.0
        %v4217 = vadd.f32 %v4215, %v4216
        %v4218 = vsel %vm4108, %v4183, 0.0
        %v4219 = vadd.f32 %v4217, %v4218
        %v4220 = vrot.slane %v4219, 4
        %v4221 = vadd.f32 %v4219, %v4220
        %v4222 = vrot.slane %v4221, 2
        %v4223 = vadd.f32 %v4221, %v4222
        %v4224 = vrot.slane %v4223, 1
        %v4225 = vadd.f32 %v4223, %v4224
        %v4226 = vmul.f32 %v4141, %v4141
        %v4227 = vmul.f32 %v4143, %v4143
        %v4228 = vmul.f32 %v4146, %v4146
        %v4229 = vmul.f32 %v4148, %v4148
        %v4230 = vmul.f32 %v4151, %v4151
        %v4231 = vmul.f32 %v4153, %v4153
        %v4232 = vmul.f32 %v4156, %v4156
        %v4233 = vmul.f32 %v4158, %v4158
        %v4234 = vmul.f32 %v4161, %v4161
        %v4235 = vmul.f32 %v4163, %v4163
        %v4236 = vmul.f32 %v4166, %v4166
        %v4237 = vmul.f32 %v4168, %v4168
        %v4238 = vmul.f32 %v4171, %v4171
        %v4239 = vmul.f32 %v4173, %v4173
        %v4240 = vmul.f32 %v4176, %v4176
        %v4241 = vmul.f32 %v4178, %v4178
        %v4242 = vmul.f32 %v4181, %v4181
        %v4243 = vmul.f32 %v4183, %v4183
        %v4244 = vsel %vm4108, %v4226, 0.0
        %v4245 = vsel %vm4108, %v4227, 0.0
        %v4246 = vadd.f32 %v4244, %v4245
        %v4247 = vsel %vm4108, %v4228, 0.0
        %v4248 = vadd.f32 %v4246, %v4247
        %v4249 = vsel %vm4108, %v4229, 0.0
        %v4250 = vadd.f32 %v4248, %v4249
        %v4251 = vsel %vm4108, %v4230, 0.0
        %v4252 = vadd.f32 %v4250, %v4251
        %v4253 = vsel %vm4108, %v4231, 0.0
        %v4254 = vadd.f32 %v4252, %v4253
        %v4255 = vsel %vm4108, %v4232, 0.0
        %v4256 = vadd.f32 %v4254, %v4255
        %v4257 = vsel %vm4108, %v4233, 0.0
        %v4258 = vadd.f32 %v4256, %v4257
        %v4259 = vsel %vm4108, %v4234, 0.0
        %v4260 = vadd.f32 %v4258, %v4259
        %v4261 = vsel %vm4108, %v4235, 0.0
        %v4262 = vadd.f32 %v4260, %v4261
        %v4263 = vsel %vm4108, %v4236, 0.0
        %v4264 = vadd.f32 %v4262, %v4263
        %v4265 = vsel %vm4108, %v4237, 0.0
        %v4266 = vadd.f32 %v4264, %v4265
        %v4267 = vsel %vm4108, %v4238, 0.0
        %v4268 = vadd.f32 %v4266, %v4267
        %v4269 = vsel %vm4108, %v4239, 0.0
        %v4270 = vadd.f32 %v4268, %v4269
        %v4271 = vsel %vm4108, %v4240, 0.0
        %v4272 = vadd.f32 %v4270, %v4271
        %v4273 = vsel %vm4108, %v4241, 0.0
        %v4274 = vadd.f32 %v4272, %v4273
        %v4275 = vsel %vm4108, %v4242, 0.0
        %v4276 = vadd.f32 %v4274, %v4275
        %v4277 = vsel %vm4108, %v4243, 0.0
        %v4278 = vadd.f32 %v4276, %v4277
        %v4279 = vrot.slane %v4278, 4
        %v4280 = vadd.f32 %v4278, %v4279
        %v4281 = vrot.slane %v4280, 2
        %v4282 = vadd.f32 %v4280, %v4281
        %v4283 = vrot.slane %v4282, 1
        %v4284 = vadd.f32 %v4282, %v4283
        %vm4285 = vcmask 1040384
        %v4286 = vsel %vm4285, %v4225, %v4284
        %vm4287 = vcmask 58368
        %4288 = vst.msk [vmem:[%s225] sm:$0x3] %vm4287, %v4286
        %v4289 = vpack.c.bf16 %v4141, %v4141
        %v4290 = vpack.c.bf16 %v4143, %v4143
        %v4291 = vpack.c.bf16 %v4146, %v4146
        %v4292 = vpack.c.bf16 %v4148, %v4148
        %v4293 = vpack.c.bf16 %v4151, %v4151
        %v4294 = vpack.c.bf16 %v4153, %v4153
        %v4295 = vpack.c.bf16 %v4156, %v4156
        %v4296 = vpack.c.bf16 %v4158, %v4158
        %v4297 = vpack.c.bf16 %v4161, %v4161
        %v4298 = vpack.c.bf16 %v4163, %v4163
        %v4299 = vpack.c.bf16 %v4166, %v4166
        %v4300 = vpack.c.bf16 %v4168, %v4168
        %v4301 = vpack.c.bf16 %v4171, %v4171
        %v4302 = vpack.c.bf16 %v4173, %v4173
        %v4303 = vpack.c.bf16 %v4176, %v4176
        %v4304 = vpack.c.bf16 %v4178, %v4178
        %v4305 = vpack.c.bf16 %v4181, %v4181
        %v4306 = vpack.c.bf16 %v4183, %v4183
        %vm4307 = vcmask 60416
        %4308 = vst.msk [vmem:[%s235] sm:$0xf] %vm4307, %v4289
        %4309 = vst.msk [vmem:[%s235 + $0x4] sm:$0xf] %vm4307, %v4290
        %4310 = vst.msk [vmem:[%s235 + $0x8] sm:$0xf] %vm4307, %v4291
        %4311 = vst.msk [vmem:[%s235 + $0xc] sm:$0xf] %vm4307, %v4292
        %4312 = vst.msk [vmem:[%s235 + $0x10] sm:$0xf] %vm4307, %v4293
        %4313 = vst.msk [vmem:[%s235 + $0x14] sm:$0xf] %vm4307, %v4294
        %4314 = vst.msk [vmem:[%s235 + $0x18] sm:$0xf] %vm4307, %v4295
        %4315 = vst.msk [vmem:[%s235 + $0x1c] sm:$0xf] %vm4307, %v4296
        %4316 = vst.msk [vmem:[%s235 + $0x20] sm:$0xf] %vm4307, %v4297
        %4317 = vst.msk [vmem:[%s235 + $0x24] sm:$0xf] %vm4307, %v4298
        %4318 = vst.msk [vmem:[%s235 + $0x28] sm:$0xf] %vm4307, %v4299
        %4319 = vst.msk [vmem:[%s235 + $0x2c] sm:$0xf] %vm4307, %v4300
        %4320 = vst.msk [vmem:[%s235 + $0x30] sm:$0xf] %vm4307, %v4301
        %4321 = vst.msk [vmem:[%s235 + $0x34] sm:$0xf] %vm4307, %v4302
        %4322 = vst.msk [vmem:[%s235 + $0x38] sm:$0xf] %vm4307, %v4303
        %4323 = vst.msk [vmem:[%s235 + $0x3c] sm:$0xf] %vm4307, %v4304
        %4324 = vst.msk [vmem:[%s235 + $0x40] sm:$0xf] %vm4307, %v4305
        %4325 = vst.msk [vmem:[%s235 + $0x44] sm:$0xf] %vm4307, %v4306
        %p4326 = scmp.lt.s32.totalorder %s20, 1
        %s4327 = scalar_select %p4326, %s20, 1
        %s4328 = smul.addr %s4327, 18
        %s4329 = smul.addr %s4328, 4
        %s4330 = scalar_lea.vmem %s4, %s4329
        %s4331 = sand.u32 %s143, 1
        %s4332 = scalar_lea.sflag [#allocation3], %s4331
        %s4333 = sand.u32 %s143, 1
        %s4334 = smul.addr %s4333, 2
        %s4335 = scalar_lea.vmem [#allocation2], %s4334
        // Predicated region
        $region37: #{tpu_custom_call.1} parent=35 // pred_check
          %p4336 = pneg %p127
        $region38: #{tpu_custom_call.1} parent=35 // pred_check_branch
          %4338 = sbr.rel (%p4336) target = $region40
        $region39: #{tpu_custom_call.1} parent=35 // pred_region
          _
        $region40: #{tpu_custom_call.1} parent=35 // pred_fallthru
          _
        // Predicated region
        $region41: #{tpu_custom_call.1} parent=35 // pred_check
          %p4339 = pneg %p153
        $region42: #{tpu_custom_call.1} parent=35 // pred_check_branch
          %4341 = sbr.rel (%p4339) target = $region44
        $region43: #{tpu_custom_call.1} parent=35 // pred_region
          %4343 = vsyncadd %s4332, 0
          %s4344 = smul.addr %s20, 2
          %s4345 = scalar_lea.hbm %s5, %s4344
          %s4347 = sshll.u32 %s4335, 4
          %s4348 = int_to_ptr.vmem [resolvable:$true] %s4347
          %s4349 = sshll.u32 %s4345, 4
          %s4350 = int_to_ptr.hbm [resolvable:$true] %s4349
          %4352 = dma.vmem_to_hbm [thread:$0]  %s4348, 32, %s4350, %s4332
        $region44: #{tpu_custom_call.1} parent=35 // pred_fallthru
          _
      $region36: #{tpu_custom_call.1} parent=5 // pred_fallthru
        _
      %p4353 = scmp.le.s32.totalorder 2, %s15
      // Predicated region
      $region45: #{tpu_custom_call.1} parent=5 // pred_check
        %p4354 = pneg %p4353
      $region46: #{tpu_custom_call.1} parent=5 // pred_check_branch
        %4356 = sbr.rel (%p4354) target = $region48
      $region47: #{tpu_custom_call.1} parent=5 // pred_region
        %s4357 = ssub.s32 %s15, 2
        // Predicated region
        $region49: #{tpu_custom_call.1} parent=47 // pred_check
          %p4358 = pneg %p133
        $region50: #{tpu_custom_call.1} parent=47 // pred_check_branch
          %4360 = sbr.rel (%p4358) target = $region52
        $region51: #{tpu_custom_call.1} parent=47 // pred_region
          %p4361 = scmp.lt.s32.totalorder %s21, 1
          %s4362 = scalar_select %p4361, %s21, 1
          %s4363 = smul.addr %s4362, 18
          %s4364 = smul.addr %s4363, 4
          %s4365 = scalar_lea.vmem %s4, %s4364
        $region52: #{tpu_custom_call.1} parent=47 // pred_fallthru
          _
        // Predicated region
        $region53: #{tpu_custom_call.1} parent=47 // pred_check
          %p4366 = pneg %p159
        $region54: #{tpu_custom_call.1} parent=47 // pred_check_branch
          %4368 = sbr.rel (%p4366) target = $region56
        $region55: #{tpu_custom_call.1} parent=47 // pred_region
          %s4369 = sand.u32 %s144, 1
          %s4370 = scalar_lea.sflag [#allocation3], %s4369
          %s4371 = sand.u32 %s144, 1
          %s4372 = smul.addr %s4371, 2
          %s4373 = scalar_lea.vmem [#allocation2], %s4372
          %4375 = dma.done %s4370, 32
        $region56: #{tpu_custom_call.1} parent=47 // pred_fallthru
          _
      $region48: #{tpu_custom_call.1} parent=5 // pred_fallthru
        _
    $region6: #{tpu_custom_call.1} parent=1 // loop_footer
      %s19 = sadd.s32 1, %s15
    $region7: #{tpu_custom_call.1} parent=1 // loop_footer_branch
      %14 = sbr.rel target = $region3
    $region8: #{tpu_custom_call.1} parent=1 // loop_exit
      _
    %4376 = vsyncpa [#allocation3], 1
    %s4377 = scalar_lea.sflag [#allocation3], 1
    %4378 = vsyncpa %s4377, 1

</llo_original>
